<compile_context>
chip_gen: v7x
topology: tpu7x:2x2x1
jax: 0.10.0
libtpu: 0.0.40
codegen_flags: <defaults>
</compile_context>

<pallas_src>
import functools
import numpy as np
import jax
import jax.numpy as jnp
from jax.experimental import pallas as pl
from jax.experimental.pallas import tpu as pltpu

_LANE = 128
_SUBLANE = 8


def _round_up(x, m):
    return (x + m - 1) // m * m


# ----------------------------- Pallas kernel --------------------------------
def gru_decoder_kernel(h0_ref, emb_ref, wih_ref, whh_ref, bi_ref, bhn_ref,
                       wout_ref, bout_ref, out_ref, hout_ref, h_scr, hs_scr):
    """One (batch-chunk, time-chunk) tile of the fused ReLU + GRU + Linear decoder.

    h0_ref  : (BC, Hp)       initial hidden state for this batch chunk
    emb_ref : (TC*BC, Hp)    embedded tokens for this chunk, time-major, pre-ReLU
    wih_ref : (Hp, 3Hp)      fused input->gate weights, columns [r | z | n]
    whh_ref : (Hp, 3Hp)      fused hidden->gate weights, columns [r | z | n]
    bi_ref  : (1, 3Hp)       [b_ir+b_hr | b_iz+b_hz | b_in]
    bhn_ref : (1, Hp)        b_hn (hidden-side n bias, multiplied by r)
    wout_ref: (Hp, Op)       output Linear weight, transposed
    bout_ref: (1, Op)        output Linear bias
    out_ref : (TC*BC, Op)    per-step logits (output tile, lane-dense)
    hout_ref: (BC, Hp)       final hidden state (resident across the time axis)
    h_scr   : (BC, Hp)       carried hidden state (persists across time chunks)
    hs_scr  : (TC*BC, Hp)    per-step hidden states of this chunk
    """
    t_idx = pl.program_id(1)
    BC, Hp = h0_ref.shape
    rows = emb_ref.shape[0]
    TC = rows // BC

    @pl.when(t_idx == 0)
    def _():
        h_scr[...] = h0_ref[...]

    # Hoisted out of the recurrence: ReLU + ONE wide input->gates matmul for the whole
    # chunk. r/z/n lane offsets are multiples of Hp (a 128 multiple) -> free slices.
    x = jnp.maximum(emb_ref[...], 0.0)
    gi = jnp.dot(x, wih_ref[...], preferred_element_type=jnp.float32) + bi_ref[...]

    # Hoisted (1,Hp)->(BC,Hp) broadcast (JAX does not CSE broadcast_in_dim in the unroll).
    b_hn = jnp.broadcast_to(bhn_ref[...], (BC, Hp))

    h = h_scr[...]
    # Static unroll: TC is a small trace-time constant; only h @ W_hh stays on the serial
    # dependence chain, a single fused (BC,Hp)x(Hp,3Hp) MXU matmul per step.
    for t in range(TC):
        lo = t * BC                                       # sublane-aligned (BC % 8 == 0)
        gh = jnp.dot(h, whh_ref[...], preferred_element_type=jnp.float32)
        gi_t = gi[lo:lo + BC, :]
        r = jax.nn.sigmoid(gi_t[:, 0:Hp] + gh[:, 0:Hp])
        z = jax.nn.sigmoid(gi_t[:, Hp:2 * Hp] + gh[:, Hp:2 * Hp])
        n = jnp.tanh(gi_t[:, 2 * Hp:3 * Hp] + r * (gh[:, 2 * Hp:3 * Hp] + b_hn))
        h = (1.0 - z) * n + z * h
        hs_scr[lo:lo + BC, :] = h
    h_scr[...] = h
    hout_ref[...] = h

    # Hoisted output projection: one (TC*BC,Hp)x(Hp,Op) matmul, one lane-dense store.
    out_ref[...] = jnp.dot(hs_scr[...], wout_ref[...],
                           preferred_element_type=jnp.float32) + bout_ref[...]


# ------------------------------ param packing --------------------------------
def pack_params(params):
    """One-time conversion of PyTorch-layout params into the padded, fused kernel layout."""
    f32 = jnp.float32
    O, H = params["embedding"].shape
    Hp = _round_up(H, _LANE)
    Op = _round_up(O, _LANE)

    def pad2(a, rows, cols):
        a = jnp.asarray(a, f32)
        return jnp.zeros((rows, cols), f32).at[:a.shape[0], :a.shape[1]].set(a)

    def pad1(a, cols):
        a = jnp.asarray(a, f32).reshape(1, -1)
        return jnp.zeros((1, cols), f32).at[:, :a.shape[1]].set(a)

    w_ih = jnp.asarray(params["w_ih"], f32)   # (3H, H), rows ordered r|z|n (PyTorch)
    w_hh = jnp.asarray(params["w_hh"], f32)
    b_ih = jnp.asarray(params["b_ih"], f32)
    b_hh = jnp.asarray(params["b_hh"], f32)

    wih = jnp.concatenate([pad2(w_ih[0:H].T, Hp, Hp),
                           pad2(w_ih[H:2 * H].T, Hp, Hp),
                           pad2(w_ih[2 * H:3 * H].T, Hp, Hp)], axis=1)   # (Hp, 3Hp)
    whh = jnp.concatenate([pad2(w_hh[0:H].T, Hp, Hp),
                           pad2(w_hh[H:2 * H].T, Hp, Hp),
                           pad2(w_hh[2 * H:3 * H].T, Hp, Hp)], axis=1)   # (Hp, 3Hp)
    bias_i = jnp.concatenate([pad1(b_ih[0:H] + b_hh[0:H], Hp),
                              pad1(b_ih[H:2 * H] + b_hh[H:2 * H], Hp),
                              pad1(b_ih[2 * H:3 * H], Hp)], axis=1)      # (1, 3Hp)
    b_hn = pad1(b_hh[2 * H:3 * H], Hp)                                   # (1, Hp)

    # TODO(synk): on v6e/v7x, keep embedding/wih/wout in bfloat16 for the hoisted
    # projections (f32 accumulation) to double MXU throughput and halve VMEM.
    return {
        "embedding": pad2(params["embedding"], O, Hp),                   # (O, Hp)
        "wih": wih, "whh": whh, "bias_i": bias_i, "b_hn": b_hn,
        "wout": pad2(jnp.asarray(params["w_out"], f32).T, Hp, Op),       # (Hp, Op)
        "bout": pad1(params["b_out"], Op),                               # (1, Op)
    }


# ------------------------------ JAX wrapper ----------------------------------
def _pick_t_chunk(T, b_pad, target_rows=256):
    # Largest divisor of T whose gi tile has <= target_rows rows; >=256 rows keeps the
    # hoisted projections MXU-bound on v6e/v7x (128 already fills v5e's MXU).
    best = 1
    for c in range(1, T + 1):
        if T % c == 0 and c * b_pad <= max(target_rows, b_pad):
            best = c
    return best


def _vmem_limit_bytes(tc, bc, Hp, Op):
    f = 4
    tiles = (tc * bc * Hp + tc * bc * Op + 2 * bc * Hp) * f      # emb, logits, h0, hout
    weights = (2 * Hp * 3 * Hp + 4 * Hp + Hp * Op + Op) * f
    scratch = (bc * Hp + tc * bc * Hp) * f
    needed = 2 * tiles + weights + scratch                       # x2: double buffering
    # Generous margin, but never request v7x's full 64 MiB of physical per-TC VMEM.
    return int(min(max(2 * needed, 16 * 1024 * 1024), 48 * 1024 * 1024))


@functools.partial(jax.jit, static_argnames=("t_chunk", "b_chunk"))
def decoder_rnn_forward(x_tokens, hidden, kp, t_chunk=None, b_chunk=None):
    """x_tokens: int32 (B, T); hidden: (1, B, H). Returns (logits (B,T,O), hidden (1,B,H))."""
    B, T = x_tokens.shape
    H = hidden.shape[2]
    O = kp["embedding"].shape[0]          # vocab rows are never padded (token ids < O)
    Hp = kp["wih"].shape[0]
    Op = kp["wout"].shape[1]
    Bp = _round_up(B, _SUBLANE)

    bc = Bp if b_chunk is None else b_chunk        # v7x: pass bc = Bp // 2 to split batch
    assert bc % _SUBLANE == 0 and Bp % bc == 0     # across the two TensorCores
    tc = _pick_t_chunk(T, Bp) if t_chunk is None else t_chunk
    assert T % tc == 0
    nb, nt = Bp // bc, T // tc

    # Embedding gather, already time-major; pad batch (sublanes). Hidden lanes are already
    # padded inside the table, so every kernel tile is (8,128)-dense.
    emb = kp["embedding"][x_tokens.T]                               # (T, B, Hp)
    emb = jnp.pad(emb, ((0, 0), (0, Bp - B), (0, 0)))               # (T, Bp, Hp)
    # Reorder rows as (batch_chunk, time, within-chunk batch) -> 2D, so every grid tile is
    # a contiguous row block (free metadata reshape when nb == 1).
    emb = emb.reshape(T, nb, bc, Hp).transpose(1, 0, 2, 3).reshape(nb * T * bc, Hp)
    # TODO(synk): for large vocabularies, gather inside the kernel from an HBM-resident
    # table (scalar-prefetched token ids) to avoid this extra (T,B,Hp) HBM round trip.
    h0 = jnp.zeros((Bp, Hp), jnp.float32).at[:B, :H].set(hidden[0].astype(jnp.float32))

    grid_spec = pltpu.PrefetchScalarGridSpec(
        num_scalar_prefetch=0,
        grid=(nb, nt),
        in_specs=[
            pl.BlockSpec((bc, Hp), lambda b, t: (b, 0)),                     # h0
            pl.BlockSpec((tc * bc, Hp), lambda b, t: (b * nt + t, 0)),       # emb
            pl.BlockSpec((Hp, 3 * Hp), lambda b, t: (0, 0)),                 # wih
            pl.BlockSpec((Hp, 3 * Hp), lambda b, t: (0, 0)),                 # whh
            pl.BlockSpec((1, 3 * Hp), lambda b, t: (0, 0)),                  # bias_i
            pl.BlockSpec((1, Hp), lambda b, t: (0, 0)),                      # b_hn
            pl.BlockSpec((Hp, Op), lambda b, t: (0, 0)),                     # wout
            pl.BlockSpec((1, Op), lambda b, t: (0, 0)),                      # bout
        ],
        out_specs=(
            pl.BlockSpec((tc * bc, Op), lambda b, t: (b * nt + t, 0)),       # logits
            pl.BlockSpec((bc, Hp), lambda b, t: (b, 0)),                     # final hidden
        ),
        scratch_shapes=[pltpu.VMEM((bc, Hp), jnp.float32),                   # carried h
                        pltpu.VMEM((tc * bc, Hp), jnp.float32)],             # per-step h
    )

    out_p, h_p = pl.pallas_call(
        gru_decoder_kernel,
        out_shape=(jax.ShapeDtypeStruct((nb * T * bc, Op), jnp.float32),
                   jax.ShapeDtypeStruct((Bp, Hp), jnp.float32)),
        grid_spec=grid_spec,
        compiler_params=pltpu.CompilerParams(
            dimension_semantics=("parallel", "arbitrary"),
            vmem_limit_bytes=_vmem_limit_bytes(tc, bc, Hp, Op)),
    )(h0, emb, kp["wih"], kp["whh"], kp["bias_i"], kp["b_hn"], kp["wout"], kp["bout"])

    out_p = out_p.reshape(nb, T, bc, Op).transpose(1, 0, 2, 3).reshape(T, Bp, Op)
    output = jnp.transpose(out_p[:, :B, :O], (1, 0, 2))             # (B, T, O) batch_first
    return output, h_p[:B, :H][None]                                # hidden: (1, B, H)


# --------------------------- pure-JAX reference -------------------------------
def decoder_rnn_reference(x_tokens, hidden, params):
    emb = params["embedding"][x_tokens]             # (B, T, H)
    emb = jnp.maximum(emb, 0.0)
    w_ih, b_ih = params["w_ih"], params["b_ih"]
    w_hh, b_hh = params["w_hh"], params["b_hh"]
    H = params["embedding"].shape[1]
    h = hidden[0]
    outs = []
    for t in range(x_tokens.shape[1]):
        x_t = emb[:, t, :]
        gi = x_t @ w_ih.T + b_ih
        gh = h @ w_hh.T + b_hh
        r = jax.nn.sigmoid(gi[:, :H] + gh[:, :H])
        z = jax.nn.sigmoid(gi[:, H:2 * H] + gh[:, H:2 * H])
        n = jnp.tanh(gi[:, 2 * H:] + r * gh[:, 2 * H:])
        h = (1.0 - z) * n + z * h
        outs.append(h @ params["w_out"].T + params["b_out"])
    return jnp.stack(outs, axis=1), h[None]


# --------------------------------- main ---------------------------------------
if __name__ == "__main__":
    B, T = 2, 8           # batch, sequence length
    H = 32                # hidden_size
    O = 16                # output_size (vocab)

    key = jax.random.PRNGKey(0)
    ks = jax.random.split(key, 9)
    scale = 1.0 / np.sqrt(H)

    params = {
        "embedding": jax.random.normal(ks[0], (O, H), jnp.float32) * 0.1,
        "w_ih": jax.random.uniform(ks[1], (3 * H, H), jnp.float32, -scale, scale),
        "w_hh": jax.random.uniform(ks[2], (3 * H, H), jnp.float32, -scale, scale),
        "b_ih": jax.random.uniform(ks[3], (3 * H,), jnp.float32, -scale, scale),
        "b_hh": jax.random.uniform(ks[4], (3 * H,), jnp.float32, -scale, scale),
        "w_out": jax.random.uniform(ks[5], (O, H), jnp.float32, -scale, scale),
        "b_out": jax.random.uniform(ks[6], (O,), jnp.float32, -scale, scale),
    }

    x_tokens = jax.random.randint(ks[7], (B, T), 0, O, dtype=jnp.int32)
    hidden0 = jax.random.normal(ks[8], (1, B, H), jnp.float32) * 0.1

    kparams = pack_params(params)                   # one-time padded/fused layout conversion
    ref_out, ref_h = decoder_rnn_reference(x_tokens, hidden0, params)

    # 1) Auto time-chunking (single chunk at this tiny size).
    out, h_final = jax.block_until_ready(decoder_rnn_forward(x_tokens, hidden0, kparams))
    assert out.shape == (B, T, O) and h_final.shape == (1, B, H)
    np.testing.assert_allclose(np.asarray(out), np.asarray(ref_out), rtol=1e-5, atol=1e-5)
    np.testing.assert_allclose(np.asarray(h_final), np.asarray(ref_h), rtol=1e-5, atol=1e-5)

    # 2) Force multiple time chunks to exercise the grid-carried hidden state / pl.when init.
    out2, h_final2 = jax.block_until_ready(
        decoder_rnn_forward(x_tokens, hidden0, kparams, t_chunk=2))
    np.testing.assert_allclose(np.asarray(out2), np.asarray(ref_out), rtol=1e-5, atol=1e-5)
    np.testing.assert_allclose(np.asarray(h_final2), np.asarray(ref_h), rtol=1e-5, atol=1e-5)

    print("KERNEL_OK")
</pallas_src>

<mosaic_0001>
module attributes {stable_mosaic.version = 11 : i64} {
  func.func @gru_decoder_kernel(%arg0: i32, %arg1: i32, %arg2: memref<8x128xf32, #tpu.memory_space<vmem>>, %arg3: memref<64x128xf32, #tpu.memory_space<vmem>>, %arg4: memref<128x384xf32, #tpu.memory_space<vmem>>, %arg5: memref<128x384xf32, #tpu.memory_space<vmem>>, %arg6: memref<1x384xf32, #tpu.memory_space<vmem>>, %arg7: memref<1x128xf32, #tpu.memory_space<vmem>>, %arg8: memref<128x128xf32, #tpu.memory_space<vmem>>, %arg9: memref<1x128xf32, #tpu.memory_space<vmem>>, %arg10: memref<64x128xf32, #tpu.memory_space<vmem>>, %arg11: memref<8x128xf32, #tpu.memory_space<vmem>>, %arg12: memref<8x128xf32, #tpu.memory_space<vmem>>, %arg13: memref<64x128xf32, #tpu.memory_space<vmem>>) attributes {dimension_semantics = [#tpu.dimension_semantics<parallel>, #tpu.dimension_semantics<arbitrary>], iteration_bounds = array<i64: 1, 1>, scalar_prefetch = 0 : i64, scratch_operands = 2 : i64, tpu.core_type = #tpu.core_type<tc>, window_params = [{transform_indices = @transform_0, window_bounds = array<i64: 8, 128>}, {transform_indices = @transform_1, window_bounds = array<i64: 64, 128>}, {pipeline_mode = #tpu.pipeline_mode<synchronous>, transform_indices = @transform_2, window_bounds = array<i64: 128, 384>}, {pipeline_mode = #tpu.pipeline_mode<synchronous>, transform_indices = @transform_3, window_bounds = array<i64: 128, 384>}, {pipeline_mode = #tpu.pipeline_mode<synchronous>, transform_indices = @transform_4, window_bounds = array<i64: 1, 384>}, {pipeline_mode = #tpu.pipeline_mode<synchronous>, transform_indices = @transform_5, window_bounds = array<i64: 1, 128>}, {pipeline_mode = #tpu.pipeline_mode<synchronous>, transform_indices = @transform_6, window_bounds = array<i64: 128, 128>}, {pipeline_mode = #tpu.pipeline_mode<synchronous>, transform_indices = @transform_7, window_bounds = array<i64: 1, 128>}, {transform_indices = @transform_8, window_bounds = array<i64: 64, 128>}, {transform_indices = @transform_9, window_bounds = array<i64: 8, 128>}]} {
    %c0_i32 = arith.constant 0 : i32
    %0 = arith.cmpi eq, %arg1, %c0_i32 : i32
    %1 = arith.extui %0 : i1 to i32
    %c0_i32_0 = arith.constant 0 : i32
    %2 = arith.cmpi ne, %1, %c0_i32_0 : i32
    scf.if %2 {
      %c0_81 = arith.constant 0 : index
      %c0_82 = arith.constant 0 : index
      %272 = vector.load %arg2[%c0_81, %c0_82] : memref<8x128xf32, #tpu.memory_space<vmem>>, vector<8x128xf32>
      %c0_83 = arith.constant 0 : index
      %c0_84 = arith.constant 0 : index
      %273 = vector.load %arg12[%c0_83, %c0_84] : memref<8x128xf32, #tpu.memory_space<vmem>>, vector<8x128xf32>
      tpu.vector_store %arg12[%c0_83, %c0_84], %272 {strides = array<i32>} : memref<8x128xf32, #tpu.memory_space<vmem>>, vector<8x128xf32>,
    } else {
    }
    %c0 = arith.constant 0 : index
    %c0_1 = arith.constant 0 : index
    %3 = vector.load %arg3[%c0, %c0_1] : memref<64x128xf32, #tpu.memory_space<vmem>>, vector<64x128xf32>
    %cst = arith.constant 0.000000e+00 : f32
    %4 = vector.broadcast %cst : f32 to vector<64x128xf32>
    %5 = arith.maximumf %3, %4 : vector<64x128xf32>
    %c0_2 = arith.constant 0 : index
    %c0_3 = arith.constant 0 : index
    %6 = vector.load %arg4[%c0_2, %c0_3] : memref<128x384xf32, #tpu.memory_space<vmem>>, vector<128x384xf32>
    %cst_4 = arith.constant dense<0.000000e+00> : vector<64x384xf32>
    %7 = tpu.matmul %5, %6, %cst_4 {dimension_numbers = #tpu.dot_dimension_numbers<[1], [0], [0], [1], [0, 0, 1, 1], [], []>} : vector<64x128xf32>, vector<128x384xf32>, vector<64x384xf32> -> vector<64x384xf32>
    %c0_5 = arith.constant 0 : index
    %c0_6 = arith.constant 0 : index
    %8 = vector.load %arg6[%c0_5, %c0_6] : memref<1x384xf32, #tpu.memory_space<vmem>>, vector<1x384xf32>
    %9 = vector.broadcast %8 : vector<1x384xf32> to vector<64x384xf32>
    %10 = arith.addf %7, %9 : vector<64x384xf32>
    %c0_7 = arith.constant 0 : index
    %c0_8 = arith.constant 0 : index
    %11 = vector.load %arg7[%c0_7, %c0_8] : memref<1x128xf32, #tpu.memory_space<vmem>>, vector<1x128xf32>
    %12 = vector.shape_cast %11 : vector<1x128xf32> to vector<1x128xf32>
    %13 = vector.broadcast %12 : vector<1x128xf32> to vector<8x128xf32>
    %c0_9 = arith.constant 0 : index
    %c0_10 = arith.constant 0 : index
    %14 = vector.load %arg12[%c0_9, %c0_10] : memref<8x128xf32, #tpu.memory_space<vmem>>, vector<8x128xf32>
    %c0_11 = arith.constant 0 : index
    %c0_12 = arith.constant 0 : index
    %15 = vector.load %arg5[%c0_11, %c0_12] : memref<128x384xf32, #tpu.memory_space<vmem>>, vector<128x384xf32>
    %cst_13 = arith.constant dense<0.000000e+00> : vector<8x384xf32>
    %16 = tpu.matmul %14, %15, %cst_13 {dimension_numbers = #tpu.dot_dimension_numbers<[1], [0], [0], [1], [0, 0, 1, 1], [], []>} : vector<8x128xf32>, vector<128x384xf32>, vector<8x384xf32> -> vector<8x384xf32>
    %17 = vector.extract_strided_slice %10 {offsets = [0, 0], sizes = [8, 384], strides = [1, 1]} : vector<64x384xf32> to vector<8x384xf32>
    %18 = vector.extract_strided_slice %17 {offsets = [0, 0], sizes = [8, 128], strides = [1, 1]} : vector<8x384xf32> to vector<8x128xf32>
    %19 = vector.extract_strided_slice %16 {offsets = [0, 0], sizes = [8, 128], strides = [1, 1]} : vector<8x384xf32> to vector<8x128xf32>
    %20 = arith.addf %18, %19 : vector<8x128xf32>
    %21 = arith.negf %20 : vector<8x128xf32>
    %22 = math.exp %21 : vector<8x128xf32>
    %cst_14 = arith.constant 1.000000e+00 : f32
    %23 = vector.broadcast %cst_14 : f32 to vector<8x128xf32>
    %24 = arith.addf %23, %22 : vector<8x128xf32>
    %25 = arith.divf %23, %24 : vector<8x128xf32>
    %26 = vector.extract_strided_slice %17 {offsets = [0, 128], sizes = [8, 128], strides = [1, 1]} : vector<8x384xf32> to vector<8x128xf32>
    %27 = vector.extract_strided_slice %16 {offsets = [0, 128], sizes = [8, 128], strides = [1, 1]} : vector<8x384xf32> to vector<8x128xf32>
    %28 = arith.addf %26, %27 : vector<8x128xf32>
    %29 = arith.negf %28 : vector<8x128xf32>
    %30 = math.exp %29 : vector<8x128xf32>
    %cst_15 = arith.constant 1.000000e+00 : f32
    %31 = vector.broadcast %cst_15 : f32 to vector<8x128xf32>
    %32 = arith.addf %31, %30 : vector<8x128xf32>
    %33 = arith.divf %31, %32 : vector<8x128xf32>
    %34 = vector.extract_strided_slice %17 {offsets = [0, 256], sizes = [8, 128], strides = [1, 1]} : vector<8x384xf32> to vector<8x128xf32>
    %35 = vector.extract_strided_slice %16 {offsets = [0, 256], sizes = [8, 128], strides = [1, 1]} : vector<8x384xf32> to vector<8x128xf32>
    %36 = arith.addf %35, %13 : vector<8x128xf32>
    %37 = arith.mulf %25, %36 : vector<8x128xf32>
    %38 = arith.addf %34, %37 : vector<8x128xf32>
    %39 = math.tanh %38 : vector<8x128xf32>
    %cst_16 = arith.constant 1.000000e+00 : f32
    %40 = vector.broadcast %cst_16 : f32 to vector<8x128xf32>
    %41 = arith.subf %40, %33 : vector<8x128xf32>
    %42 = arith.mulf %41, %39 : vector<8x128xf32>
    %43 = arith.mulf %33, %14 : vector<8x128xf32>
    %44 = arith.addf %42, %43 : vector<8x128xf32>
    %c0_17 = arith.constant 0 : index
    %c0_18 = arith.constant 0 : index
    %45 = vector.load %arg13[%c0_17, %c0_18] : memref<64x128xf32, #tpu.memory_space<vmem>>, vector<8x128xf32>
    tpu.vector_store %arg13[%c0_17, %c0_18], %44 {strides = array<i32>} : memref<64x128xf32, #tpu.memory_space<vmem>>, vector<8x128xf32>,
    %c0_19 = arith.constant 0 : index
    %c0_20 = arith.constant 0 : index
    %46 = vector.load %arg5[%c0_19, %c0_20] : memref<128x384xf32, #tpu.memory_space<vmem>>, vector<128x384xf32>
    %cst_21 = arith.constant dense<0.000000e+00> : vector<8x384xf32>
    %47 = tpu.matmul %44, %46, %cst_21 {dimension_numbers = #tpu.dot_dimension_numbers<[1], [0], [0], [1], [0, 0, 1, 1], [], []>} : vector<8x128xf32>, vector<128x384xf32>, vector<8x384xf32> -> vector<8x384xf32>
    %48 = vector.extract_strided_slice %10 {offsets = [8, 0], sizes = [8, 384], strides = [1, 1]} : vector<64x384xf32> to vector<8x384xf32>
    %49 = vector.extract_strided_slice %48 {offsets = [0, 0], sizes = [8, 128], strides = [1, 1]} : vector<8x384xf32> to vector<8x128xf32>
    %50 = vector.extract_strided_slice %47 {offsets = [0, 0], sizes = [8, 128], strides = [1, 1]} : vector<8x384xf32> to vector<8x128xf32>
    %51 = arith.addf %49, %50 : vector<8x128xf32>
    %52 = arith.negf %51 : vector<8x128xf32>
    %53 = math.exp %52 : vector<8x128xf32>
    %cst_22 = arith.constant 1.000000e+00 : f32
    %54 = vector.broadcast %cst_22 : f32 to vector<8x128xf32>
    %55 = arith.addf %54, %53 : vector<8x128xf32>
    %56 = arith.divf %54, %55 : vector<8x128xf32>
    %57 = vector.extract_strided_slice %48 {offsets = [0, 128], sizes = [8, 128], strides = [1, 1]} : vector<8x384xf32> to vector<8x128xf32>
    %58 = vector.extract_strided_slice %47 {offsets = [0, 128], sizes = [8, 128], strides = [1, 1]} : vector<8x384xf32> to vector<8x128xf32>
    %59 = arith.addf %57, %58 : vector<8x128xf32>
    %60 = arith.negf %59 : vector<8x128xf32>
    %61 = math.exp %60 : vector<8x128xf32>
    %cst_23 = arith.constant 1.000000e+00 : f32
    %62 = vector.broadcast %cst_23 : f32 to vector<8x128xf32>
    %63 = arith.addf %62, %61 : vector<8x128xf32>
    %64 = arith.divf %62, %63 : vector<8x128xf32>
    %65 = vector.extract_strided_slice %48 {offsets = [0, 256], sizes = [8, 128], strides = [1, 1]} : vector<8x384xf32> to vector<8x128xf32>
    %66 = vector.extract_strided_slice %47 {offsets = [0, 256], sizes = [8, 128], strides = [1, 1]} : vector<8x384xf32> to vector<8x128xf32>
    %67 = arith.addf %66, %13 : vector<8x128xf32>
    %68 = arith.mulf %56, %67 : vector<8x128xf32>
    %69 = arith.addf %65, %68 : vector<8x128xf32>
    %70 = math.tanh %69 : vector<8x128xf32>
    %cst_24 = arith.constant 1.000000e+00 : f32
    %71 = vector.broadcast %cst_24 : f32 to vector<8x128xf32>
    %72 = arith.subf %71, %64 : vector<8x128xf32>
    %73 = arith.mulf %72, %70 : vector<8x128xf32>
    %74 = arith.mulf %64, %44 : vector<8x128xf32>
    %75 = arith.addf %73, %74 : vector<8x128xf32>
    %c8 = arith.constant 8 : index
    %c0_25 = arith.constant 0 : index
    %76 = vector.load %arg13[%c8, %c0_25] : memref<64x128xf32, #tpu.memory_space<vmem>>, vector<8x128xf32>
    tpu.vector_store %arg13[%c8, %c0_25], %75 {strides = array<i32>} : memref<64x128xf32, #tpu.memory_space<vmem>>, vector<8x128xf32>,
    %c0_26 = arith.constant 0 : index
    %c0_27 = arith.constant 0 : index
    %77 = vector.load %arg5[%c0_26, %c0_27] : memref<128x384xf32, #tpu.memory_space<vmem>>, vector<128x384xf32>
    %cst_28 = arith.constant dense<0.000000e+00> : vector<8x384xf32>
    %78 = tpu.matmul %75, %77, %cst_28 {dimension_numbers = #tpu.dot_dimension_numbers<[1], [0], [0], [1], [0, 0, 1, 1], [], []>} : vector<8x128xf32>, vector<128x384xf32>, vector<8x384xf32> -> vector<8x384xf32>
    %79 = vector.extract_strided_slice %10 {offsets = [16, 0], sizes = [8, 384], strides = [1, 1]} : vector<64x384xf32> to vector<8x384xf32>
    %80 = vector.extract_strided_slice %79 {offsets = [0, 0], sizes = [8, 128], strides = [1, 1]} : vector<8x384xf32> to vector<8x128xf32>
    %81 = vector.extract_strided_slice %78 {offsets = [0, 0], sizes = [8, 128], strides = [1, 1]} : vector<8x384xf32> to vector<8x128xf32>
    %82 = arith.addf %80, %81 : vector<8x128xf32>
    %83 = arith.negf %82 : vector<8x128xf32>
    %84 = math.exp %83 : vector<8x128xf32>
    %cst_29 = arith.constant 1.000000e+00 : f32
    %85 = vector.broadcast %cst_29 : f32 to vector<8x128xf32>
    %86 = arith.addf %85, %84 : vector<8x128xf32>
    %87 = arith.divf %85, %86 : vector<8x128xf32>
    %88 = vector.extract_strided_slice %79 {offsets = [0, 128], sizes = [8, 128], strides = [1, 1]} : vector<8x384xf32> to vector<8x128xf32>
    %89 = vector.extract_strided_slice %78 {offsets = [0, 128], sizes = [8, 128], strides = [1, 1]} : vector<8x384xf32> to vector<8x128xf32>
    %90 = arith.addf %88, %89 : vector<8x128xf32>
    %91 = arith.negf %90 : vector<8x128xf32>
    %92 = math.exp %91 : vector<8x128xf32>
    %cst_30 = arith.constant 1.000000e+00 : f32
    %93 = vector.broadcast %cst_30 : f32 to vector<8x128xf32>
    %94 = arith.addf %93, %92 : vector<8x128xf32>
    %95 = arith.divf %93, %94 : vector<8x128xf32>
    %96 = vector.extract_strided_slice %79 {offsets = [0, 256], sizes = [8, 128], strides = [1, 1]} : vector<8x384xf32> to vector<8x128xf32>
    %97 = vector.extract_strided_slice %78 {offsets = [0, 256], sizes = [8, 128], strides = [1, 1]} : vector<8x384xf32> to vector<8x128xf32>
    %98 = arith.addf %97, %13 : vector<8x128xf32>
    %99 = arith.mulf %87, %98 : vector<8x128xf32>
    %100 = arith.addf %96, %99 : vector<8x128xf32>
    %101 = math.tanh %100 : vector<8x128xf32>
    %cst_31 = arith.constant 1.000000e+00 : f32
    %102 = vector.broadcast %cst_31 : f32 to vector<8x128xf32>
    %103 = arith.subf %102, %95 : vector<8x128xf32>
    %104 = arith.mulf %103, %101 : vector<8x128xf32>
    %105 = arith.mulf %95, %75 : vector<8x128xf32>
    %106 = arith.addf %104, %105 : vector<8x128xf32>
    %c16 = arith.constant 16 : index
    %c0_32 = arith.constant 0 : index
    %107 = vector.load %arg13[%c16, %c0_32] : memref<64x128xf32, #tpu.memory_space<vmem>>, vector<8x128xf32>
    tpu.vector_store %arg13[%c16, %c0_32], %106 {strides = array<i32>} : memref<64x128xf32, #tpu.memory_space<vmem>>, vector<8x128xf32>,
    %c0_33 = arith.constant 0 : index
    %c0_34 = arith.constant 0 : index
    %108 = vector.load %arg5[%c0_33, %c0_34] : memref<128x384xf32, #tpu.memory_space<vmem>>, vector<128x384xf32>
    %cst_35 = arith.constant dense<0.000000e+00> : vector<8x384xf32>
    %109 = tpu.matmul %106, %108, %cst_35 {dimension_numbers = #tpu.dot_dimension_numbers<[1], [0], [0], [1], [0, 0, 1, 1], [], []>} : vector<8x128xf32>, vector<128x384xf32>, vector<8x384xf32> -> vector<8x384xf32>
    %110 = vector.extract_strided_slice %10 {offsets = [24, 0], sizes = [8, 384], strides = [1, 1]} : vector<64x384xf32> to vector<8x384xf32>
    %111 = vector.extract_strided_slice %110 {offsets = [0, 0], sizes = [8, 128], strides = [1, 1]} : vector<8x384xf32> to vector<8x128xf32>
    %112 = vector.extract_strided_slice %109 {offsets = [0, 0], sizes = [8, 128], strides = [1, 1]} : vector<8x384xf32> to vector<8x128xf32>
    %113 = arith.addf %111, %112 : vector<8x128xf32>
    %114 = arith.negf %113 : vector<8x128xf32>
    %115 = math.exp %114 : vector<8x128xf32>
    %cst_36 = arith.constant 1.000000e+00 : f32
    %116 = vector.broadcast %cst_36 : f32 to vector<8x128xf32>
    %117 = arith.addf %116, %115 : vector<8x128xf32>
    %118 = arith.divf %116, %117 : vector<8x128xf32>
    %119 = vector.extract_strided_slice %110 {offsets = [0, 128], sizes = [8, 128], strides = [1, 1]} : vector<8x384xf32> to vector<8x128xf32>
    %120 = vector.extract_strided_slice %109 {offsets = [0, 128], sizes = [8, 128], strides = [1, 1]} : vector<8x384xf32> to vector<8x128xf32>
    %121 = arith.addf %119, %120 : vector<8x128xf32>
    %122 = arith.negf %121 : vector<8x128xf32>
    %123 = math.exp %122 : vector<8x128xf32>
    %cst_37 = arith.constant 1.000000e+00 : f32
    %124 = vector.broadcast %cst_37 : f32 to vector<8x128xf32>
    %125 = arith.addf %124, %123 : vector<8x128xf32>
    %126 = arith.divf %124, %125 : vector<8x128xf32>
    %127 = vector.extract_strided_slice %110 {offsets = [0, 256], sizes = [8, 128], strides = [1, 1]} : vector<8x384xf32> to vector<8x128xf32>
    %128 = vector.extract_strided_slice %109 {offsets = [0, 256], sizes = [8, 128], strides = [1, 1]} : vector<8x384xf32> to vector<8x128xf32>
    %129 = arith.addf %128, %13 : vector<8x128xf32>
    %130 = arith.mulf %118, %129 : vector<8x128xf32>
    %131 = arith.addf %127, %130 : vector<8x128xf32>
    %132 = math.tanh %131 : vector<8x128xf32>
    %cst_38 = arith.constant 1.000000e+00 : f32
    %133 = vector.broadcast %cst_38 : f32 to vector<8x128xf32>
    %134 = arith.subf %133, %126 : vector<8x128xf32>
    %135 = arith.mulf %134, %132 : vector<8x128xf32>
    %136 = arith.mulf %126, %106 : vector<8x128xf32>
    %137 = arith.addf %135, %136 : vector<8x128xf32>
    %c24 = arith.constant 24 : index
    %c0_39 = arith.constant 0 : index
    %138 = vector.load %arg13[%c24, %c0_39] : memref<64x128xf32, #tpu.memory_space<vmem>>, vector<8x128xf32>
    tpu.vector_store %arg13[%c24, %c0_39], %137 {strides = array<i32>} : memref<64x128xf32, #tpu.memory_space<vmem>>, vector<8x128xf32>,
    %c0_40 = arith.constant 0 : index
    %c0_41 = arith.constant 0 : index
    %139 = vector.load %arg5[%c0_40, %c0_41] : memref<128x384xf32, #tpu.memory_space<vmem>>, vector<128x384xf32>
    %cst_42 = arith.constant dense<0.000000e+00> : vector<8x384xf32>
    %140 = tpu.matmul %137, %139, %cst_42 {dimension_numbers = #tpu.dot_dimension_numbers<[1], [0], [0], [1], [0, 0, 1, 1], [], []>} : vector<8x128xf32>, vector<128x384xf32>, vector<8x384xf32> -> vector<8x384xf32>
    %141 = vector.extract_strided_slice %10 {offsets = [32, 0], sizes = [8, 384], strides = [1, 1]} : vector<64x384xf32> to vector<8x384xf32>
    %142 = vector.extract_strided_slice %141 {offsets = [0, 0], sizes = [8, 128], strides = [1, 1]} : vector<8x384xf32> to vector<8x128xf32>
    %143 = vector.extract_strided_slice %140 {offsets = [0, 0], sizes = [8, 128], strides = [1, 1]} : vector<8x384xf32> to vector<8x128xf32>
    %144 = arith.addf %142, %143 : vector<8x128xf32>
    %145 = arith.negf %144 : vector<8x128xf32>
    %146 = math.exp %145 : vector<8x128xf32>
    %cst_43 = arith.constant 1.000000e+00 : f32
    %147 = vector.broadcast %cst_43 : f32 to vector<8x128xf32>
    %148 = arith.addf %147, %146 : vector<8x128xf32>
    %149 = arith.divf %147, %148 : vector<8x128xf32>
    %150 = vector.extract_strided_slice %141 {offsets = [0, 128], sizes = [8, 128], strides = [1, 1]} : vector<8x384xf32> to vector<8x128xf32>
    %151 = vector.extract_strided_slice %140 {offsets = [0, 128], sizes = [8, 128], strides = [1, 1]} : vector<8x384xf32> to vector<8x128xf32>
    %152 = arith.addf %150, %151 : vector<8x128xf32>
    %153 = arith.negf %152 : vector<8x128xf32>
    %154 = math.exp %153 : vector<8x128xf32>
    %cst_44 = arith.constant 1.000000e+00 : f32
    %155 = vector.broadcast %cst_44 : f32 to vector<8x128xf32>
    %156 = arith.addf %155, %154 : vector<8x128xf32>
    %157 = arith.divf %155, %156 : vector<8x128xf32>
    %158 = vector.extract_strided_slice %141 {offsets = [0, 256], sizes = [8, 128], strides = [1, 1]} : vector<8x384xf32> to vector<8x128xf32>
    %159 = vector.extract_strided_slice %140 {offsets = [0, 256], sizes = [8, 128], strides = [1, 1]} : vector<8x384xf32> to vector<8x128xf32>
    %160 = arith.addf %159, %13 : vector<8x128xf32>
    %161 = arith.mulf %149, %160 : vector<8x128xf32>
    %162 = arith.addf %158, %161 : vector<8x128xf32>
    %163 = math.tanh %162 : vector<8x128xf32>
    %cst_45 = arith.constant 1.000000e+00 : f32
    %164 = vector.broadcast %cst_45 : f32 to vector<8x128xf32>
    %165 = arith.subf %164, %157 : vector<8x128xf32>
    %166 = arith.mulf %165, %163 : vector<8x128xf32>
    %167 = arith.mulf %157, %137 : vector<8x128xf32>
    %168 = arith.addf %166, %167 : vector<8x128xf32>
    %c32 = arith.constant 32 : index
    %c0_46 = arith.constant 0 : index
    %169 = vector.load %arg13[%c32, %c0_46] : memref<64x128xf32, #tpu.memory_space<vmem>>, vector<8x128xf32>
    tpu.vector_store %arg13[%c32, %c0_46], %168 {strides = array<i32>} : memref<64x128xf32, #tpu.memory_space<vmem>>, vector<8x128xf32>,
    %c0_47 = arith.constant 0 : index
    %c0_48 = arith.constant 0 : index
    %170 = vector.load %arg5[%c0_47, %c0_48] : memref<128x384xf32, #tpu.memory_space<vmem>>, vector<128x384xf32>
    %cst_49 = arith.constant dense<0.000000e+00> : vector<8x384xf32>
    %171 = tpu.matmul %168, %170, %cst_49 {dimension_numbers = #tpu.dot_dimension_numbers<[1], [0], [0], [1], [0, 0, 1, 1], [], []>} : vector<8x128xf32>, vector<128x384xf32>, vector<8x384xf32> -> vector<8x384xf32>
    %172 = vector.extract_strided_slice %10 {offsets = [40, 0], sizes = [8, 384], strides = [1, 1]} : vector<64x384xf32> to vector<8x384xf32>
    %173 = vector.extract_strided_slice %172 {offsets = [0, 0], sizes = [8, 128], strides = [1, 1]} : vector<8x384xf32> to vector<8x128xf32>
    %174 = vector.extract_strided_slice %171 {offsets = [0, 0], sizes = [8, 128], strides = [1, 1]} : vector<8x384xf32> to vector<8x128xf32>
    %175 = arith.addf %173, %174 : vector<8x128xf32>
    %176 = arith.negf %175 : vector<8x128xf32>
    %177 = math.exp %176 : vector<8x128xf32>
    %cst_50 = arith.constant 1.000000e+00 : f32
    %178 = vector.broadcast %cst_50 : f32 to vector<8x128xf32>
    %179 = arith.addf %178, %177 : vector<8x128xf32>
    %180 = arith.divf %178, %179 : vector<8x128xf32>
    %181 = vector.extract_strided_slice %172 {offsets = [0, 128], sizes = [8, 128], strides = [1, 1]} : vector<8x384xf32> to vector<8x128xf32>
    %182 = vector.extract_strided_slice %171 {offsets = [0, 128], sizes = [8, 128], strides = [1, 1]} : vector<8x384xf32> to vector<8x128xf32>
    %183 = arith.addf %181, %182 : vector<8x128xf32>
    %184 = arith.negf %183 : vector<8x128xf32>
    %185 = math.exp %184 : vector<8x128xf32>
    %cst_51 = arith.constant 1.000000e+00 : f32
    %186 = vector.broadcast %cst_51 : f32 to vector<8x128xf32>
    %187 = arith.addf %186, %185 : vector<8x128xf32>
    %188 = arith.divf %186, %187 : vector<8x128xf32>
    %189 = vector.extract_strided_slice %172 {offsets = [0, 256], sizes = [8, 128], strides = [1, 1]} : vector<8x384xf32> to vector<8x128xf32>
    %190 = vector.extract_strided_slice %171 {offsets = [0, 256], sizes = [8, 128], strides = [1, 1]} : vector<8x384xf32> to vector<8x128xf32>
    %191 = arith.addf %190, %13 : vector<8x128xf32>
    %192 = arith.mulf %180, %191 : vector<8x128xf32>
    %193 = arith.addf %189, %192 : vector<8x128xf32>
    %194 = math.tanh %193 : vector<8x128xf32>
    %cst_52 = arith.constant 1.000000e+00 : f32
    %195 = vector.broadcast %cst_52 : f32 to vector<8x128xf32>
    %196 = arith.subf %195, %188 : vector<8x128xf32>
    %197 = arith.mulf %196, %194 : vector<8x128xf32>
    %198 = arith.mulf %188, %168 : vector<8x128xf32>
    %199 = arith.addf %197, %198 : vector<8x128xf32>
    %c40 = arith.constant 40 : index
    %c0_53 = arith.constant 0 : index
    %200 = vector.load %arg13[%c40, %c0_53] : memref<64x128xf32, #tpu.memory_space<vmem>>, vector<8x128xf32>
    tpu.vector_store %arg13[%c40, %c0_53], %199 {strides = array<i32>} : memref<64x128xf32, #tpu.memory_space<vmem>>, vector<8x128xf32>,
    %c0_54 = arith.constant 0 : index
    %c0_55 = arith.constant 0 : index
    %201 = vector.load %arg5[%c0_54, %c0_55] : memref<128x384xf32, #tpu.memory_space<vmem>>, vector<128x384xf32>
    %cst_56 = arith.constant dense<0.000000e+00> : vector<8x384xf32>
    %202 = tpu.matmul %199, %201, %cst_56 {dimension_numbers = #tpu.dot_dimension_numbers<[1], [0], [0], [1], [0, 0, 1, 1], [], []>} : vector<8x128xf32>, vector<128x384xf32>, vector<8x384xf32> -> vector<8x384xf32>
    %203 = vector.extract_strided_slice %10 {offsets = [48, 0], sizes = [8, 384], strides = [1, 1]} : vector<64x384xf32> to vector<8x384xf32>
    %204 = vector.extract_strided_slice %203 {offsets = [0, 0], sizes = [8, 128], strides = [1, 1]} : vector<8x384xf32> to vector<8x128xf32>
    %205 = vector.extract_strided_slice %202 {offsets = [0, 0], sizes = [8, 128], strides = [1, 1]} : vector<8x384xf32> to vector<8x128xf32>
    %206 = arith.addf %204, %205 : vector<8x128xf32>
    %207 = arith.negf %206 : vector<8x128xf32>
    %208 = math.exp %207 : vector<8x128xf32>
    %cst_57 = arith.constant 1.000000e+00 : f32
    %209 = vector.broadcast %cst_57 : f32 to vector<8x128xf32>
    %210 = arith.addf %209, %208 : vector<8x128xf32>
    %211 = arith.divf %209, %210 : vector<8x128xf32>
    %212 = vector.extract_strided_slice %203 {offsets = [0, 128], sizes = [8, 128], strides = [1, 1]} : vector<8x384xf32> to vector<8x128xf32>
    %213 = vector.extract_strided_slice %202 {offsets = [0, 128], sizes = [8, 128], strides = [1, 1]} : vector<8x384xf32> to vector<8x128xf32>
    %214 = arith.addf %212, %213 : vector<8x128xf32>
    %215 = arith.negf %214 : vector<8x128xf32>
    %216 = math.exp %215 : vector<8x128xf32>
    %cst_58 = arith.constant 1.000000e+00 : f32
    %217 = vector.broadcast %cst_58 : f32 to vector<8x128xf32>
    %218 = arith.addf %217, %216 : vector<8x128xf32>
    %219 = arith.divf %217, %218 : vector<8x128xf32>
    %220 = vector.extract_strided_slice %203 {offsets = [0, 256], sizes = [8, 128], strides = [1, 1]} : vector<8x384xf32> to vector<8x128xf32>
    %221 = vector.extract_strided_slice %202 {offsets = [0, 256], sizes = [8, 128], strides = [1, 1]} : vector<8x384xf32> to vector<8x128xf32>
    %222 = arith.addf %221, %13 : vector<8x128xf32>
    %223 = arith.mulf %211, %222 : vector<8x128xf32>
    %224 = arith.addf %220, %223 : vector<8x128xf32>
    %225 = math.tanh %224 : vector<8x128xf32>
    %cst_59 = arith.constant 1.000000e+00 : f32
    %226 = vector.broadcast %cst_59 : f32 to vector<8x128xf32>
    %227 = arith.subf %226, %219 : vector<8x128xf32>
    %228 = arith.mulf %227, %225 : vector<8x128xf32>
    %229 = arith.mulf %219, %199 : vector<8x128xf32>
    %230 = arith.addf %228, %229 : vector<8x128xf32>
    %c48 = arith.constant 48 : index
    %c0_60 = arith.constant 0 : index
    %231 = vector.load %arg13[%c48, %c0_60] : memref<64x128xf32, #tpu.memory_space<vmem>>, vector<8x128xf32>
    tpu.vector_store %arg13[%c48, %c0_60], %230 {strides = array<i32>} : memref<64x128xf32, #tpu.memory_space<vmem>>, vector<8x128xf32>,
    %c0_61 = arith.constant 0 : index
    %c0_62 = arith.constant 0 : index
    %232 = vector.load %arg5[%c0_61, %c0_62] : memref<128x384xf32, #tpu.memory_space<vmem>>, vector<128x384xf32>
    %cst_63 = arith.constant dense<0.000000e+00> : vector<8x384xf32>
    %233 = tpu.matmul %230, %232, %cst_63 {dimension_numbers = #tpu.dot_dimension_numbers<[1], [0], [0], [1], [0, 0, 1, 1], [], []>} : vector<8x128xf32>, vector<128x384xf32>, vector<8x384xf32> -> vector<8x384xf32>
    %234 = vector.extract_strided_slice %10 {offsets = [56, 0], sizes = [8, 384], strides = [1, 1]} : vector<64x384xf32> to vector<8x384xf32>
    %235 = vector.extract_strided_slice %234 {offsets = [0, 0], sizes = [8, 128], strides = [1, 1]} : vector<8x384xf32> to vector<8x128xf32>
    %236 = vector.extract_strided_slice %233 {offsets = [0, 0], sizes = [8, 128], strides = [1, 1]} : vector<8x384xf32> to vector<8x128xf32>
    %237 = arith.addf %235, %236 : vector<8x128xf32>
    %238 = arith.negf %237 : vector<8x128xf32>
    %239 = math.exp %238 : vector<8x128xf32>
    %cst_64 = arith.constant 1.000000e+00 : f32
    %240 = vector.broadcast %cst_64 : f32 to vector<8x128xf32>
    %241 = arith.addf %240, %239 : vector<8x128xf32>
    %242 = arith.divf %240, %241 : vector<8x128xf32>
    %243 = vector.extract_strided_slice %234 {offsets = [0, 128], sizes = [8, 128], strides = [1, 1]} : vector<8x384xf32> to vector<8x128xf32>
    %244 = vector.extract_strided_slice %233 {offsets = [0, 128], sizes = [8, 128], strides = [1, 1]} : vector<8x384xf32> to vector<8x128xf32>
    %245 = arith.addf %243, %244 : vector<8x128xf32>
    %246 = arith.negf %245 : vector<8x128xf32>
    %247 = math.exp %246 : vector<8x128xf32>
    %cst_65 = arith.constant 1.000000e+00 : f32
    %248 = vector.broadcast %cst_65 : f32 to vector<8x128xf32>
    %249 = arith.addf %248, %247 : vector<8x128xf32>
    %250 = arith.divf %248, %249 : vector<8x128xf32>
    %251 = vector.extract_strided_slice %234 {offsets = [0, 256], sizes = [8, 128], strides = [1, 1]} : vector<8x384xf32> to vector<8x128xf32>
    %252 = vector.extract_strided_slice %233 {offsets = [0, 256], sizes = [8, 128], strides = [1, 1]} : vector<8x384xf32> to vector<8x128xf32>
    %253 = arith.addf %252, %13 : vector<8x128xf32>
    %254 = arith.mulf %242, %253 : vector<8x128xf32>
    %255 = arith.addf %251, %254 : vector<8x128xf32>
    %256 = math.tanh %255 : vector<8x128xf32>
    %cst_66 = arith.constant 1.000000e+00 : f32
    %257 = vector.broadcast %cst_66 : f32 to vector<8x128xf32>
    %258 = arith.subf %257, %250 : vector<8x128xf32>
    %259 = arith.mulf %258, %256 : vector<8x128xf32>
    %260 = arith.mulf %250, %230 : vector<8x128xf32>
    %261 = arith.addf %259, %260 : vector<8x128xf32>
    %c56 = arith.constant 56 : index
    %c0_67 = arith.constant 0 : index
    %262 = vector.load %arg13[%c56, %c0_67] : memref<64x128xf32, #tpu.memory_space<vmem>>, vector<8x128xf32>
    tpu.vector_store %arg13[%c56, %c0_67], %261 {strides = array<i32>} : memref<64x128xf32, #tpu.memory_space<vmem>>, vector<8x128xf32>,
    %c0_68 = arith.constant 0 : index
    %c0_69 = arith.constant 0 : index
    %263 = vector.load %arg12[%c0_68, %c0_69] : memref<8x128xf32, #tpu.memory_space<vmem>>, vector<8x128xf32>
    tpu.vector_store %arg12[%c0_68, %c0_69], %261 {strides = array<i32>} : memref<8x128xf32, #tpu.memory_space<vmem>>, vector<8x128xf32>,
    %c0_70 = arith.constant 0 : index
    %c0_71 = arith.constant 0 : index
    %264 = vector.load %arg11[%c0_70, %c0_71] : memref<8x128xf32, #tpu.memory_space<vmem>>, vector<8x128xf32>
    tpu.vector_store %arg11[%c0_70, %c0_71], %261 {strides = array<i32>} : memref<8x128xf32, #tpu.memory_space<vmem>>, vector<8x128xf32>,
    %c0_72 = arith.constant 0 : index
    %c0_73 = arith.constant 0 : index
    %265 = vector.load %arg13[%c0_72, %c0_73] : memref<64x128xf32, #tpu.memory_space<vmem>>, vector<64x128xf32>
    %c0_74 = arith.constant 0 : index
    %c0_75 = arith.constant 0 : index
    %266 = vector.load %arg8[%c0_74, %c0_75] : memref<128x128xf32, #tpu.memory_space<vmem>>, vector<128x128xf32>
    %cst_76 = arith.constant dense<0.000000e+00> : vector<64x128xf32>
    %267 = tpu.matmul %265, %266, %cst_76 {dimension_numbers = #tpu.dot_dimension_numbers<[1], [0], [0], [1], [0, 0, 1, 1], [], []>} : vector<64x128xf32>, vector<128x128xf32>, vector<64x128xf32> -> vector<64x128xf32>
    %c0_77 = arith.constant 0 : index
    %c0_78 = arith.constant 0 : index
    %268 = vector.load %arg9[%c0_77, %c0_78] : memref<1x128xf32, #tpu.memory_space<vmem>>, vector<1x128xf32>
    %269 = vector.broadcast %268 : vector<1x128xf32> to vector<64x128xf32>
    %270 = arith.addf %267, %269 : vector<64x128xf32>
    %c0_79 = arith.constant 0 : index
    %c0_80 = arith.constant 0 : index
    %271 = vector.load %arg10[%c0_79, %c0_80] : memref<64x128xf32, #tpu.memory_space<vmem>>, vector<64x128xf32>
    tpu.vector_store %arg10[%c0_79, %c0_80], %270 {strides = array<i32>} : memref<64x128xf32, #tpu.memory_space<vmem>>, vector<64x128xf32>,
    return
  }
  func.func @transform_0(%arg0: i32, %arg1: i32) -> (i32, i32) {
    %c0_i32 = arith.constant 0 : i32
    %c0_i32_0 = arith.constant 0 : i32
    return %arg0, %c0_i32 : i32, i32
  }
  func.func @transform_1(%arg0: i32, %arg1: i32) -> (i32, i32) {
    %c1_i32 = arith.constant 1 : i32
    %0 = arith.muli %arg0, %c1_i32 : i32
    %1 = arith.addi %0, %arg1 : i32
    %c0_i32 = arith.constant 0 : i32
    %c0_i32_0 = arith.constant 0 : i32
    return %1, %c0_i32 : i32, i32
  }
  func.func @transform_2(%arg0: i32, %arg1: i32) -> (i32, i32) {
    %c0_i32 = arith.constant 0 : i32
    %c0_i32_0 = arith.constant 0 : i32
    %c0_i32_1 = arith.constant 0 : i32
    return %c0_i32, %c0_i32_0 : i32, i32
  }
  func.func @transform_3(%arg0: i32, %arg1: i32) -> (i32, i32) {
    %c0_i32 = arith.constant 0 : i32
    %c0_i32_0 = arith.constant 0 : i32
    %c0_i32_1 = arith.constant 0 : i32
    return %c0_i32, %c0_i32_0 : i32, i32
  }
  func.func @transform_4(%arg0: i32, %arg1: i32) -> (i32, i32) {
    %c0_i32 = arith.constant 0 : i32
    %c0_i32_0 = arith.constant 0 : i32
    %c0_i32_1 = arith.constant 0 : i32
    return %c0_i32, %c0_i32_0 : i32, i32
  }
  func.func @transform_5(%arg0: i32, %arg1: i32) -> (i32, i32) {
    %c0_i32 = arith.constant 0 : i32
    %c0_i32_0 = arith.constant 0 : i32
    %c0_i32_1 = arith.constant 0 : i32
    return %c0_i32, %c0_i32_0 : i32, i32
  }
  func.func @transform_6(%arg0: i32, %arg1: i32) -> (i32, i32) {
    %c0_i32 = arith.constant 0 : i32
    %c0_i32_0 = arith.constant 0 : i32
    %c0_i32_1 = arith.constant 0 : i32
    return %c0_i32, %c0_i32_0 : i32, i32
  }
  func.func @transform_7(%arg0: i32, %arg1: i32) -> (i32, i32) {
    %c0_i32 = arith.constant 0 : i32
    %c0_i32_0 = arith.constant 0 : i32
    %c0_i32_1 = arith.constant 0 : i32
    return %c0_i32, %c0_i32_0 : i32, i32
  }
  func.func @transform_8(%arg0: i32, %arg1: i32) -> (i32, i32) {
    %c1_i32 = arith.constant 1 : i32
    %0 = arith.muli %arg0, %c1_i32 : i32
    %1 = arith.addi %0, %arg1 : i32
    %c0_i32 = arith.constant 0 : i32
    %c0_i32_0 = arith.constant 0 : i32
    return %1, %c0_i32 : i32, i32
  }
  func.func @transform_9(%arg0: i32, %arg1: i32) -> (i32, i32) {
    %c0_i32 = arith.constant 0 : i32
    %c0_i32_0 = arith.constant 0 : i32
    return %arg0, %c0_i32 : i32, i32
  }
}

</mosaic_0001>

<llo_original>
// kernel: decoder_rnn_forward.1
$region0: #{decoder_rnn_forward.1}
  #allocation0 [shape = 'u32[]', space=smem, size = 0x4, offset = 0x4, fixed_abs, tag = 'smem constant byte address 0x4 - core index']
  #allocation1 [shape = 'u32[144,128]{1,0:T(1,128)}', space=vmem, size = 0x12000, scoped, tag = 'internal scratch']
  #allocation2 [shape = 'f32[8,128]{1,0:T(8,128)}', space=vmem, size = 0x1000, scoped, tag = 'scratch operand']
  #allocation3 [shape = 'f32[64,128]{1,0:T(8,128)}', space=vmem, size = 0x8000, scoped, tag = 'scratch operand']
  %s0 = inlined_call_operand.vmem [shape: f32[8,128], index: 0, kind: input, shape index: {}]
  %s1 = inlined_call_operand.vmem [shape: f32[64,128], index: 1, kind: input, shape index: {}]
  %s2 = inlined_call_operand.hbm [shape: f32[128,384], index: 2, kind: input, shape index: {}]
  %s3 = inlined_call_operand.hbm [shape: f32[128,384], index: 3, kind: input, shape index: {}]
  %s4 = inlined_call_operand.vmem [shape: f32[1,384], index: 4, kind: input, shape index: {}]
  %s5 = inlined_call_operand.vmem [shape: f32[1,128], index: 5, kind: input, shape index: {}]
  %s6 = inlined_call_operand.vmem [shape: f32[128,128], index: 6, kind: input, shape index: {}]
  %s7 = inlined_call_operand.vmem [shape: f32[1,128], index: 7, kind: input, shape index: {}]
  %s8 = inlined_call_operand.vmem [shape: f32[64,128], index: 8, kind: output, shape index: {0}]
  %s9 = inlined_call_operand.vmem [shape: f32[8,128], index: 9, kind: output, shape index: {1}]
  %10 = xla_tuple %s8, %s9
  %s11 = sld [smem:[#allocation0]]
  $region62: #{decoder_rnn_forward.1} parent=0
    _
  %s13 = ssub.s32 1, %s11
  %s14 = scalar_select 0, %s13, %s11
  $region1: #{decoder_rnn_forward.1} parent=0
    #allocation4 [shape = 'u8[196608]{0}', space=vmem, size = 0x30000, scoped, tag = 'input window, operand 2, single buffered']
    #allocation5 [shape = 's32[1]{0}', space=sflag, size = 0x4, scoped, tag = 'scoped memory for decoder_rnn_forward.1']
    #allocation6 [shape = 'u8[196608]{0}', space=vmem, size = 0x30000, scoped, tag = 'input window, operand 3, single buffered']
    #allocation7 [shape = 's32[1]{0}', space=sflag, size = 0x4, scoped, tag = 'scoped memory for decoder_rnn_forward.1']
    %15 = vsyncpa [#allocation5], 0
    %16 = vsyncpa [#allocation7], 0
    // Predicated region
    $region2: #{decoder_rnn_forward.1} parent=1 // pred_check
      _
    $region3: #{decoder_rnn_forward.1} parent=1 // pred_check_branch
      %18 = sbr.rel (0) target = $region5
    $region4: #{decoder_rnn_forward.1} parent=1 // pred_region
      _
    $region5: #{decoder_rnn_forward.1} parent=1 // pred_fallthru
      _
    // Predicated region
    $region6: #{decoder_rnn_forward.1} parent=1 // pred_check
      _
    $region7: #{decoder_rnn_forward.1} parent=1 // pred_check_branch
      %20 = sbr.rel (0) target = $region9
    $region8: #{decoder_rnn_forward.1} parent=1 // pred_region
      %s21 = sadd.s32 0, 0
      %s22 = smul.u32 8, %s21
      %p23 = scmp.lt.s32.totalorder %s22, 7
      %s24 = scalar_select %p23, %s22, 7
      %s25 = smul.addr %s24, 8
      %s26 = scalar_lea.vmem %s1, %s25
      %s27 = sadd.s32 0, 0
      %s28 = smul.u32 8, %s27
    $region9: #{decoder_rnn_forward.1} parent=1 // pred_fallthru
      _
    // Predicated region
    $region10: #{decoder_rnn_forward.1} parent=1 // pred_check
      _
    $region11: #{decoder_rnn_forward.1} parent=1 // pred_check_branch
      %30 = sbr.rel (0) target = $region13
    $region12: #{decoder_rnn_forward.1} parent=1 // pred_region
      %s32 = ssub.s32 6144, 6144
      %33 = vsyncadd [#allocation5], %s32
      %s34 = sshll.u32 [#allocation4], 4
      %s35 = int_to_ptr.vmem [resolvable:$true] %s34
      %40 = dma.hbm_to_vmem [thread:$0]  %s2, 6144, %s35, [#allocation5], 384, 384, 24
    $region13: #{decoder_rnn_forward.1} parent=1 // pred_fallthru
      _
    // Predicated region
    $region14: #{decoder_rnn_forward.1} parent=1 // pred_check
      _
    $region15: #{decoder_rnn_forward.1} parent=1 // pred_check_branch
      %42 = sbr.rel (0) target = $region17
    $region16: #{decoder_rnn_forward.1} parent=1 // pred_region
      %s44 = ssub.s32 6144, 6144
      %45 = vsyncadd [#allocation7], %s44
      %s46 = sshll.u32 [#allocation6], 4
      %s47 = int_to_ptr.vmem [resolvable:$true] %s46
      %52 = dma.hbm_to_vmem [thread:$0]  %s3, 6144, %s47, [#allocation7], 384, 384, 24
    $region17: #{decoder_rnn_forward.1} parent=1 // pred_fallthru
      _
    // Predicated region
    $region18: #{decoder_rnn_forward.1} parent=1 // pred_check
      _
    $region19: #{decoder_rnn_forward.1} parent=1 // pred_check_branch
      %54 = sbr.rel (0) target = $region21
    $region20: #{decoder_rnn_forward.1} parent=1 // pred_region
      _
    $region21: #{decoder_rnn_forward.1} parent=1 // pred_fallthru
      _
    // Predicated region
    $region22: #{decoder_rnn_forward.1} parent=1 // pred_check
      _
    $region23: #{decoder_rnn_forward.1} parent=1 // pred_check_branch
      %56 = sbr.rel (0) target = $region25
    $region24: #{decoder_rnn_forward.1} parent=1 // pred_region
      _
    $region25: #{decoder_rnn_forward.1} parent=1 // pred_fallthru
      _
    // Predicated region
    $region26: #{decoder_rnn_forward.1} parent=1 // pred_check
      _
    $region27: #{decoder_rnn_forward.1} parent=1 // pred_check_branch
      %58 = sbr.rel (0) target = $region29
    $region28: #{decoder_rnn_forward.1} parent=1 // pred_region
      _
    $region29: #{decoder_rnn_forward.1} parent=1 // pred_fallthru
      _
    // Predicated region
    $region30: #{decoder_rnn_forward.1} parent=1 // pred_check
      _
    $region31: #{decoder_rnn_forward.1} parent=1 // pred_check_branch
      %60 = sbr.rel (0) target = $region33
    $region32: #{decoder_rnn_forward.1} parent=1 // pred_region
      _
    $region33: #{decoder_rnn_forward.1} parent=1 // pred_fallthru
      _
    // Predicated region
    $region34: #{decoder_rnn_forward.1} parent=1 // pred_check
      _
    $region35: #{decoder_rnn_forward.1} parent=1 // pred_check_branch
      %62 = sbr.rel (0) target = $region37
    $region36: #{decoder_rnn_forward.1} parent=1 // pred_region
      %63 = dma.done [#allocation5], 6144
    $region37: #{decoder_rnn_forward.1} parent=1 // pred_fallthru
      _
    // Predicated region
    $region38: #{decoder_rnn_forward.1} parent=1 // pred_check
      _
    $region39: #{decoder_rnn_forward.1} parent=1 // pred_check_branch
      %65 = sbr.rel (0) target = $region41
    $region40: #{decoder_rnn_forward.1} parent=1 // pred_region
      %66 = dma.done [#allocation7], 6144
    $region41: #{decoder_rnn_forward.1} parent=1 // pred_fallthru
      _
    %s67 = sadd.s32 0, 0
    %s68 = smul.u32 8, %s67
    %p69 = scmp.lt.s32.totalorder %s68, 7
    %s70 = scalar_select %p69, %s68, 7
    %s71 = smul.addr %s70, 8
    %s72 = scalar_lea.vmem %s1, %s71
    %s73 = sadd.s32 0, 0
    %s74 = smul.u32 8, %s73
    %p75 = scmp.lt.s32.totalorder %s74, 7
    %s76 = scalar_select %p75, %s74, 7
    %s77 = smul.addr %s76, 8
    %s78 = scalar_lea.vmem %s8, %s77
    %s79 = sadd.s32 0, 0
    %s80 = smul.u32 8, %s79
    %p81 = scmp.lt.s32.totalorder %s80, 7
    %s82 = scalar_select %p81, %s80, 7
    %s83 = smul.addr %s82, 8
    %s84 = scalar_lea.vmem %s1, %s83
    %s85 = sadd.s32 0, 0
    %s86 = smul.u32 8, %s85
    %s87 = sadd.s32 0, 0
    %s88 = smul.u32 8, %s87
    %p89 = scmp.lt.s32.totalorder %s88, 7
    %s90 = scalar_select %p89, %s88, 7
    %s91 = smul.addr %s90, 8
    %s92 = scalar_lea.vmem %s8, %s91
    %s93 = sadd.s32 0, 0
    %s94 = smul.u32 8, %s93
    %p95 = scmp.eq.s32.totalorder 0, 0
    // Predicated region
    $region42: #{decoder_rnn_forward.1} parent=1 // pred_check
      %p96 = pneg %p95
    $region43: #{decoder_rnn_forward.1} parent=1 // pred_check_branch
      %98 = sbr.rel (%p96) target = $region45
    $region44: #{decoder_rnn_forward.1} parent=1 // pred_region
      %v99 = vld [vmem:[%s0] sm:$0xff]
      %100 = vst [vmem:[#allocation2] sm:$0xff] %v99
    $region45: #{decoder_rnn_forward.1} parent=1 // pred_fallthru
      _
    %v101 = vld [vmem:[%s84] sm:$0xff]
    %v102 = vld [vmem:[%s84 + $0x8] sm:$0xff]
    %v103 = vld [vmem:[%s84 + $0x10] sm:$0xff]
    %v104 = vld [vmem:[%s84 + $0x18] sm:$0xff]
    %v105 = vld [vmem:[%s84 + $0x20] sm:$0xff]
    %v106 = vld [vmem:[%s84 + $0x28] sm:$0xff]
    %v107 = vld [vmem:[%s84 + $0x30] sm:$0xff]
    %v108 = vld [vmem:[%s84 + $0x38] sm:$0xff]
    %v109 = vmax.f32 %v101, 0.0
    %v110 = vmax.f32 %v102, 0.0
    %v111 = vmax.f32 %v103, 0.0
    %v112 = vmax.f32 %v104, 0.0
    %v113 = vmax.f32 %v105, 0.0
    %v114 = vmax.f32 %v106, 0.0
    %v115 = vmax.f32 %v107, 0.0
    %v116 = vmax.f32 %v108, 0.0
    %v117 = vld [vmem:[#allocation4] sm:$0xff]
    %v118 = vld [vmem:[#allocation4 + $0x8] sm:$0xff]
    %v119 = vld [vmem:[#allocation4 + $0x10] sm:$0xff]
    %v120 = vld [vmem:[#allocation4 + $0x18] sm:$0xff]
    %v121 = vld [vmem:[#allocation4 + $0x20] sm:$0xff]
    %v122 = vld [vmem:[#allocation4 + $0x28] sm:$0xff]
    %v123 = vld [vmem:[#allocation4 + $0x30] sm:$0xff]
    %v124 = vld [vmem:[#allocation4 + $0x38] sm:$0xff]
    %v125 = vld [vmem:[#allocation4 + $0x40] sm:$0xff]
    %v126 = vld [vmem:[#allocation4 + $0x48] sm:$0xff]
    %v127 = vld [vmem:[#allocation4 + $0x50] sm:$0xff]
    %v128 = vld [vmem:[#allocation4 + $0x58] sm:$0xff]
    %v129 = vld [vmem:[#allocation4 + $0x60] sm:$0xff]
    %v130 = vld [vmem:[#allocation4 + $0x68] sm:$0xff]
    %v131 = vld [vmem:[#allocation4 + $0x70] sm:$0xff]
    %v132 = vld [vmem:[#allocation4 + $0x78] sm:$0xff]
    %v133 = vld [vmem:[#allocation4 + $0x80] sm:$0xff]
    %v134 = vld [vmem:[#allocation4 + $0x88] sm:$0xff]
    %v135 = vld [vmem:[#allocation4 + $0x90] sm:$0xff]
    %v136 = vld [vmem:[#allocation4 + $0x98] sm:$0xff]
    %v137 = vld [vmem:[#allocation4 + $0xa0] sm:$0xff]
    %v138 = vld [vmem:[#allocation4 + $0xa8] sm:$0xff]
    %v139 = vld [vmem:[#allocation4 + $0xb0] sm:$0xff]
    %v140 = vld [vmem:[#allocation4 + $0xb8] sm:$0xff]
    %v141 = vld [vmem:[#allocation4 + $0xc0] sm:$0xff]
    %v142 = vld [vmem:[#allocation4 + $0xc8] sm:$0xff]
    %v143 = vld [vmem:[#allocation4 + $0xd0] sm:$0xff]
    %v144 = vld [vmem:[#allocation4 + $0xd8] sm:$0xff]
    %v145 = vld [vmem:[#allocation4 + $0xe0] sm:$0xff]
    %v146 = vld [vmem:[#allocation4 + $0xe8] sm:$0xff]
    %v147 = vld [vmem:[#allocation4 + $0xf0] sm:$0xff]
    %v148 = vld [vmem:[#allocation4 + $0xf8] sm:$0xff]
    %v149 = vld [vmem:[#allocation4 + $0x100] sm:$0xff]
    %v150 = vld [vmem:[#allocation4 + $0x108] sm:$0xff]
    %v151 = vld [vmem:[#allocation4 + $0x110] sm:$0xff]
    %v152 = vld [vmem:[#allocation4 + $0x118] sm:$0xff]
    %v153 = vld [vmem:[#allocation4 + $0x120] sm:$0xff]
    %v154 = vld [vmem:[#allocation4 + $0x128] sm:$0xff]
    %v155 = vld [vmem:[#allocation4 + $0x130] sm:$0xff]
    %v156 = vld [vmem:[#allocation4 + $0x138] sm:$0xff]
    %v157 = vld [vmem:[#allocation4 + $0x140] sm:$0xff]
    %v158 = vld [vmem:[#allocation4 + $0x148] sm:$0xff]
    %v159 = vld [vmem:[#allocation4 + $0x150] sm:$0xff]
    %v160 = vld [vmem:[#allocation4 + $0x158] sm:$0xff]
    %v161 = vld [vmem:[#allocation4 + $0x160] sm:$0xff]
    %v162 = vld [vmem:[#allocation4 + $0x168] sm:$0xff]
    %v163 = vld [vmem:[#allocation4 + $0x170] sm:$0xff]
    %v164 = vld [vmem:[#allocation4 + $0x178] sm:$0xff]
    %v165 = vld [vmem:[%s4] sm:$0x7]
    %v167 = vlaneseq
    %v168 = vshrl.u32 %v167, 7
    %v169 = vsub.s32 0, %v168
    %v170 = vrot.slane %v165, %v169
    %v171 = vlaneseq
    %v172 = vshrl.u32 %v171, 7
    %v173 = vsub.s32 1, %v172
    %v174 = vrot.slane %v165, %v173
    %v175 = vlaneseq
    %v176 = vshrl.u32 %v175, 7
    %v177 = vsub.s32 2, %v176
    %v178 = vrot.slane %v165, %v177
    %182 = vmatprep.subr.mxu0 %v118
    %183 = vmatpush1.msra.mxu0 %v117
    %184 = vmatprep.subr.mxu0 %v121
    %185 = vmatpush1.msra.mxu0 %v120
    %186 = vmatprep.subr.mxu0 %v124
    %187 = vmatpush1.msra.mxu0 %v123
    %188 = vmatprep.subr.mxu0 %v127
    %189 = vmatpush1.msra.mxu0 %v126
    %190 = vmatprep.subr.mxu0 %v130
    %191 = vmatpush1.msra.mxu0 %v129
    %192 = vmatprep.subr.mxu0 %v133
    %193 = vmatpush1.msra.mxu0 %v132
    %194 = vmatprep.subr.mxu0 %v136
    %195 = vmatpush1.msra.mxu0 %v135
    %196 = vmatprep.subr.mxu0 %v139
    %197 = vmatpush1.msra.mxu0 %v138
    %198 = vmatprep.subr.mxu0 %v142
    %199 = vmatpush1.msra.mxu0 %v141
    %200 = vmatprep.subr.mxu0 %v145
    %201 = vmatpush1.msra.mxu0 %v144
    %202 = vmatprep.subr.mxu0 %v148
    %203 = vmatpush1.msra.mxu0 %v147
    %204 = vmatprep.subr.mxu0 %v151
    %205 = vmatpush1.msra.mxu0 %v150
    %206 = vmatprep.subr.mxu0 %v154
    %207 = vmatpush1.msra.mxu0 %v153
    %208 = vmatprep.subr.mxu0 %v157
    %209 = vmatpush1.msra.mxu0 %v156
    %210 = vmatprep.subr.mxu0 %v160
    %211 = vmatpush1.msra.mxu0 %v159
    %212 = vmatprep.subr.mxu0 %v163
    %213 = vmatpush1.msra.mxu0 %v162
    %214 = vmatprep.subr.mxu0 0.0
    %215 = vmatpush1.msra.mxu0 0.0
    %216 = vmatprep.subr.mxu0 0.0
    %217 = vmatpush1.msra.mxu0 0.0
    %218 = vmatprep.subr.mxu0 0.0
    %219 = vmatpush1.msra.mxu0 0.0
    %220 = vmatprep.subr.mxu0 0.0
    %221 = vmatpush1.msra.mxu0 0.0
    %222 = vmatprep.subr.mxu0 0.0
    %223 = vmatpush1.msra.mxu0 0.0
    %224 = vmatprep.subr.mxu0 0.0
    %225 = vmatpush1.msra.mxu0 0.0
    %226 = vmatprep.subr.mxu0 0.0
    %227 = vmatpush1.msra.mxu0 0.0
    %228 = vmatprep.subr.mxu0 0.0
    %229 = vmatpush1.msra.mxu0 0.0
    %230 = vmatprep.subr.mxu0 0.0
    %231 = vmatpush1.msra.mxu0 0.0
    %232 = vmatprep.subr.mxu0 0.0
    %233 = vmatpush1.msra.mxu0 0.0
    %234 = vmatprep.subr.mxu0 0.0
    %235 = vmatpush1.msra.mxu0 0.0
    %236 = vmatprep.subr.mxu0 0.0
    %237 = vmatpush1.msra.mxu0 0.0
    %238 = vmatprep.subr.mxu0 0.0
    %239 = vmatpush1.msra.mxu0 0.0
    %240 = vmatprep.subr.mxu0 0.0
    %241 = vmatpush1.msra.mxu0 0.0
    %242 = vmatprep.subr.mxu0 0.0
    %243 = vmatpush1.msra.mxu0 0.0
    %244 = vmatprep.subr.mxu0 0.0
    %245 = vmatpush1.msra.mxu0 0.0
    %246 = vmatprep.mubr.f32.mxu0 0.0
    %247 = vmatmul.mubr.f32.gmra.mrb[0].mxu0 %v109
    %v248 = vpop.f32.mrb[0].mxu0
    %v249 = vadd.f32 %v170, %v248
    %v250 = vpop.f32.mrb[0].mxu0
    %v251 = vadd.f32 %v174, %v250
    %252 = vmatprep.mubr.f32.mxu0 0.0
    %253 = vmatmul.mubr.f32.gmra.mrb[0].mxu0 %v110
    %v254 = vpop.f32.mrb[0].mxu0
    %v255 = vadd.f32 %v170, %v254
    %v256 = vpop.f32.mrb[0].mxu0
    %v257 = vadd.f32 %v174, %v256
    %258 = vmatprep.mubr.f32.mxu0 0.0
    %259 = vmatmul.mubr.f32.gmra.mrb[0].mxu0 %v111
    %v260 = vpop.f32.mrb[0].mxu0
    %v261 = vadd.f32 %v170, %v260
    %v262 = vpop.f32.mrb[0].mxu0
    %v263 = vadd.f32 %v174, %v262
    %264 = vmatprep.mubr.f32.mxu0 0.0
    %265 = vmatmul.mubr.f32.gmra.mrb[0].mxu0 %v112
    %v266 = vpop.f32.mrb[0].mxu0
    %v267 = vadd.f32 %v170, %v266
    %v268 = vpop.f32.mrb[0].mxu0
    %v269 = vadd.f32 %v174, %v268
    %270 = vmatprep.mubr.f32.mxu0 0.0
    %271 = vmatmul.mubr.f32.gmra.mrb[0].mxu0 %v113
    %v272 = vpop.f32.mrb[0].mxu0
    %v273 = vadd.f32 %v170, %v272
    %v274 = vpop.f32.mrb[0].mxu0
    %v275 = vadd.f32 %v174, %v274
    %276 = vmatprep.mubr.f32.mxu0 0.0
    %277 = vmatmul.mubr.f32.gmra.mrb[0].mxu0 %v114
    %v278 = vpop.f32.mrb[0].mxu0
    %v279 = vadd.f32 %v170, %v278
    %v280 = vpop.f32.mrb[0].mxu0
    %v281 = vadd.f32 %v174, %v280
    %282 = vmatprep.mubr.f32.mxu0 0.0
    %283 = vmatmul.mubr.f32.gmra.mrb[0].mxu0 %v115
    %v284 = vpop.f32.mrb[0].mxu0
    %v285 = vadd.f32 %v170, %v284
    %v286 = vpop.f32.mrb[0].mxu0
    %v287 = vadd.f32 %v174, %v286
    %288 = vmatprep.mubr.f32.mxu0 0.0
    %289 = vmatmul.mubr.f32.gmra.mrb[0].mxu0 %v116
    %v290 = vpop.f32.mrb[0].mxu0
    %v291 = vadd.f32 %v170, %v290
    %v292 = vpop.f32.mrb[0].mxu0
    %v293 = vadd.f32 %v174, %v292
    %294 = vdwg.mxu0
    %295 = vmatprep.subr.mxu0 0.0
    %296 = vmatpush1.msra.mxu0 %v119
    %297 = vmatprep.subr.mxu0 0.0
    %298 = vmatpush1.msra.mxu0 %v122
    %299 = vmatprep.subr.mxu0 0.0
    %300 = vmatpush1.msra.mxu0 %v125
    %301 = vmatprep.subr.mxu0 0.0
    %302 = vmatpush1.msra.mxu0 %v128
    %303 = vmatprep.subr.mxu0 0.0
    %304 = vmatpush1.msra.mxu0 %v131
    %305 = vmatprep.subr.mxu0 0.0
    %306 = vmatpush1.msra.mxu0 %v134
    %307 = vmatprep.subr.mxu0 0.0
    %308 = vmatpush1.msra.mxu0 %v137
    %309 = vmatprep.subr.mxu0 0.0
    %310 = vmatpush1.msra.mxu0 %v140
    %311 = vmatprep.subr.mxu0 0.0
    %312 = vmatpush1.msra.mxu0 %v143
    %313 = vmatprep.subr.mxu0 0.0
    %314 = vmatpush1.msra.mxu0 %v146
    %315 = vmatprep.subr.mxu0 0.0
    %316 = vmatpush1.msra.mxu0 %v149
    %317 = vmatprep.subr.mxu0 0.0
    %318 = vmatpush1.msra.mxu0 %v152
    %319 = vmatprep.subr.mxu0 0.0
    %320 = vmatpush1.msra.mxu0 %v155
    %321 = vmatprep.subr.mxu0 0.0
    %322 = vmatpush1.msra.mxu0 %v158
    %323 = vmatprep.subr.mxu0 0.0
    %324 = vmatpush1.msra.mxu0 %v161
    %325 = vmatprep.subr.mxu0 0.0
    %326 = vmatpush1.msra.mxu0 %v164
    %327 = vmatprep.subr.mxu0 0.0
    %328 = vmatpush1.msra.mxu0 0.0
    %329 = vmatprep.subr.mxu0 0.0
    %330 = vmatpush1.msra.mxu0 0.0
    %331 = vmatprep.subr.mxu0 0.0
    %332 = vmatpush1.msra.mxu0 0.0
    %333 = vmatprep.subr.mxu0 0.0
    %334 = vmatpush1.msra.mxu0 0.0
    %335 = vmatprep.subr.mxu0 0.0
    %336 = vmatpush1.msra.mxu0 0.0
    %337 = vmatprep.subr.mxu0 0.0
    %338 = vmatpush1.msra.mxu0 0.0
    %339 = vmatprep.subr.mxu0 0.0
    %340 = vmatpush1.msra.mxu0 0.0
    %341 = vmatprep.subr.mxu0 0.0
    %342 = vmatpush1.msra.mxu0 0.0
    %343 = vmatprep.subr.mxu0 0.0
    %344 = vmatpush1.msra.mxu0 0.0
    %345 = vmatprep.subr.mxu0 0.0
    %346 = vmatpush1.msra.mxu0 0.0
    %347 = vmatprep.subr.mxu0 0.0
    %348 = vmatpush1.msra.mxu0 0.0
    %349 = vmatprep.subr.mxu0 0.0
    %350 = vmatpush1.msra.mxu0 0.0
    %351 = vmatprep.subr.mxu0 0.0
    %352 = vmatpush1.msra.mxu0 0.0
    %353 = vmatprep.subr.mxu0 0.0
    %354 = vmatpush1.msra.mxu0 0.0
    %355 = vmatprep.subr.mxu0 0.0
    %356 = vmatpush1.msra.mxu0 0.0
    %357 = vmatprep.subr.mxu0 0.0
    %358 = vmatpush1.msra.mxu0 0.0
    %359 = vmatprep.mubr.f32.mxu0 0.0
    %360 = vmatmul.mubr.f32.gmra.mrb[0].mxu0 %v109
    %v361 = vpop.f32.mrb[0].mxu0
    %v362 = vadd.f32 %v178, %v361
    %v363 = vpop.f32.mrb[0].mxu0
    %364 = vmatprep.mubr.f32.mxu0 0.0
    %365 = vmatmul.mubr.f32.gmra.mrb[0].mxu0 %v110
    %v366 = vpop.f32.mrb[0].mxu0
    %v367 = vadd.f32 %v178, %v366
    %v368 = vpop.f32.mrb[0].mxu0
    %369 = vmatprep.mubr.f32.mxu0 0.0
    %370 = vmatmul.mubr.f32.gmra.mrb[0].mxu0 %v111
    %v371 = vpop.f32.mrb[0].mxu0
    %v372 = vadd.f32 %v178, %v371
    %v373 = vpop.f32.mrb[0].mxu0
    %374 = vmatprep.mubr.f32.mxu0 0.0
    %375 = vmatmul.mubr.f32.gmra.mrb[0].mxu0 %v112
    %v376 = vpop.f32.mrb[0].mxu0
    %v377 = vadd.f32 %v178, %v376
    %v378 = vpop.f32.mrb[0].mxu0
    %379 = vmatprep.mubr.f32.mxu0 0.0
    %380 = vmatmul.mubr.f32.gmra.mrb[0].mxu0 %v113
    %v381 = vpop.f32.mrb[0].mxu0
    %v382 = vadd.f32 %v178, %v381
    %v383 = vpop.f32.mrb[0].mxu0
    %384 = vmatprep.mubr.f32.mxu0 0.0
    %385 = vmatmul.mubr.f32.gmra.mrb[0].mxu0 %v114
    %v386 = vpop.f32.mrb[0].mxu0
    %v387 = vadd.f32 %v178, %v386
    %v388 = vpop.f32.mrb[0].mxu0
    %389 = vmatprep.mubr.f32.mxu0 0.0
    %390 = vmatmul.mubr.f32.gmra.mrb[0].mxu0 %v115
    %v391 = vpop.f32.mrb[0].mxu0
    %v392 = vadd.f32 %v178, %v391
    %v393 = vpop.f32.mrb[0].mxu0
    %394 = vmatprep.mubr.f32.mxu0 0.0
    %395 = vmatmul.mubr.f32.gmra.mrb[0].mxu0 %v116
    %v396 = vpop.f32.mrb[0].mxu0
    %v397 = vadd.f32 %v178, %v396
    %v398 = vpop.f32.mrb[0].mxu0
    %399 = vdwg.mxu0
    %v400 = vld [vmem:[%s5] sm:$0x1]
    %v402 = vlaneseq
    %v403 = vshrl.u32 %v402, 7
    %v404 = vsub.s32 0, %v403
    %v405 = vrot.slane %v400, %v404
    %v407 = vld [vmem:[#allocation2] sm:$0xff]
    %v408 = vld [vmem:[#allocation6] sm:$0xff]
    %v409 = vld [vmem:[#allocation6 + $0x8] sm:$0xff]
    %v410 = vld [vmem:[#allocation6 + $0x10] sm:$0xff]
    %v411 = vld [vmem:[#allocation6 + $0x18] sm:$0xff]
    %v412 = vld [vmem:[#allocation6 + $0x20] sm:$0xff]
    %v413 = vld [vmem:[#allocation6 + $0x28] sm:$0xff]
    %v414 = vld [vmem:[#allocation6 + $0x30] sm:$0xff]
    %v415 = vld [vmem:[#allocation6 + $0x38] sm:$0xff]
    %v416 = vld [vmem:[#allocation6 + $0x40] sm:$0xff]
    %v417 = vld [vmem:[#allocation6 + $0x48] sm:$0xff]
    %v418 = vld [vmem:[#allocation6 + $0x50] sm:$0xff]
    %v419 = vld [vmem:[#allocation6 + $0x58] sm:$0xff]
    %v420 = vld [vmem:[#allocation6 + $0x60] sm:$0xff]
    %v421 = vld [vmem:[#allocation6 + $0x68] sm:$0xff]
    %v422 = vld [vmem:[#allocation6 + $0x70] sm:$0xff]
    %v423 = vld [vmem:[#allocation6 + $0x78] sm:$0xff]
    %v424 = vld [vmem:[#allocation6 + $0x80] sm:$0xff]
    %v425 = vld [vmem:[#allocation6 + $0x88] sm:$0xff]
    %v426 = vld [vmem:[#allocation6 + $0x90] sm:$0xff]
    %v427 = vld [vmem:[#allocation6 + $0x98] sm:$0xff]
    %v428 = vld [vmem:[#allocation6 + $0xa0] sm:$0xff]
    %v429 = vld [vmem:[#allocation6 + $0xa8] sm:$0xff]
    %v430 = vld [vmem:[#allocation6 + $0xb0] sm:$0xff]
    %v431 = vld [vmem:[#allocation6 + $0xb8] sm:$0xff]
    %v432 = vld [vmem:[#allocation6 + $0xc0] sm:$0xff]
    %v433 = vld [vmem:[#allocation6 + $0xc8] sm:$0xff]
    %v434 = vld [vmem:[#allocation6 + $0xd0] sm:$0xff]
    %v435 = vld [vmem:[#allocation6 + $0xd8] sm:$0xff]
    %v436 = vld [vmem:[#allocation6 + $0xe0] sm:$0xff]
    %v437 = vld [vmem:[#allocation6 + $0xe8] sm:$0xff]
    %v438 = vld [vmem:[#allocation6 + $0xf0] sm:$0xff]
    %v439 = vld [vmem:[#allocation6 + $0xf8] sm:$0xff]
    %v440 = vld [vmem:[#allocation6 + $0x100] sm:$0xff]
    %v441 = vld [vmem:[#allocation6 + $0x108] sm:$0xff]
    %v442 = vld [vmem:[#allocation6 + $0x110] sm:$0xff]
    %v443 = vld [vmem:[#allocation6 + $0x118] sm:$0xff]
    %v444 = vld [vmem:[#allocation6 + $0x120] sm:$0xff]
    %v445 = vld [vmem:[#allocation6 + $0x128] sm:$0xff]
    %v446 = vld [vmem:[#allocation6 + $0x130] sm:$0xff]
    %v447 = vld [vmem:[#allocation6 + $0x138] sm:$0xff]
    %v448 = vld [vmem:[#allocation6 + $0x140] sm:$0xff]
    %v449 = vld [vmem:[#allocation6 + $0x148] sm:$0xff]
    %v450 = vld [vmem:[#allocation6 + $0x150] sm:$0xff]
    %v451 = vld [vmem:[#allocation6 + $0x158] sm:$0xff]
    %v452 = vld [vmem:[#allocation6 + $0x160] sm:$0xff]
    %v453 = vld [vmem:[#allocation6 + $0x168] sm:$0xff]
    %v454 = vld [vmem:[#allocation6 + $0x170] sm:$0xff]
    %v455 = vld [vmem:[#allocation6 + $0x178] sm:$0xff]
    %456 = vmatprep.subr.mxu0 %v409
    %457 = vmatpush1.msra.mxu0 %v408
    %458 = vmatprep.subr.mxu0 %v412
    %459 = vmatpush1.msra.mxu0 %v411
    %460 = vmatprep.subr.mxu0 %v415
    %461 = vmatpush1.msra.mxu0 %v414
    %462 = vmatprep.subr.mxu0 %v418
    %463 = vmatpush1.msra.mxu0 %v417
    %464 = vmatprep.subr.mxu0 %v421
    %465 = vmatpush1.msra.mxu0 %v420
    %466 = vmatprep.subr.mxu0 %v424
    %467 = vmatpush1.msra.mxu0 %v423
    %468 = vmatprep.subr.mxu0 %v427
    %469 = vmatpush1.msra.mxu0 %v426
    %470 = vmatprep.subr.mxu0 %v430
    %471 = vmatpush1.msra.mxu0 %v429
    %472 = vmatprep.subr.mxu0 %v433
    %473 = vmatpush1.msra.mxu0 %v432
    %474 = vmatprep.subr.mxu0 %v436
    %475 = vmatpush1.msra.mxu0 %v435
    %476 = vmatprep.subr.mxu0 %v439
    %477 = vmatpush1.msra.mxu0 %v438
    %478 = vmatprep.subr.mxu0 %v442
    %479 = vmatpush1.msra.mxu0 %v441
    %480 = vmatprep.subr.mxu0 %v445
    %481 = vmatpush1.msra.mxu0 %v444
    %482 = vmatprep.subr.mxu0 %v448
    %483 = vmatpush1.msra.mxu0 %v447
    %484 = vmatprep.subr.mxu0 %v451
    %485 = vmatpush1.msra.mxu0 %v450
    %486 = vmatprep.subr.mxu0 %v454
    %487 = vmatpush1.msra.mxu0 %v453
    %488 = vmatprep.subr.mxu0 0.0
    %489 = vmatpush1.msra.mxu0 0.0
    %490 = vmatprep.subr.mxu0 0.0
    %491 = vmatpush1.msra.mxu0 0.0
    %492 = vmatprep.subr.mxu0 0.0
    %493 = vmatpush1.msra.mxu0 0.0
    %494 = vmatprep.subr.mxu0 0.0
    %495 = vmatpush1.msra.mxu0 0.0
    %496 = vmatprep.subr.mxu0 0.0
    %497 = vmatpush1.msra.mxu0 0.0
    %498 = vmatprep.subr.mxu0 0.0
    %499 = vmatpush1.msra.mxu0 0.0
    %500 = vmatprep.subr.mxu0 0.0
    %501 = vmatpush1.msra.mxu0 0.0
    %502 = vmatprep.subr.mxu0 0.0
    %503 = vmatpush1.msra.mxu0 0.0
    %504 = vmatprep.subr.mxu0 0.0
    %505 = vmatpush1.msra.mxu0 0.0
    %506 = vmatprep.subr.mxu0 0.0
    %507 = vmatpush1.msra.mxu0 0.0
    %508 = vmatprep.subr.mxu0 0.0
    %509 = vmatpush1.msra.mxu0 0.0
    %510 = vmatprep.subr.mxu0 0.0
    %511 = vmatpush1.msra.mxu0 0.0
    %512 = vmatprep.subr.mxu0 0.0
    %513 = vmatpush1.msra.mxu0 0.0
    %514 = vmatprep.subr.mxu0 0.0
    %515 = vmatpush1.msra.mxu0 0.0
    %516 = vmatprep.subr.mxu0 0.0
    %517 = vmatpush1.msra.mxu0 0.0
    %518 = vmatprep.subr.mxu0 0.0
    %519 = vmatpush1.msra.mxu0 0.0
    %520 = vmatprep.mubr.f32.mxu0 0.0
    %521 = vmatmul.mubr.f32.gmra.mrb[0].mxu0 %v407
    %v522 = vpop.f32.mrb[0].mxu0
    %v523 = vadd.f32 0.0, %v522
    %v524 = vpop.f32.mrb[0].mxu0
    %v525 = vadd.f32 0.0, %v524
    %526 = vdwg.mxu0
    %527 = vmatprep.subr.mxu0 0.0
    %528 = vmatpush1.msra.mxu0 %v410
    %529 = vmatprep.subr.mxu0 0.0
    %530 = vmatpush1.msra.mxu0 %v413
    %531 = vmatprep.subr.mxu0 0.0
    %532 = vmatpush1.msra.mxu0 %v416
    %533 = vmatprep.subr.mxu0 0.0
    %534 = vmatpush1.msra.mxu0 %v419
    %535 = vmatprep.subr.mxu0 0.0
    %536 = vmatpush1.msra.mxu0 %v422
    %537 = vmatprep.subr.mxu0 0.0
    %538 = vmatpush1.msra.mxu0 %v425
    %539 = vmatprep.subr.mxu0 0.0
    %540 = vmatpush1.msra.mxu0 %v428
    %541 = vmatprep.subr.mxu0 0.0
    %542 = vmatpush1.msra.mxu0 %v431
    %543 = vmatprep.subr.mxu0 0.0
    %544 = vmatpush1.msra.mxu0 %v434
    %545 = vmatprep.subr.mxu0 0.0
    %546 = vmatpush1.msra.mxu0 %v437
    %547 = vmatprep.subr.mxu0 0.0
    %548 = vmatpush1.msra.mxu0 %v440
    %549 = vmatprep.subr.mxu0 0.0
    %550 = vmatpush1.msra.mxu0 %v443
    %551 = vmatprep.subr.mxu0 0.0
    %552 = vmatpush1.msra.mxu0 %v446
    %553 = vmatprep.subr.mxu0 0.0
    %554 = vmatpush1.msra.mxu0 %v449
    %555 = vmatprep.subr.mxu0 0.0
    %556 = vmatpush1.msra.mxu0 %v452
    %557 = vmatprep.subr.mxu0 0.0
    %558 = vmatpush1.msra.mxu0 %v455
    %559 = vmatprep.subr.mxu0 0.0
    %560 = vmatpush1.msra.mxu0 0.0
    %561 = vmatprep.subr.mxu0 0.0
    %562 = vmatpush1.msra.mxu0 0.0
    %563 = vmatprep.subr.mxu0 0.0
    %564 = vmatpush1.msra.mxu0 0.0
    %565 = vmatprep.subr.mxu0 0.0
    %566 = vmatpush1.msra.mxu0 0.0
    %567 = vmatprep.subr.mxu0 0.0
    %568 = vmatpush1.msra.mxu0 0.0
    %569 = vmatprep.subr.mxu0 0.0
    %570 = vmatpush1.msra.mxu0 0.0
    %571 = vmatprep.subr.mxu0 0.0
    %572 = vmatpush1.msra.mxu0 0.0
    %573 = vmatprep.subr.mxu0 0.0
    %574 = vmatpush1.msra.mxu0 0.0
    %575 = vmatprep.subr.mxu0 0.0
    %576 = vmatpush1.msra.mxu0 0.0
    %577 = vmatprep.subr.mxu0 0.0
    %578 = vmatpush1.msra.mxu0 0.0
    %579 = vmatprep.subr.mxu0 0.0
    %580 = vmatpush1.msra.mxu0 0.0
    %581 = vmatprep.subr.mxu0 0.0
    %582 = vmatpush1.msra.mxu0 0.0
    %583 = vmatprep.subr.mxu0 0.0
    %584 = vmatpush1.msra.mxu0 0.0
    %585 = vmatprep.subr.mxu0 0.0
    %586 = vmatpush1.msra.mxu0 0.0
    %587 = vmatprep.subr.mxu0 0.0
    %588 = vmatpush1.msra.mxu0 0.0
    %589 = vmatprep.subr.mxu0 0.0
    %590 = vmatpush1.msra.mxu0 0.0
    %591 = vmatprep.mubr.f32.mxu0 0.0
    %592 = vmatmul.mubr.f32.gmra.mrb[0].mxu0 %v407
    %v593 = vpop.f32.mrb[0].mxu0
    %v594 = vadd.f32 0.0, %v593
    %v595 = vpop.f32.mrb[0].mxu0
    %596 = vdwg.mxu0
    %v597 = vadd.f32 %v249, %v523
    %v598 = vxor.u32 %v597, 2147483648
    %v599 = vmul.f32 %v598, 1.442695
    %v600 = vpow.pop %v599
    %v601 = vadd.f32 %v600, 1.0
    %v602 = vrcp.pop %v601
    %v603 = vmul.f32 1.0, %v602
    %v604 = vadd.f32 %v251, %v525
    %v605 = vxor.u32 %v604, 2147483648
    %v606 = vmul.f32 %v605, 1.442695
    %v607 = vpow.pop %v606
    %v608 = vadd.f32 %v607, 1.0
    %v609 = vrcp.pop %v608
    %v610 = vmul.f32 1.0, %v609
    %v611 = vadd.f32 %v594, %v405
    %v612 = vmul.f32 %v603, %v611
    %v613 = vadd.f32 %v362, %v612
    %v614 = vtanh.pop %v613
    %v615 = vsub.f32 1.0, %v610
    %v616 = vmul.f32 %v615, %v614
    %v617 = vmul.f32 %v610, %v407
    %v618 = vadd.f32 %v616, %v617
    %619 = vst [vmem:[#allocation3] sm:$0xff] %v618
    %v620 = vld [vmem:[#allocation6] sm:$0xff]
    %v621 = vld [vmem:[#allocation6 + $0x8] sm:$0xff]
    %v622 = vld [vmem:[#allocation6 + $0x10] sm:$0xff]
    %v623 = vld [vmem:[#allocation6 + $0x18] sm:$0xff]
    %v624 = vld [vmem:[#allocation6 + $0x20] sm:$0xff]
    %v625 = vld [vmem:[#allocation6 + $0x28] sm:$0xff]
    %v626 = vld [vmem:[#allocation6 + $0x30] sm:$0xff]
    %v627 = vld [vmem:[#allocation6 + $0x38] sm:$0xff]
    %v628 = vld [vmem:[#allocation6 + $0x40] sm:$0xff]
    %v629 = vld [vmem:[#allocation6 + $0x48] sm:$0xff]
    %v630 = vld [vmem:[#allocation6 + $0x50] sm:$0xff]
    %v631 = vld [vmem:[#allocation6 + $0x58] sm:$0xff]
    %v632 = vld [vmem:[#allocation6 + $0x60] sm:$0xff]
    %v633 = vld [vmem:[#allocation6 + $0x68] sm:$0xff]
    %v634 = vld [vmem:[#allocation6 + $0x70] sm:$0xff]
    %v635 = vld [vmem:[#allocation6 + $0x78] sm:$0xff]
    %v636 = vld [vmem:[#allocation6 + $0x80] sm:$0xff]
    %v637 = vld [vmem:[#allocation6 + $0x88] sm:$0xff]
    %v638 = vld [vmem:[#allocation6 + $0x90] sm:$0xff]
    %v639 = vld [vmem:[#allocation6 + $0x98] sm:$0xff]
    %v640 = vld [vmem:[#allocation6 + $0xa0] sm:$0xff]
    %v641 = vld [vmem:[#allocation6 + $0xa8] sm:$0xff]
    %v642 = vld [vmem:[#allocation6 + $0xb0] sm:$0xff]
    %v643 = vld [vmem:[#allocation6 + $0xb8] sm:$0xff]
    %v644 = vld [vmem:[#allocation6 + $0xc0] sm:$0xff]
    %v645 = vld [vmem:[#allocation6 + $0xc8] sm:$0xff]
    %v646 = vld [vmem:[#allocation6 + $0xd0] sm:$0xff]
    %v647 = vld [vmem:[#allocation6 + $0xd8] sm:$0xff]
    %v648 = vld [vmem:[#allocation6 + $0xe0] sm:$0xff]
    %v649 = vld [vmem:[#allocation6 + $0xe8] sm:$0xff]
    %v650 = vld [vmem:[#allocation6 + $0xf0] sm:$0xff]
    %v651 = vld [vmem:[#allocation6 + $0xf8] sm:$0xff]
    %v652 = vld [vmem:[#allocation6 + $0x100] sm:$0xff]
    %v653 = vld [vmem:[#allocation6 + $0x108] sm:$0xff]
    %v654 = vld [vmem:[#allocation6 + $0x110] sm:$0xff]
    %v655 = vld [vmem:[#allocation6 + $0x118] sm:$0xff]
    %v656 = vld [vmem:[#allocation6 + $0x120] sm:$0xff]
    %v657 = vld [vmem:[#allocation6 + $0x128] sm:$0xff]
    %v658 = vld [vmem:[#allocation6 + $0x130] sm:$0xff]
    %v659 = vld [vmem:[#allocation6 + $0x138] sm:$0xff]
    %v660 = vld [vmem:[#allocation6 + $0x140] sm:$0xff]
    %v661 = vld [vmem:[#allocation6 + $0x148] sm:$0xff]
    %v662 = vld [vmem:[#allocation6 + $0x150] sm:$0xff]
    %v663 = vld [vmem:[#allocation6 + $0x158] sm:$0xff]
    %v664 = vld [vmem:[#allocation6 + $0x160] sm:$0xff]
    %v665 = vld [vmem:[#allocation6 + $0x168] sm:$0xff]
    %v666 = vld [vmem:[#allocation6 + $0x170] sm:$0xff]
    %v667 = vld [vmem:[#allocation6 + $0x178] sm:$0xff]
    %668 = vmatprep.subr.mxu0 %v621
    %669 = vmatpush1.msra.mxu0 %v620
    %670 = vmatprep.subr.mxu0 %v624
    %671 = vmatpush1.msra.mxu0 %v623
    %672 = vmatprep.subr.mxu0 %v627
    %673 = vmatpush1.msra.mxu0 %v626
    %674 = vmatprep.subr.mxu0 %v630
    %675 = vmatpush1.msra.mxu0 %v629
    %676 = vmatprep.subr.mxu0 %v633
    %677 = vmatpush1.msra.mxu0 %v632
    %678 = vmatprep.subr.mxu0 %v636
    %679 = vmatpush1.msra.mxu0 %v635
    %680 = vmatprep.subr.mxu0 %v639
    %681 = vmatpush1.msra.mxu0 %v638
    %682 = vmatprep.subr.mxu0 %v642
    %683 = vmatpush1.msra.mxu0 %v641
    %684 = vmatprep.subr.mxu0 %v645
    %685 = vmatpush1.msra.mxu0 %v644
    %686 = vmatprep.subr.mxu0 %v648
    %687 = vmatpush1.msra.mxu0 %v647
    %688 = vmatprep.subr.mxu0 %v651
    %689 = vmatpush1.msra.mxu0 %v650
    %690 = vmatprep.subr.mxu0 %v654
    %691 = vmatpush1.msra.mxu0 %v653
    %692 = vmatprep.subr.mxu0 %v657
    %693 = vmatpush1.msra.mxu0 %v656
    %694 = vmatprep.subr.mxu0 %v660
    %695 = vmatpush1.msra.mxu0 %v659
    %696 = vmatprep.subr.mxu0 %v663
    %697 = vmatpush1.msra.mxu0 %v662
    %698 = vmatprep.subr.mxu0 %v666
    %699 = vmatpush1.msra.mxu0 %v665
    %700 = vmatprep.subr.mxu0 0.0
    %701 = vmatpush1.msra.mxu0 0.0
    %702 = vmatprep.subr.mxu0 0.0
    %703 = vmatpush1.msra.mxu0 0.0
    %704 = vmatprep.subr.mxu0 0.0
    %705 = vmatpush1.msra.mxu0 0.0
    %706 = vmatprep.subr.mxu0 0.0
    %707 = vmatpush1.msra.mxu0 0.0
    %708 = vmatprep.subr.mxu0 0.0
    %709 = vmatpush1.msra.mxu0 0.0
    %710 = vmatprep.subr.mxu0 0.0
    %711 = vmatpush1.msra.mxu0 0.0
    %712 = vmatprep.subr.mxu0 0.0
    %713 = vmatpush1.msra.mxu0 0.0
    %714 = vmatprep.subr.mxu0 0.0
    %715 = vmatpush1.msra.mxu0 0.0
    %716 = vmatprep.subr.mxu0 0.0
    %717 = vmatpush1.msra.mxu0 0.0
    %718 = vmatprep.subr.mxu0 0.0
    %719 = vmatpush1.msra.mxu0 0.0
    %720 = vmatprep.subr.mxu0 0.0
    %721 = vmatpush1.msra.mxu0 0.0
    %722 = vmatprep.subr.mxu0 0.0
    %723 = vmatpush1.msra.mxu0 0.0
    %724 = vmatprep.subr.mxu0 0.0
    %725 = vmatpush1.msra.mxu0 0.0
    %726 = vmatprep.subr.mxu0 0.0
    %727 = vmatpush1.msra.mxu0 0.0
    %728 = vmatprep.subr.mxu0 0.0
    %729 = vmatpush1.msra.mxu0 0.0
    %730 = vmatprep.subr.mxu0 0.0
    %731 = vmatpush1.msra.mxu0 0.0
    %732 = vmatprep.mubr.f32.mxu0 0.0
    %733 = vmatmul.mubr.f32.gmra.mrb[0].mxu0 %v618
    %v734 = vpop.f32.mrb[0].mxu0
    %v735 = vadd.f32 0.0, %v734
    %v736 = vpop.f32.mrb[0].mxu0
    %v737 = vadd.f32 0.0, %v736
    %738 = vdwg.mxu0
    %739 = vmatprep.subr.mxu0 0.0
    %740 = vmatpush1.msra.mxu0 %v622
    %741 = vmatprep.subr.mxu0 0.0
    %742 = vmatpush1.msra.mxu0 %v625
    %743 = vmatprep.subr.mxu0 0.0
    %744 = vmatpush1.msra.mxu0 %v628
    %745 = vmatprep.subr.mxu0 0.0
    %746 = vmatpush1.msra.mxu0 %v631
    %747 = vmatprep.subr.mxu0 0.0
    %748 = vmatpush1.msra.mxu0 %v634
    %749 = vmatprep.subr.mxu0 0.0
    %750 = vmatpush1.msra.mxu0 %v637
    %751 = vmatprep.subr.mxu0 0.0
    %752 = vmatpush1.msra.mxu0 %v640
    %753 = vmatprep.subr.mxu0 0.0
    %754 = vmatpush1.msra.mxu0 %v643
    %755 = vmatprep.subr.mxu0 0.0
    %756 = vmatpush1.msra.mxu0 %v646
    %757 = vmatprep.subr.mxu0 0.0
    %758 = vmatpush1.msra.mxu0 %v649
    %759 = vmatprep.subr.mxu0 0.0
    %760 = vmatpush1.msra.mxu0 %v652
    %761 = vmatprep.subr.mxu0 0.0
    %762 = vmatpush1.msra.mxu0 %v655
    %763 = vmatprep.subr.mxu0 0.0
    %764 = vmatpush1.msra.mxu0 %v658
    %765 = vmatprep.subr.mxu0 0.0
    %766 = vmatpush1.msra.mxu0 %v661
    %767 = vmatprep.subr.mxu0 0.0
    %768 = vmatpush1.msra.mxu0 %v664
    %769 = vmatprep.subr.mxu0 0.0
    %770 = vmatpush1.msra.mxu0 %v667
    %771 = vmatprep.subr.mxu0 0.0
    %772 = vmatpush1.msra.mxu0 0.0
    %773 = vmatprep.subr.mxu0 0.0
    %774 = vmatpush1.msra.mxu0 0.0
    %775 = vmatprep.subr.mxu0 0.0
    %776 = vmatpush1.msra.mxu0 0.0
    %777 = vmatprep.subr.mxu0 0.0
    %778 = vmatpush1.msra.mxu0 0.0
    %779 = vmatprep.subr.mxu0 0.0
    %780 = vmatpush1.msra.mxu0 0.0
    %781 = vmatprep.subr.mxu0 0.0
    %782 = vmatpush1.msra.mxu0 0.0
    %783 = vmatprep.subr.mxu0 0.0
    %784 = vmatpush1.msra.mxu0 0.0
    %785 = vmatprep.subr.mxu0 0.0
    %786 = vmatpush1.msra.mxu0 0.0
    %787 = vmatprep.subr.mxu0 0.0
    %788 = vmatpush1.msra.mxu0 0.0
    %789 = vmatprep.subr.mxu0 0.0
    %790 = vmatpush1.msra.mxu0 0.0
    %791 = vmatprep.subr.mxu0 0.0
    %792 = vmatpush1.msra.mxu0 0.0
    %793 = vmatprep.subr.mxu0 0.0
    %794 = vmatpush1.msra.mxu0 0.0
    %795 = vmatprep.subr.mxu0 0.0
    %796 = vmatpush1.msra.mxu0 0.0
    %797 = vmatprep.subr.mxu0 0.0
    %798 = vmatpush1.msra.mxu0 0.0
    %799 = vmatprep.subr.mxu0 0.0
    %800 = vmatpush1.msra.mxu0 0.0
    %801 = vmatprep.subr.mxu0 0.0
    %802 = vmatpush1.msra.mxu0 0.0
    %803 = vmatprep.mubr.f32.mxu0 0.0
    %804 = vmatmul.mubr.f32.gmra.mrb[0].mxu0 %v618
    %v805 = vpop.f32.mrb[0].mxu0
    %v806 = vadd.f32 0.0, %v805
    %v807 = vpop.f32.mrb[0].mxu0
    %808 = vdwg.mxu0
    %v809 = vadd.f32 %v255, %v735
    %v810 = vxor.u32 %v809, 2147483648
    %v811 = vmul.f32 %v810, 1.442695
    %v812 = vpow.pop %v811
    %v813 = vadd.f32 %v812, 1.0
    %v814 = vrcp.pop %v813
    %v815 = vmul.f32 1.0, %v814
    %v816 = vadd.f32 %v257, %v737
    %v817 = vxor.u32 %v816, 2147483648
    %v818 = vmul.f32 %v817, 1.442695
    %v819 = vpow.pop %v818
    %v820 = vadd.f32 %v819, 1.0
    %v821 = vrcp.pop %v820
    %v822 = vmul.f32 1.0, %v821
    %v823 = vadd.f32 %v806, %v405
    %v824 = vmul.f32 %v815, %v823
    %v825 = vadd.f32 %v367, %v824
    %v826 = vtanh.pop %v825
    %v827 = vsub.f32 1.0, %v822
    %v828 = vmul.f32 %v827, %v826
    %v829 = vmul.f32 %v822, %v618
    %v830 = vadd.f32 %v828, %v829
    %831 = vst [vmem:[#allocation3 + $0x8] sm:$0xff] %v830
    %v832 = vld [vmem:[#allocation6] sm:$0xff]
    %v833 = vld [vmem:[#allocation6 + $0x8] sm:$0xff]
    %v834 = vld [vmem:[#allocation6 + $0x10] sm:$0xff]
    %v835 = vld [vmem:[#allocation6 + $0x18] sm:$0xff]
    %v836 = vld [vmem:[#allocation6 + $0x20] sm:$0xff]
    %v837 = vld [vmem:[#allocation6 + $0x28] sm:$0xff]
    %v838 = vld [vmem:[#allocation6 + $0x30] sm:$0xff]
    %v839 = vld [vmem:[#allocation6 + $0x38] sm:$0xff]
    %v840 = vld [vmem:[#allocation6 + $0x40] sm:$0xff]
    %v841 = vld [vmem:[#allocation6 + $0x48] sm:$0xff]
    %v842 = vld [vmem:[#allocation6 + $0x50] sm:$0xff]
    %v843 = vld [vmem:[#allocation6 + $0x58] sm:$0xff]
    %v844 = vld [vmem:[#allocation6 + $0x60] sm:$0xff]
    %v845 = vld [vmem:[#allocation6 + $0x68] sm:$0xff]
    %v846 = vld [vmem:[#allocation6 + $0x70] sm:$0xff]
    %v847 = vld [vmem:[#allocation6 + $0x78] sm:$0xff]
    %v848 = vld [vmem:[#allocation6 + $0x80] sm:$0xff]
    %v849 = vld [vmem:[#allocation6 + $0x88] sm:$0xff]
    %v850 = vld [vmem:[#allocation6 + $0x90] sm:$0xff]
    %v851 = vld [vmem:[#allocation6 + $0x98] sm:$0xff]
    %v852 = vld [vmem:[#allocation6 + $0xa0] sm:$0xff]
    %v853 = vld [vmem:[#allocation6 + $0xa8] sm:$0xff]
    %v854 = vld [vmem:[#allocation6 + $0xb0] sm:$0xff]
    %v855 = vld [vmem:[#allocation6 + $0xb8] sm:$0xff]
    %v856 = vld [vmem:[#allocation6 + $0xc0] sm:$0xff]
    %v857 = vld [vmem:[#allocation6 + $0xc8] sm:$0xff]
    %v858 = vld [vmem:[#allocation6 + $0xd0] sm:$0xff]
    %v859 = vld [vmem:[#allocation6 + $0xd8] sm:$0xff]
    %v860 = vld [vmem:[#allocation6 + $0xe0] sm:$0xff]
    %v861 = vld [vmem:[#allocation6 + $0xe8] sm:$0xff]
    %v862 = vld [vmem:[#allocation6 + $0xf0] sm:$0xff]
    %v863 = vld [vmem:[#allocation6 + $0xf8] sm:$0xff]
    %v864 = vld [vmem:[#allocation6 + $0x100] sm:$0xff]
    %v865 = vld [vmem:[#allocation6 + $0x108] sm:$0xff]
    %v866 = vld [vmem:[#allocation6 + $0x110] sm:$0xff]
    %v867 = vld [vmem:[#allocation6 + $0x118] sm:$0xff]
    %v868 = vld [vmem:[#allocation6 + $0x120] sm:$0xff]
    %v869 = vld [vmem:[#allocation6 + $0x128] sm:$0xff]
    %v870 = vld [vmem:[#allocation6 + $0x130] sm:$0xff]
    %v871 = vld [vmem:[#allocation6 + $0x138] sm:$0xff]
    %v872 = vld [vmem:[#allocation6 + $0x140] sm:$0xff]
    %v873 = vld [vmem:[#allocation6 + $0x148] sm:$0xff]
    %v874 = vld [vmem:[#allocation6 + $0x150] sm:$0xff]
    %v875 = vld [vmem:[#allocation6 + $0x158] sm:$0xff]
    %v876 = vld [vmem:[#allocation6 + $0x160] sm:$0xff]
    %v877 = vld [vmem:[#allocation6 + $0x168] sm:$0xff]
    %v878 = vld [vmem:[#allocation6 + $0x170] sm:$0xff]
    %v879 = vld [vmem:[#allocation6 + $0x178] sm:$0xff]
    %880 = vmatprep.subr.mxu0 %v833
    %881 = vmatpush1.msra.mxu0 %v832
    %882 = vmatprep.subr.mxu0 %v836
    %883 = vmatpush1.msra.mxu0 %v835
    %884 = vmatprep.subr.mxu0 %v839
    %885 = vmatpush1.msra.mxu0 %v838
    %886 = vmatprep.subr.mxu0 %v842
    %887 = vmatpush1.msra.mxu0 %v841
    %888 = vmatprep.subr.mxu0 %v845
    %889 = vmatpush1.msra.mxu0 %v844
    %890 = vmatprep.subr.mxu0 %v848
    %891 = vmatpush1.msra.mxu0 %v847
    %892 = vmatprep.subr.mxu0 %v851
    %893 = vmatpush1.msra.mxu0 %v850
    %894 = vmatprep.subr.mxu0 %v854
    %895 = vmatpush1.msra.mxu0 %v853
    %896 = vmatprep.subr.mxu0 %v857
    %897 = vmatpush1.msra.mxu0 %v856
    %898 = vmatprep.subr.mxu0 %v860
    %899 = vmatpush1.msra.mxu0 %v859
    %900 = vmatprep.subr.mxu0 %v863
    %901 = vmatpush1.msra.mxu0 %v862
    %902 = vmatprep.subr.mxu0 %v866
    %903 = vmatpush1.msra.mxu0 %v865
    %904 = vmatprep.subr.mxu0 %v869
    %905 = vmatpush1.msra.mxu0 %v868
    %906 = vmatprep.subr.mxu0 %v872
    %907 = vmatpush1.msra.mxu0 %v871
    %908 = vmatprep.subr.mxu0 %v875
    %909 = vmatpush1.msra.mxu0 %v874
    %910 = vmatprep.subr.mxu0 %v878
    %911 = vmatpush1.msra.mxu0 %v877
    %912 = vmatprep.subr.mxu0 0.0
    %913 = vmatpush1.msra.mxu0 0.0
    %914 = vmatprep.subr.mxu0 0.0
    %915 = vmatpush1.msra.mxu0 0.0
    %916 = vmatprep.subr.mxu0 0.0
    %917 = vmatpush1.msra.mxu0 0.0
    %918 = vmatprep.subr.mxu0 0.0
    %919 = vmatpush1.msra.mxu0 0.0
    %920 = vmatprep.subr.mxu0 0.0
    %921 = vmatpush1.msra.mxu0 0.0
    %922 = vmatprep.subr.mxu0 0.0
    %923 = vmatpush1.msra.mxu0 0.0
    %924 = vmatprep.subr.mxu0 0.0
    %925 = vmatpush1.msra.mxu0 0.0
    %926 = vmatprep.subr.mxu0 0.0
    %927 = vmatpush1.msra.mxu0 0.0
    %928 = vmatprep.subr.mxu0 0.0
    %929 = vmatpush1.msra.mxu0 0.0
    %930 = vmatprep.subr.mxu0 0.0
    %931 = vmatpush1.msra.mxu0 0.0
    %932 = vmatprep.subr.mxu0 0.0
    %933 = vmatpush1.msra.mxu0 0.0
    %934 = vmatprep.subr.mxu0 0.0
    %935 = vmatpush1.msra.mxu0 0.0
    %936 = vmatprep.subr.mxu0 0.0
    %937 = vmatpush1.msra.mxu0 0.0
    %938 = vmatprep.subr.mxu0 0.0
    %939 = vmatpush1.msra.mxu0 0.0
    %940 = vmatprep.subr.mxu0 0.0
    %941 = vmatpush1.msra.mxu0 0.0
    %942 = vmatprep.subr.mxu0 0.0
    %943 = vmatpush1.msra.mxu0 0.0
    %944 = vmatprep.mubr.f32.mxu0 0.0
    %945 = vmatmul.mubr.f32.gmra.mrb[0].mxu0 %v830
    %v946 = vpop.f32.mrb[0].mxu0
    %v947 = vadd.f32 0.0, %v946
    %v948 = vpop.f32.mrb[0].mxu0
    %v949 = vadd.f32 0.0, %v948
    %950 = vdwg.mxu0
    %951 = vmatprep.subr.mxu0 0.0
    %952 = vmatpush1.msra.mxu0 %v834
    %953 = vmatprep.subr.mxu0 0.0
    %954 = vmatpush1.msra.mxu0 %v837
    %955 = vmatprep.subr.mxu0 0.0
    %956 = vmatpush1.msra.mxu0 %v840
    %957 = vmatprep.subr.mxu0 0.0
    %958 = vmatpush1.msra.mxu0 %v843
    %959 = vmatprep.subr.mxu0 0.0
    %960 = vmatpush1.msra.mxu0 %v846
    %961 = vmatprep.subr.mxu0 0.0
    %962 = vmatpush1.msra.mxu0 %v849
    %963 = vmatprep.subr.mxu0 0.0
    %964 = vmatpush1.msra.mxu0 %v852
    %965 = vmatprep.subr.mxu0 0.0
    %966 = vmatpush1.msra.mxu0 %v855
    %967 = vmatprep.subr.mxu0 0.0
    %968 = vmatpush1.msra.mxu0 %v858
    %969 = vmatprep.subr.mxu0 0.0
    %970 = vmatpush1.msra.mxu0 %v861
    %971 = vmatprep.subr.mxu0 0.0
    %972 = vmatpush1.msra.mxu0 %v864
    %973 = vmatprep.subr.mxu0 0.0
    %974 = vmatpush1.msra.mxu0 %v867
    %975 = vmatprep.subr.mxu0 0.0
    %976 = vmatpush1.msra.mxu0 %v870
    %977 = vmatprep.subr.mxu0 0.0
    %978 = vmatpush1.msra.mxu0 %v873
    %979 = vmatprep.subr.mxu0 0.0
    %980 = vmatpush1.msra.mxu0 %v876
    %981 = vmatprep.subr.mxu0 0.0
    %982 = vmatpush1.msra.mxu0 %v879
    %983 = vmatprep.subr.mxu0 0.0
    %984 = vmatpush1.msra.mxu0 0.0
    %985 = vmatprep.subr.mxu0 0.0
    %986 = vmatpush1.msra.mxu0 0.0
    %987 = vmatprep.subr.mxu0 0.0
    %988 = vmatpush1.msra.mxu0 0.0
    %989 = vmatprep.subr.mxu0 0.0
    %990 = vmatpush1.msra.mxu0 0.0
    %991 = vmatprep.subr.mxu0 0.0
    %992 = vmatpush1.msra.mxu0 0.0
    %993 = vmatprep.subr.mxu0 0.0
    %994 = vmatpush1.msra.mxu0 0.0
    %995 = vmatprep.subr.mxu0 0.0
    %996 = vmatpush1.msra.mxu0 0.0
    %997 = vmatprep.subr.mxu0 0.0
    %998 = vmatpush1.msra.mxu0 0.0
    %999 = vmatprep.subr.mxu0 0.0
    %1000 = vmatpush1.msra.mxu0 0.0
    %1001 = vmatprep.subr.mxu0 0.0
    %1002 = vmatpush1.msra.mxu0 0.0
    %1003 = vmatprep.subr.mxu0 0.0
    %1004 = vmatpush1.msra.mxu0 0.0
    %1005 = vmatprep.subr.mxu0 0.0
    %1006 = vmatpush1.msra.mxu0 0.0
    %1007 = vmatprep.subr.mxu0 0.0
    %1008 = vmatpush1.msra.mxu0 0.0
    %1009 = vmatprep.subr.mxu0 0.0
    %1010 = vmatpush1.msra.mxu0 0.0
    %1011 = vmatprep.subr.mxu0 0.0
    %1012 = vmatpush1.msra.mxu0 0.0
    %1013 = vmatprep.subr.mxu0 0.0
    %1014 = vmatpush1.msra.mxu0 0.0
    %1015 = vmatprep.mubr.f32.mxu0 0.0
    %1016 = vmatmul.mubr.f32.gmra.mrb[0].mxu0 %v830
    %v1017 = vpop.f32.mrb[0].mxu0
    %v1018 = vadd.f32 0.0, %v1017
    %v1019 = vpop.f32.mrb[0].mxu0
    %1020 = vdwg.mxu0
    %v1021 = vadd.f32 %v261, %v947
    %v1022 = vxor.u32 %v1021, 2147483648
    %v1023 = vmul.f32 %v1022, 1.442695
    %v1024 = vpow.pop %v1023
    %v1025 = vadd.f32 %v1024, 1.0
    %v1026 = vrcp.pop %v1025
    %v1027 = vmul.f32 1.0, %v1026
    %v1028 = vadd.f32 %v263, %v949
    %v1029 = vxor.u32 %v1028, 2147483648
    %v1030 = vmul.f32 %v1029, 1.442695
    %v1031 = vpow.pop %v1030
    %v1032 = vadd.f32 %v1031, 1.0
    %v1033 = vrcp.pop %v1032
    %v1034 = vmul.f32 1.0, %v1033
    %v1035 = vadd.f32 %v1018, %v405
    %v1036 = vmul.f32 %v1027, %v1035
    %v1037 = vadd.f32 %v372, %v1036
    %v1038 = vtanh.pop %v1037
    %v1039 = vsub.f32 1.0, %v1034
    %v1040 = vmul.f32 %v1039, %v1038
    %v1041 = vmul.f32 %v1034, %v830
    %v1042 = vadd.f32 %v1040, %v1041
    %1043 = vst [vmem:[#allocation3 + $0x10] sm:$0xff] %v1042
    %v1044 = vld [vmem:[#allocation6] sm:$0xff]
    %v1045 = vld [vmem:[#allocation6 + $0x8] sm:$0xff]
    %v1046 = vld [vmem:[#allocation6 + $0x10] sm:$0xff]
    %v1047 = vld [vmem:[#allocation6 + $0x18] sm:$0xff]
    %v1048 = vld [vmem:[#allocation6 + $0x20] sm:$0xff]
    %v1049 = vld [vmem:[#allocation6 + $0x28] sm:$0xff]
    %v1050 = vld [vmem:[#allocation6 + $0x30] sm:$0xff]
    %v1051 = vld [vmem:[#allocation6 + $0x38] sm:$0xff]
    %v1052 = vld [vmem:[#allocation6 + $0x40] sm:$0xff]
    %v1053 = vld [vmem:[#allocation6 + $0x48] sm:$0xff]
    %v1054 = vld [vmem:[#allocation6 + $0x50] sm:$0xff]
    %v1055 = vld [vmem:[#allocation6 + $0x58] sm:$0xff]
    %v1056 = vld [vmem:[#allocation6 + $0x60] sm:$0xff]
    %v1057 = vld [vmem:[#allocation6 + $0x68] sm:$0xff]
    %v1058 = vld [vmem:[#allocation6 + $0x70] sm:$0xff]
    %v1059 = vld [vmem:[#allocation6 + $0x78] sm:$0xff]
    %v1060 = vld [vmem:[#allocation6 + $0x80] sm:$0xff]
    %v1061 = vld [vmem:[#allocation6 + $0x88] sm:$0xff]
    %v1062 = vld [vmem:[#allocation6 + $0x90] sm:$0xff]
    %v1063 = vld [vmem:[#allocation6 + $0x98] sm:$0xff]
    %v1064 = vld [vmem:[#allocation6 + $0xa0] sm:$0xff]
    %v1065 = vld [vmem:[#allocation6 + $0xa8] sm:$0xff]
    %v1066 = vld [vmem:[#allocation6 + $0xb0] sm:$0xff]
    %v1067 = vld [vmem:[#allocation6 + $0xb8] sm:$0xff]
    %v1068 = vld [vmem:[#allocation6 + $0xc0] sm:$0xff]
    %v1069 = vld [vmem:[#allocation6 + $0xc8] sm:$0xff]
    %v1070 = vld [vmem:[#allocation6 + $0xd0] sm:$0xff]
    %v1071 = vld [vmem:[#allocation6 + $0xd8] sm:$0xff]
    %v1072 = vld [vmem:[#allocation6 + $0xe0] sm:$0xff]
    %v1073 = vld [vmem:[#allocation6 + $0xe8] sm:$0xff]
    %v1074 = vld [vmem:[#allocation6 + $0xf0] sm:$0xff]
    %v1075 = vld [vmem:[#allocation6 + $0xf8] sm:$0xff]
    %v1076 = vld [vmem:[#allocation6 + $0x100] sm:$0xff]
    %v1077 = vld [vmem:[#allocation6 + $0x108] sm:$0xff]
    %v1078 = vld [vmem:[#allocation6 + $0x110] sm:$0xff]
    %v1079 = vld [vmem:[#allocation6 + $0x118] sm:$0xff]
    %v1080 = vld [vmem:[#allocation6 + $0x120] sm:$0xff]
    %v1081 = vld [vmem:[#allocation6 + $0x128] sm:$0xff]
    %v1082 = vld [vmem:[#allocation6 + $0x130] sm:$0xff]
    %v1083 = vld [vmem:[#allocation6 + $0x138] sm:$0xff]
    %v1084 = vld [vmem:[#allocation6 + $0x140] sm:$0xff]
    %v1085 = vld [vmem:[#allocation6 + $0x148] sm:$0xff]
    %v1086 = vld [vmem:[#allocation6 + $0x150] sm:$0xff]
    %v1087 = vld [vmem:[#allocation6 + $0x158] sm:$0xff]
    %v1088 = vld [vmem:[#allocation6 + $0x160] sm:$0xff]
    %v1089 = vld [vmem:[#allocation6 + $0x168] sm:$0xff]
    %v1090 = vld [vmem:[#allocation6 + $0x170] sm:$0xff]
    %v1091 = vld [vmem:[#allocation6 + $0x178] sm:$0xff]
    %1092 = vmatprep.subr.mxu0 %v1045
    %1093 = vmatpush1.msra.mxu0 %v1044
    %1094 = vmatprep.subr.mxu0 %v1048
    %1095 = vmatpush1.msra.mxu0 %v1047
    %1096 = vmatprep.subr.mxu0 %v1051
    %1097 = vmatpush1.msra.mxu0 %v1050
    %1098 = vmatprep.subr.mxu0 %v1054
    %1099 = vmatpush1.msra.mxu0 %v1053
    %1100 = vmatprep.subr.mxu0 %v1057
    %1101 = vmatpush1.msra.mxu0 %v1056
    %1102 = vmatprep.subr.mxu0 %v1060
    %1103 = vmatpush1.msra.mxu0 %v1059
    %1104 = vmatprep.subr.mxu0 %v1063
    %1105 = vmatpush1.msra.mxu0 %v1062
    %1106 = vmatprep.subr.mxu0 %v1066
    %1107 = vmatpush1.msra.mxu0 %v1065
    %1108 = vmatprep.subr.mxu0 %v1069
    %1109 = vmatpush1.msra.mxu0 %v1068
    %1110 = vmatprep.subr.mxu0 %v1072
    %1111 = vmatpush1.msra.mxu0 %v1071
    %1112 = vmatprep.subr.mxu0 %v1075
    %1113 = vmatpush1.msra.mxu0 %v1074
    %1114 = vmatprep.subr.mxu0 %v1078
    %1115 = vmatpush1.msra.mxu0 %v1077
    %1116 = vmatprep.subr.mxu0 %v1081
    %1117 = vmatpush1.msra.mxu0 %v1080
    %1118 = vmatprep.subr.mxu0 %v1084
    %1119 = vmatpush1.msra.mxu0 %v1083
    %1120 = vmatprep.subr.mxu0 %v1087
    %1121 = vmatpush1.msra.mxu0 %v1086
    %1122 = vmatprep.subr.mxu0 %v1090
    %1123 = vmatpush1.msra.mxu0 %v1089
    %1124 = vmatprep.subr.mxu0 0.0
    %1125 = vmatpush1.msra.mxu0 0.0
    %1126 = vmatprep.subr.mxu0 0.0
    %1127 = vmatpush1.msra.mxu0 0.0
    %1128 = vmatprep.subr.mxu0 0.0
    %1129 = vmatpush1.msra.mxu0 0.0
    %1130 = vmatprep.subr.mxu0 0.0
    %1131 = vmatpush1.msra.mxu0 0.0
    %1132 = vmatprep.subr.mxu0 0.0
    %1133 = vmatpush1.msra.mxu0 0.0
    %1134 = vmatprep.subr.mxu0 0.0
    %1135 = vmatpush1.msra.mxu0 0.0
    %1136 = vmatprep.subr.mxu0 0.0
    %1137 = vmatpush1.msra.mxu0 0.0
    %1138 = vmatprep.subr.mxu0 0.0
    %1139 = vmatpush1.msra.mxu0 0.0
    %1140 = vmatprep.subr.mxu0 0.0
    %1141 = vmatpush1.msra.mxu0 0.0
    %1142 = vmatprep.subr.mxu0 0.0
    %1143 = vmatpush1.msra.mxu0 0.0
    %1144 = vmatprep.subr.mxu0 0.0
    %1145 = vmatpush1.msra.mxu0 0.0
    %1146 = vmatprep.subr.mxu0 0.0
    %1147 = vmatpush1.msra.mxu0 0.0
    %1148 = vmatprep.subr.mxu0 0.0
    %1149 = vmatpush1.msra.mxu0 0.0
    %1150 = vmatprep.subr.mxu0 0.0
    %1151 = vmatpush1.msra.mxu0 0.0
    %1152 = vmatprep.subr.mxu0 0.0
    %1153 = vmatpush1.msra.mxu0 0.0
    %1154 = vmatprep.subr.mxu0 0.0
    %1155 = vmatpush1.msra.mxu0 0.0
    %1156 = vmatprep.mubr.f32.mxu0 0.0
    %1157 = vmatmul.mubr.f32.gmra.mrb[0].mxu0 %v1042
    %v1158 = vpop.f32.mrb[0].mxu0
    %v1159 = vadd.f32 0.0, %v1158
    %v1160 = vpop.f32.mrb[0].mxu0
    %v1161 = vadd.f32 0.0, %v1160
    %1162 = vdwg.mxu0
    %1163 = vmatprep.subr.mxu0 0.0
    %1164 = vmatpush1.msra.mxu0 %v1046
    %1165 = vmatprep.subr.mxu0 0.0
    %1166 = vmatpush1.msra.mxu0 %v1049
    %1167 = vmatprep.subr.mxu0 0.0
    %1168 = vmatpush1.msra.mxu0 %v1052
    %1169 = vmatprep.subr.mxu0 0.0
    %1170 = vmatpush1.msra.mxu0 %v1055
    %1171 = vmatprep.subr.mxu0 0.0
    %1172 = vmatpush1.msra.mxu0 %v1058
    %1173 = vmatprep.subr.mxu0 0.0
    %1174 = vmatpush1.msra.mxu0 %v1061
    %1175 = vmatprep.subr.mxu0 0.0
    %1176 = vmatpush1.msra.mxu0 %v1064
    %1177 = vmatprep.subr.mxu0 0.0
    %1178 = vmatpush1.msra.mxu0 %v1067
    %1179 = vmatprep.subr.mxu0 0.0
    %1180 = vmatpush1.msra.mxu0 %v1070
    %1181 = vmatprep.subr.mxu0 0.0
    %1182 = vmatpush1.msra.mxu0 %v1073
    %1183 = vmatprep.subr.mxu0 0.0
    %1184 = vmatpush1.msra.mxu0 %v1076
    %1185 = vmatprep.subr.mxu0 0.0
    %1186 = vmatpush1.msra.mxu0 %v1079
    %1187 = vmatprep.subr.mxu0 0.0
    %1188 = vmatpush1.msra.mxu0 %v1082
    %1189 = vmatprep.subr.mxu0 0.0
    %1190 = vmatpush1.msra.mxu0 %v1085
    %1191 = vmatprep.subr.mxu0 0.0
    %1192 = vmatpush1.msra.mxu0 %v1088
    %1193 = vmatprep.subr.mxu0 0.0
    %1194 = vmatpush1.msra.mxu0 %v1091
    %1195 = vmatprep.subr.mxu0 0.0
    %1196 = vmatpush1.msra.mxu0 0.0
    %1197 = vmatprep.subr.mxu0 0.0
    %1198 = vmatpush1.msra.mxu0 0.0
    %1199 = vmatprep.subr.mxu0 0.0
    %1200 = vmatpush1.msra.mxu0 0.0
    %1201 = vmatprep.subr.mxu0 0.0
    %1202 = vmatpush1.msra.mxu0 0.0
    %1203 = vmatprep.subr.mxu0 0.0
    %1204 = vmatpush1.msra.mxu0 0.0
    %1205 = vmatprep.subr.mxu0 0.0
    %1206 = vmatpush1.msra.mxu0 0.0
    %1207 = vmatprep.subr.mxu0 0.0
    %1208 = vmatpush1.msra.mxu0 0.0
    %1209 = vmatprep.subr.mxu0 0.0
    %1210 = vmatpush1.msra.mxu0 0.0
    %1211 = vmatprep.subr.mxu0 0.0
    %1212 = vmatpush1.msra.mxu0 0.0
    %1213 = vmatprep.subr.mxu0 0.0
    %1214 = vmatpush1.msra.mxu0 0.0
    %1215 = vmatprep.subr.mxu0 0.0
    %1216 = vmatpush1.msra.mxu0 0.0
    %1217 = vmatprep.subr.mxu0 0.0
    %1218 = vmatpush1.msra.mxu0 0.0
    %1219 = vmatprep.subr.mxu0 0.0
    %1220 = vmatpush1.msra.mxu0 0.0
    %1221 = vmatprep.subr.mxu0 0.0
    %1222 = vmatpush1.msra.mxu0 0.0
    %1223 = vmatprep.subr.mxu0 0.0
    %1224 = vmatpush1.msra.mxu0 0.0
    %1225 = vmatprep.subr.mxu0 0.0
    %1226 = vmatpush1.msra.mxu0 0.0
    %1227 = vmatprep.mubr.f32.mxu0 0.0
    %1228 = vmatmul.mubr.f32.gmra.mrb[0].mxu0 %v1042
    %v1229 = vpop.f32.mrb[0].mxu0
    %v1230 = vadd.f32 0.0, %v1229
    %v1231 = vpop.f32.mrb[0].mxu0
    %1232 = vdwg.mxu0
    %v1233 = vadd.f32 %v267, %v1159
    %v1234 = vxor.u32 %v1233, 2147483648
    %v1235 = vmul.f32 %v1234, 1.442695
    %v1236 = vpow.pop %v1235
    %v1237 = vadd.f32 %v1236, 1.0
    %v1238 = vrcp.pop %v1237
    %v1239 = vmul.f32 1.0, %v1238
    %v1240 = vadd.f32 %v269, %v1161
    %v1241 = vxor.u32 %v1240, 2147483648
    %v1242 = vmul.f32 %v1241, 1.442695
    %v1243 = vpow.pop %v1242
    %v1244 = vadd.f32 %v1243, 1.0
    %v1245 = vrcp.pop %v1244
    %v1246 = vmul.f32 1.0, %v1245
    %v1247 = vadd.f32 %v1230, %v405
    %v1248 = vmul.f32 %v1239, %v1247
    %v1249 = vadd.f32 %v377, %v1248
    %v1250 = vtanh.pop %v1249
    %v1251 = vsub.f32 1.0, %v1246
    %v1252 = vmul.f32 %v1251, %v1250
    %v1253 = vmul.f32 %v1246, %v1042
    %v1254 = vadd.f32 %v1252, %v1253
    %1255 = vst [vmem:[#allocation3 + $0x18] sm:$0xff] %v1254
    %v1256 = vld [vmem:[#allocation6] sm:$0xff]
    %v1257 = vld [vmem:[#allocation6 + $0x8] sm:$0xff]
    %v1258 = vld [vmem:[#allocation6 + $0x10] sm:$0xff]
    %v1259 = vld [vmem:[#allocation6 + $0x18] sm:$0xff]
    %v1260 = vld [vmem:[#allocation6 + $0x20] sm:$0xff]
    %v1261 = vld [vmem:[#allocation6 + $0x28] sm:$0xff]
    %v1262 = vld [vmem:[#allocation6 + $0x30] sm:$0xff]
    %v1263 = vld [vmem:[#allocation6 + $0x38] sm:$0xff]
    %v1264 = vld [vmem:[#allocation6 + $0x40] sm:$0xff]
    %v1265 = vld [vmem:[#allocation6 + $0x48] sm:$0xff]
    %v1266 = vld [vmem:[#allocation6 + $0x50] sm:$0xff]
    %v1267 = vld [vmem:[#allocation6 + $0x58] sm:$0xff]
    %v1268 = vld [vmem:[#allocation6 + $0x60] sm:$0xff]
    %v1269 = vld [vmem:[#allocation6 + $0x68] sm:$0xff]
    %v1270 = vld [vmem:[#allocation6 + $0x70] sm:$0xff]
    %v1271 = vld [vmem:[#allocation6 + $0x78] sm:$0xff]
    %v1272 = vld [vmem:[#allocation6 + $0x80] sm:$0xff]
    %v1273 = vld [vmem:[#allocation6 + $0x88] sm:$0xff]
    %v1274 = vld [vmem:[#allocation6 + $0x90] sm:$0xff]
    %v1275 = vld [vmem:[#allocation6 + $0x98] sm:$0xff]
    %v1276 = vld [vmem:[#allocation6 + $0xa0] sm:$0xff]
    %v1277 = vld [vmem:[#allocation6 + $0xa8] sm:$0xff]
    %v1278 = vld [vmem:[#allocation6 + $0xb0] sm:$0xff]
    %v1279 = vld [vmem:[#allocation6 + $0xb8] sm:$0xff]
    %v1280 = vld [vmem:[#allocation6 + $0xc0] sm:$0xff]
    %v1281 = vld [vmem:[#allocation6 + $0xc8] sm:$0xff]
    %v1282 = vld [vmem:[#allocation6 + $0xd0] sm:$0xff]
    %v1283 = vld [vmem:[#allocation6 + $0xd8] sm:$0xff]
    %v1284 = vld [vmem:[#allocation6 + $0xe0] sm:$0xff]
    %v1285 = vld [vmem:[#allocation6 + $0xe8] sm:$0xff]
    %v1286 = vld [vmem:[#allocation6 + $0xf0] sm:$0xff]
    %v1287 = vld [vmem:[#allocation6 + $0xf8] sm:$0xff]
    %v1288 = vld [vmem:[#allocation6 + $0x100] sm:$0xff]
    %v1289 = vld [vmem:[#allocation6 + $0x108] sm:$0xff]
    %v1290 = vld [vmem:[#allocation6 + $0x110] sm:$0xff]
    %v1291 = vld [vmem:[#allocation6 + $0x118] sm:$0xff]
    %v1292 = vld [vmem:[#allocation6 + $0x120] sm:$0xff]
    %v1293 = vld [vmem:[#allocation6 + $0x128] sm:$0xff]
    %v1294 = vld [vmem:[#allocation6 + $0x130] sm:$0xff]
    %v1295 = vld [vmem:[#allocation6 + $0x138] sm:$0xff]
    %v1296 = vld [vmem:[#allocation6 + $0x140] sm:$0xff]
    %v1297 = vld [vmem:[#allocation6 + $0x148] sm:$0xff]
    %v1298 = vld [vmem:[#allocation6 + $0x150] sm:$0xff]
    %v1299 = vld [vmem:[#allocation6 + $0x158] sm:$0xff]
    %v1300 = vld [vmem:[#allocation6 + $0x160] sm:$0xff]
    %v1301 = vld [vmem:[#allocation6 + $0x168] sm:$0xff]
    %v1302 = vld [vmem:[#allocation6 + $0x170] sm:$0xff]
    %v1303 = vld [vmem:[#allocation6 + $0x178] sm:$0xff]
    %1304 = vmatprep.subr.mxu0 %v1257
    %1305 = vmatpush1.msra.mxu0 %v1256
    %1306 = vmatprep.subr.mxu0 %v1260
    %1307 = vmatpush1.msra.mxu0 %v1259
    %1308 = vmatprep.subr.mxu0 %v1263
    %1309 = vmatpush1.msra.mxu0 %v1262
    %1310 = vmatprep.subr.mxu0 %v1266
    %1311 = vmatpush1.msra.mxu0 %v1265
    %1312 = vmatprep.subr.mxu0 %v1269
    %1313 = vmatpush1.msra.mxu0 %v1268
    %1314 = vmatprep.subr.mxu0 %v1272
    %1315 = vmatpush1.msra.mxu0 %v1271
    %1316 = vmatprep.subr.mxu0 %v1275
    %1317 = vmatpush1.msra.mxu0 %v1274
    %1318 = vmatprep.subr.mxu0 %v1278
    %1319 = vmatpush1.msra.mxu0 %v1277
    %1320 = vmatprep.subr.mxu0 %v1281
    %1321 = vmatpush1.msra.mxu0 %v1280
    %1322 = vmatprep.subr.mxu0 %v1284
    %1323 = vmatpush1.msra.mxu0 %v1283
    %1324 = vmatprep.subr.mxu0 %v1287
    %1325 = vmatpush1.msra.mxu0 %v1286
    %1326 = vmatprep.subr.mxu0 %v1290
    %1327 = vmatpush1.msra.mxu0 %v1289
    %1328 = vmatprep.subr.mxu0 %v1293
    %1329 = vmatpush1.msra.mxu0 %v1292
    %1330 = vmatprep.subr.mxu0 %v1296
    %1331 = vmatpush1.msra.mxu0 %v1295
    %1332 = vmatprep.subr.mxu0 %v1299
    %1333 = vmatpush1.msra.mxu0 %v1298
    %1334 = vmatprep.subr.mxu0 %v1302
    %1335 = vmatpush1.msra.mxu0 %v1301
    %1336 = vmatprep.subr.mxu0 0.0
    %1337 = vmatpush1.msra.mxu0 0.0
    %1338 = vmatprep.subr.mxu0 0.0
    %1339 = vmatpush1.msra.mxu0 0.0
    %1340 = vmatprep.subr.mxu0 0.0
    %1341 = vmatpush1.msra.mxu0 0.0
    %1342 = vmatprep.subr.mxu0 0.0
    %1343 = vmatpush1.msra.mxu0 0.0
    %1344 = vmatprep.subr.mxu0 0.0
    %1345 = vmatpush1.msra.mxu0 0.0
    %1346 = vmatprep.subr.mxu0 0.0
    %1347 = vmatpush1.msra.mxu0 0.0
    %1348 = vmatprep.subr.mxu0 0.0
    %1349 = vmatpush1.msra.mxu0 0.0
    %1350 = vmatprep.subr.mxu0 0.0
    %1351 = vmatpush1.msra.mxu0 0.0
    %1352 = vmatprep.subr.mxu0 0.0
    %1353 = vmatpush1.msra.mxu0 0.0
    %1354 = vmatprep.subr.mxu0 0.0
    %1355 = vmatpush1.msra.mxu0 0.0
    %1356 = vmatprep.subr.mxu0 0.0
    %1357 = vmatpush1.msra.mxu0 0.0
    %1358 = vmatprep.subr.mxu0 0.0
    %1359 = vmatpush1.msra.mxu0 0.0
    %1360 = vmatprep.subr.mxu0 0.0
    %1361 = vmatpush1.msra.mxu0 0.0
    %1362 = vmatprep.subr.mxu0 0.0
    %1363 = vmatpush1.msra.mxu0 0.0
    %1364 = vmatprep.subr.mxu0 0.0
    %1365 = vmatpush1.msra.mxu0 0.0
    %1366 = vmatprep.subr.mxu0 0.0
    %1367 = vmatpush1.msra.mxu0 0.0
    %1368 = vmatprep.mubr.f32.mxu0 0.0
    %1369 = vmatmul.mubr.f32.gmra.mrb[0].mxu0 %v1254
    %v1370 = vpop.f32.mrb[0].mxu0
    %v1371 = vadd.f32 0.0, %v1370
    %v1372 = vpop.f32.mrb[0].mxu0
    %v1373 = vadd.f32 0.0, %v1372
    %1374 = vdwg.mxu0
    %1375 = vmatprep.subr.mxu0 0.0
    %1376 = vmatpush1.msra.mxu0 %v1258
    %1377 = vmatprep.subr.mxu0 0.0
    %1378 = vmatpush1.msra.mxu0 %v1261
    %1379 = vmatprep.subr.mxu0 0.0
    %1380 = vmatpush1.msra.mxu0 %v1264
    %1381 = vmatprep.subr.mxu0 0.0
    %1382 = vmatpush1.msra.mxu0 %v1267
    %1383 = vmatprep.subr.mxu0 0.0
    %1384 = vmatpush1.msra.mxu0 %v1270
    %1385 = vmatprep.subr.mxu0 0.0
    %1386 = vmatpush1.msra.mxu0 %v1273
    %1387 = vmatprep.subr.mxu0 0.0
    %1388 = vmatpush1.msra.mxu0 %v1276
    %1389 = vmatprep.subr.mxu0 0.0
    %1390 = vmatpush1.msra.mxu0 %v1279
    %1391 = vmatprep.subr.mxu0 0.0
    %1392 = vmatpush1.msra.mxu0 %v1282
    %1393 = vmatprep.subr.mxu0 0.0
    %1394 = vmatpush1.msra.mxu0 %v1285
    %1395 = vmatprep.subr.mxu0 0.0
    %1396 = vmatpush1.msra.mxu0 %v1288
    %1397 = vmatprep.subr.mxu0 0.0
    %1398 = vmatpush1.msra.mxu0 %v1291
    %1399 = vmatprep.subr.mxu0 0.0
    %1400 = vmatpush1.msra.mxu0 %v1294
    %1401 = vmatprep.subr.mxu0 0.0
    %1402 = vmatpush1.msra.mxu0 %v1297
    %1403 = vmatprep.subr.mxu0 0.0
    %1404 = vmatpush1.msra.mxu0 %v1300
    %1405 = vmatprep.subr.mxu0 0.0
    %1406 = vmatpush1.msra.mxu0 %v1303
    %1407 = vmatprep.subr.mxu0 0.0
    %1408 = vmatpush1.msra.mxu0 0.0
    %1409 = vmatprep.subr.mxu0 0.0
    %1410 = vmatpush1.msra.mxu0 0.0
    %1411 = vmatprep.subr.mxu0 0.0
    %1412 = vmatpush1.msra.mxu0 0.0
    %1413 = vmatprep.subr.mxu0 0.0
    %1414 = vmatpush1.msra.mxu0 0.0
    %1415 = vmatprep.subr.mxu0 0.0
    %1416 = vmatpush1.msra.mxu0 0.0
    %1417 = vmatprep.subr.mxu0 0.0
    %1418 = vmatpush1.msra.mxu0 0.0
    %1419 = vmatprep.subr.mxu0 0.0
    %1420 = vmatpush1.msra.mxu0 0.0
    %1421 = vmatprep.subr.mxu0 0.0
    %1422 = vmatpush1.msra.mxu0 0.0
    %1423 = vmatprep.subr.mxu0 0.0
    %1424 = vmatpush1.msra.mxu0 0.0
    %1425 = vmatprep.subr.mxu0 0.0
    %1426 = vmatpush1.msra.mxu0 0.0
    %1427 = vmatprep.subr.mxu0 0.0
    %1428 = vmatpush1.msra.mxu0 0.0
    %1429 = vmatprep.subr.mxu0 0.0
    %1430 = vmatpush1.msra.mxu0 0.0
    %1431 = vmatprep.subr.mxu0 0.0
    %1432 = vmatpush1.msra.mxu0 0.0
    %1433 = vmatprep.subr.mxu0 0.0
    %1434 = vmatpush1.msra.mxu0 0.0
    %1435 = vmatprep.subr.mxu0 0.0
    %1436 = vmatpush1.msra.mxu0 0.0
    %1437 = vmatprep.subr.mxu0 0.0
    %1438 = vmatpush1.msra.mxu0 0.0
    %1439 = vmatprep.mubr.f32.mxu0 0.0
    %1440 = vmatmul.mubr.f32.gmra.mrb[0].mxu0 %v1254
    %v1441 = vpop.f32.mrb[0].mxu0
    %v1442 = vadd.f32 0.0, %v1441
    %v1443 = vpop.f32.mrb[0].mxu0
    %1444 = vdwg.mxu0
    %v1445 = vadd.f32 %v273, %v1371
    %v1446 = vxor.u32 %v1445, 2147483648
    %v1447 = vmul.f32 %v1446, 1.442695
    %v1448 = vpow.pop %v1447
    %v1449 = vadd.f32 %v1448, 1.0
    %v1450 = vrcp.pop %v1449
    %v1451 = vmul.f32 1.0, %v1450
    %v1452 = vadd.f32 %v275, %v1373
    %v1453 = vxor.u32 %v1452, 2147483648
    %v1454 = vmul.f32 %v1453, 1.442695
    %v1455 = vpow.pop %v1454
    %v1456 = vadd.f32 %v1455, 1.0
    %v1457 = vrcp.pop %v1456
    %v1458 = vmul.f32 1.0, %v1457
    %v1459 = vadd.f32 %v1442, %v405
    %v1460 = vmul.f32 %v1451, %v1459
    %v1461 = vadd.f32 %v382, %v1460
    %v1462 = vtanh.pop %v1461
    %v1463 = vsub.f32 1.0, %v1458
    %v1464 = vmul.f32 %v1463, %v1462
    %v1465 = vmul.f32 %v1458, %v1254
    %v1466 = vadd.f32 %v1464, %v1465
    %1467 = vst [vmem:[#allocation3 + $0x20] sm:$0xff] %v1466
    %v1468 = vld [vmem:[#allocation6] sm:$0xff]
    %v1469 = vld [vmem:[#allocation6 + $0x8] sm:$0xff]
    %v1470 = vld [vmem:[#allocation6 + $0x10] sm:$0xff]
    %v1471 = vld [vmem:[#allocation6 + $0x18] sm:$0xff]
    %v1472 = vld [vmem:[#allocation6 + $0x20] sm:$0xff]
    %v1473 = vld [vmem:[#allocation6 + $0x28] sm:$0xff]
    %v1474 = vld [vmem:[#allocation6 + $0x30] sm:$0xff]
    %v1475 = vld [vmem:[#allocation6 + $0x38] sm:$0xff]
    %v1476 = vld [vmem:[#allocation6 + $0x40] sm:$0xff]
    %v1477 = vld [vmem:[#allocation6 + $0x48] sm:$0xff]
    %v1478 = vld [vmem:[#allocation6 + $0x50] sm:$0xff]
    %v1479 = vld [vmem:[#allocation6 + $0x58] sm:$0xff]
    %v1480 = vld [vmem:[#allocation6 + $0x60] sm:$0xff]
    %v1481 = vld [vmem:[#allocation6 + $0x68] sm:$0xff]
    %v1482 = vld [vmem:[#allocation6 + $0x70] sm:$0xff]
    %v1483 = vld [vmem:[#allocation6 + $0x78] sm:$0xff]
    %v1484 = vld [vmem:[#allocation6 + $0x80] sm:$0xff]
    %v1485 = vld [vmem:[#allocation6 + $0x88] sm:$0xff]
    %v1486 = vld [vmem:[#allocation6 + $0x90] sm:$0xff]
    %v1487 = vld [vmem:[#allocation6 + $0x98] sm:$0xff]
    %v1488 = vld [vmem:[#allocation6 + $0xa0] sm:$0xff]
    %v1489 = vld [vmem:[#allocation6 + $0xa8] sm:$0xff]
    %v1490 = vld [vmem:[#allocation6 + $0xb0] sm:$0xff]
    %v1491 = vld [vmem:[#allocation6 + $0xb8] sm:$0xff]
    %v1492 = vld [vmem:[#allocation6 + $0xc0] sm:$0xff]
    %v1493 = vld [vmem:[#allocation6 + $0xc8] sm:$0xff]
    %v1494 = vld [vmem:[#allocation6 + $0xd0] sm:$0xff]
    %v1495 = vld [vmem:[#allocation6 + $0xd8] sm:$0xff]
    %v1496 = vld [vmem:[#allocation6 + $0xe0] sm:$0xff]
    %v1497 = vld [vmem:[#allocation6 + $0xe8] sm:$0xff]
    %v1498 = vld [vmem:[#allocation6 + $0xf0] sm:$0xff]
    %v1499 = vld [vmem:[#allocation6 + $0xf8] sm:$0xff]
    %v1500 = vld [vmem:[#allocation6 + $0x100] sm:$0xff]
    %v1501 = vld [vmem:[#allocation6 + $0x108] sm:$0xff]
    %v1502 = vld [vmem:[#allocation6 + $0x110] sm:$0xff]
    %v1503 = vld [vmem:[#allocation6 + $0x118] sm:$0xff]
    %v1504 = vld [vmem:[#allocation6 + $0x120] sm:$0xff]
    %v1505 = vld [vmem:[#allocation6 + $0x128] sm:$0xff]
    %v1506 = vld [vmem:[#allocation6 + $0x130] sm:$0xff]
    %v1507 = vld [vmem:[#allocation6 + $0x138] sm:$0xff]
    %v1508 = vld [vmem:[#allocation6 + $0x140] sm:$0xff]
    %v1509 = vld [vmem:[#allocation6 + $0x148] sm:$0xff]
    %v1510 = vld [vmem:[#allocation6 + $0x150] sm:$0xff]
    %v1511 = vld [vmem:[#allocation6 + $0x158] sm:$0xff]
    %v1512 = vld [vmem:[#allocation6 + $0x160] sm:$0xff]
    %v1513 = vld [vmem:[#allocation6 + $0x168] sm:$0xff]
    %v1514 = vld [vmem:[#allocation6 + $0x170] sm:$0xff]
    %v1515 = vld [vmem:[#allocation6 + $0x178] sm:$0xff]
    %1516 = vmatprep.subr.mxu0 %v1469
    %1517 = vmatpush1.msra.mxu0 %v1468
    %1518 = vmatprep.subr.mxu0 %v1472
    %1519 = vmatpush1.msra.mxu0 %v1471
    %1520 = vmatprep.subr.mxu0 %v1475
    %1521 = vmatpush1.msra.mxu0 %v1474
    %1522 = vmatprep.subr.mxu0 %v1478
    %1523 = vmatpush1.msra.mxu0 %v1477
    %1524 = vmatprep.subr.mxu0 %v1481
    %1525 = vmatpush1.msra.mxu0 %v1480
    %1526 = vmatprep.subr.mxu0 %v1484
    %1527 = vmatpush1.msra.mxu0 %v1483
    %1528 = vmatprep.subr.mxu0 %v1487
    %1529 = vmatpush1.msra.mxu0 %v1486
    %1530 = vmatprep.subr.mxu0 %v1490
    %1531 = vmatpush1.msra.mxu0 %v1489
    %1532 = vmatprep.subr.mxu0 %v1493
    %1533 = vmatpush1.msra.mxu0 %v1492
    %1534 = vmatprep.subr.mxu0 %v1496
    %1535 = vmatpush1.msra.mxu0 %v1495
    %1536 = vmatprep.subr.mxu0 %v1499
    %1537 = vmatpush1.msra.mxu0 %v1498
    %1538 = vmatprep.subr.mxu0 %v1502
    %1539 = vmatpush1.msra.mxu0 %v1501
    %1540 = vmatprep.subr.mxu0 %v1505
    %1541 = vmatpush1.msra.mxu0 %v1504
    %1542 = vmatprep.subr.mxu0 %v1508
    %1543 = vmatpush1.msra.mxu0 %v1507
    %1544 = vmatprep.subr.mxu0 %v1511
    %1545 = vmatpush1.msra.mxu0 %v1510
    %1546 = vmatprep.subr.mxu0 %v1514
    %1547 = vmatpush1.msra.mxu0 %v1513
    %1548 = vmatprep.subr.mxu0 0.0
    %1549 = vmatpush1.msra.mxu0 0.0
    %1550 = vmatprep.subr.mxu0 0.0
    %1551 = vmatpush1.msra.mxu0 0.0
    %1552 = vmatprep.subr.mxu0 0.0
    %1553 = vmatpush1.msra.mxu0 0.0
    %1554 = vmatprep.subr.mxu0 0.0
    %1555 = vmatpush1.msra.mxu0 0.0
    %1556 = vmatprep.subr.mxu0 0.0
    %1557 = vmatpush1.msra.mxu0 0.0
    %1558 = vmatprep.subr.mxu0 0.0
    %1559 = vmatpush1.msra.mxu0 0.0
    %1560 = vmatprep.subr.mxu0 0.0
    %1561 = vmatpush1.msra.mxu0 0.0
    %1562 = vmatprep.subr.mxu0 0.0
    %1563 = vmatpush1.msra.mxu0 0.0
    %1564 = vmatprep.subr.mxu0 0.0
    %1565 = vmatpush1.msra.mxu0 0.0
    %1566 = vmatprep.subr.mxu0 0.0
    %1567 = vmatpush1.msra.mxu0 0.0
    %1568 = vmatprep.subr.mxu0 0.0
    %1569 = vmatpush1.msra.mxu0 0.0
    %1570 = vmatprep.subr.mxu0 0.0
    %1571 = vmatpush1.msra.mxu0 0.0
    %1572 = vmatprep.subr.mxu0 0.0
    %1573 = vmatpush1.msra.mxu0 0.0
    %1574 = vmatprep.subr.mxu0 0.0
    %1575 = vmatpush1.msra.mxu0 0.0
    %1576 = vmatprep.subr.mxu0 0.0
    %1577 = vmatpush1.msra.mxu0 0.0
    %1578 = vmatprep.subr.mxu0 0.0
    %1579 = vmatpush1.msra.mxu0 0.0
    %1580 = vmatprep.mubr.f32.mxu0 0.0
    %1581 = vmatmul.mubr.f32.gmra.mrb[0].mxu0 %v1466
    %v1582 = vpop.f32.mrb[0].mxu0
    %v1583 = vadd.f32 0.0, %v1582
    %v1584 = vpop.f32.mrb[0].mxu0
    %v1585 = vadd.f32 0.0, %v1584
    %1586 = vdwg.mxu0
    %1587 = vmatprep.subr.mxu0 0.0
    %1588 = vmatpush1.msra.mxu0 %v1470
    %1589 = vmatprep.subr.mxu0 0.0
    %1590 = vmatpush1.msra.mxu0 %v1473
    %1591 = vmatprep.subr.mxu0 0.0
    %1592 = vmatpush1.msra.mxu0 %v1476
    %1593 = vmatprep.subr.mxu0 0.0
    %1594 = vmatpush1.msra.mxu0 %v1479
    %1595 = vmatprep.subr.mxu0 0.0
    %1596 = vmatpush1.msra.mxu0 %v1482
    %1597 = vmatprep.subr.mxu0 0.0
    %1598 = vmatpush1.msra.mxu0 %v1485
    %1599 = vmatprep.subr.mxu0 0.0
    %1600 = vmatpush1.msra.mxu0 %v1488
    %1601 = vmatprep.subr.mxu0 0.0
    %1602 = vmatpush1.msra.mxu0 %v1491
    %1603 = vmatprep.subr.mxu0 0.0
    %1604 = vmatpush1.msra.mxu0 %v1494
    %1605 = vmatprep.subr.mxu0 0.0
    %1606 = vmatpush1.msra.mxu0 %v1497
    %1607 = vmatprep.subr.mxu0 0.0
    %1608 = vmatpush1.msra.mxu0 %v1500
    %1609 = vmatprep.subr.mxu0 0.0
    %1610 = vmatpush1.msra.mxu0 %v1503
    %1611 = vmatprep.subr.mxu0 0.0
    %1612 = vmatpush1.msra.mxu0 %v1506
    %1613 = vmatprep.subr.mxu0 0.0
    %1614 = vmatpush1.msra.mxu0 %v1509
    %1615 = vmatprep.subr.mxu0 0.0
    %1616 = vmatpush1.msra.mxu0 %v1512
    %1617 = vmatprep.subr.mxu0 0.0
    %1618 = vmatpush1.msra.mxu0 %v1515
    %1619 = vmatprep.subr.mxu0 0.0
    %1620 = vmatpush1.msra.mxu0 0.0
    %1621 = vmatprep.subr.mxu0 0.0
    %1622 = vmatpush1.msra.mxu0 0.0
    %1623 = vmatprep.subr.mxu0 0.0
    %1624 = vmatpush1.msra.mxu0 0.0
    %1625 = vmatprep.subr.mxu0 0.0
    %1626 = vmatpush1.msra.mxu0 0.0
    %1627 = vmatprep.subr.mxu0 0.0
    %1628 = vmatpush1.msra.mxu0 0.0
    %1629 = vmatprep.subr.mxu0 0.0
    %1630 = vmatpush1.msra.mxu0 0.0
    %1631 = vmatprep.subr.mxu0 0.0
    %1632 = vmatpush1.msra.mxu0 0.0
    %1633 = vmatprep.subr.mxu0 0.0
    %1634 = vmatpush1.msra.mxu0 0.0
    %1635 = vmatprep.subr.mxu0 0.0
    %1636 = vmatpush1.msra.mxu0 0.0
    %1637 = vmatprep.subr.mxu0 0.0
    %1638 = vmatpush1.msra.mxu0 0.0
    %1639 = vmatprep.subr.mxu0 0.0
    %1640 = vmatpush1.msra.mxu0 0.0
    %1641 = vmatprep.subr.mxu0 0.0
    %1642 = vmatpush1.msra.mxu0 0.0
    %1643 = vmatprep.subr.mxu0 0.0
    %1644 = vmatpush1.msra.mxu0 0.0
    %1645 = vmatprep.subr.mxu0 0.0
    %1646 = vmatpush1.msra.mxu0 0.0
    %1647 = vmatprep.subr.mxu0 0.0
    %1648 = vmatpush1.msra.mxu0 0.0
    %1649 = vmatprep.subr.mxu0 0.0
    %1650 = vmatpush1.msra.mxu0 0.0
    %1651 = vmatprep.mubr.f32.mxu0 0.0
    %1652 = vmatmul.mubr.f32.gmra.mrb[0].mxu0 %v1466
    %v1653 = vpop.f32.mrb[0].mxu0
    %v1654 = vadd.f32 0.0, %v1653
    %v1655 = vpop.f32.mrb[0].mxu0
    %1656 = vdwg.mxu0
    %v1657 = vadd.f32 %v279, %v1583
    %v1658 = vxor.u32 %v1657, 2147483648
    %v1659 = vmul.f32 %v1658, 1.442695
    %v1660 = vpow.pop %v1659
    %v1661 = vadd.f32 %v1660, 1.0
    %v1662 = vrcp.pop %v1661
    %v1663 = vmul.f32 1.0, %v1662
    %v1664 = vadd.f32 %v281, %v1585
    %v1665 = vxor.u32 %v1664, 2147483648
    %v1666 = vmul.f32 %v1665, 1.442695
    %v1667 = vpow.pop %v1666
    %v1668 = vadd.f32 %v1667, 1.0
    %v1669 = vrcp.pop %v1668
    %v1670 = vmul.f32 1.0, %v1669
    %v1671 = vadd.f32 %v1654, %v405
    %v1672 = vmul.f32 %v1663, %v1671
    %v1673 = vadd.f32 %v387, %v1672
    %v1674 = vtanh.pop %v1673
    %v1675 = vsub.f32 1.0, %v1670
    %v1676 = vmul.f32 %v1675, %v1674
    %v1677 = vmul.f32 %v1670, %v1466
    %v1678 = vadd.f32 %v1676, %v1677
    %1679 = vst [vmem:[#allocation3 + $0x28] sm:$0xff] %v1678
    %v1680 = vld [vmem:[#allocation6] sm:$0xff]
    %v1681 = vld [vmem:[#allocation6 + $0x8] sm:$0xff]
    %v1682 = vld [vmem:[#allocation6 + $0x10] sm:$0xff]
    %v1683 = vld [vmem:[#allocation6 + $0x18] sm:$0xff]
    %v1684 = vld [vmem:[#allocation6 + $0x20] sm:$0xff]
    %v1685 = vld [vmem:[#allocation6 + $0x28] sm:$0xff]
    %v1686 = vld [vmem:[#allocation6 + $0x30] sm:$0xff]
    %v1687 = vld [vmem:[#allocation6 + $0x38] sm:$0xff]
    %v1688 = vld [vmem:[#allocation6 + $0x40] sm:$0xff]
    %v1689 = vld [vmem:[#allocation6 + $0x48] sm:$0xff]
    %v1690 = vld [vmem:[#allocation6 + $0x50] sm:$0xff]
    %v1691 = vld [vmem:[#allocation6 + $0x58] sm:$0xff]
    %v1692 = vld [vmem:[#allocation6 + $0x60] sm:$0xff]
    %v1693 = vld [vmem:[#allocation6 + $0x68] sm:$0xff]
    %v1694 = vld [vmem:[#allocation6 + $0x70] sm:$0xff]
    %v1695 = vld [vmem:[#allocation6 + $0x78] sm:$0xff]
    %v1696 = vld [vmem:[#allocation6 + $0x80] sm:$0xff]
    %v1697 = vld [vmem:[#allocation6 + $0x88] sm:$0xff]
    %v1698 = vld [vmem:[#allocation6 + $0x90] sm:$0xff]
    %v1699 = vld [vmem:[#allocation6 + $0x98] sm:$0xff]
    %v1700 = vld [vmem:[#allocation6 + $0xa0] sm:$0xff]
    %v1701 = vld [vmem:[#allocation6 + $0xa8] sm:$0xff]
    %v1702 = vld [vmem:[#allocation6 + $0xb0] sm:$0xff]
    %v1703 = vld [vmem:[#allocation6 + $0xb8] sm:$0xff]
    %v1704 = vld [vmem:[#allocation6 + $0xc0] sm:$0xff]
    %v1705 = vld [vmem:[#allocation6 + $0xc8] sm:$0xff]
    %v1706 = vld [vmem:[#allocation6 + $0xd0] sm:$0xff]
    %v1707 = vld [vmem:[#allocation6 + $0xd8] sm:$0xff]
    %v1708 = vld [vmem:[#allocation6 + $0xe0] sm:$0xff]
    %v1709 = vld [vmem:[#allocation6 + $0xe8] sm:$0xff]
    %v1710 = vld [vmem:[#allocation6 + $0xf0] sm:$0xff]
    %v1711 = vld [vmem:[#allocation6 + $0xf8] sm:$0xff]
    %v1712 = vld [vmem:[#allocation6 + $0x100] sm:$0xff]
    %v1713 = vld [vmem:[#allocation6 + $0x108] sm:$0xff]
    %v1714 = vld [vmem:[#allocation6 + $0x110] sm:$0xff]
    %v1715 = vld [vmem:[#allocation6 + $0x118] sm:$0xff]
    %v1716 = vld [vmem:[#allocation6 + $0x120] sm:$0xff]
    %v1717 = vld [vmem:[#allocation6 + $0x128] sm:$0xff]
    %v1718 = vld [vmem:[#allocation6 + $0x130] sm:$0xff]
    %v1719 = vld [vmem:[#allocation6 + $0x138] sm:$0xff]
    %v1720 = vld [vmem:[#allocation6 + $0x140] sm:$0xff]
    %v1721 = vld [vmem:[#allocation6 + $0x148] sm:$0xff]
    %v1722 = vld [vmem:[#allocation6 + $0x150] sm:$0xff]
    %v1723 = vld [vmem:[#allocation6 + $0x158] sm:$0xff]
    %v1724 = vld [vmem:[#allocation6 + $0x160] sm:$0xff]
    %v1725 = vld [vmem:[#allocation6 + $0x168] sm:$0xff]
    %v1726 = vld [vmem:[#allocation6 + $0x170] sm:$0xff]
    %v1727 = vld [vmem:[#allocation6 + $0x178] sm:$0xff]
    %1728 = vmatprep.subr.mxu0 %v1681
    %1729 = vmatpush1.msra.mxu0 %v1680
    %1730 = vmatprep.subr.mxu0 %v1684
    %1731 = vmatpush1.msra.mxu0 %v1683
    %1732 = vmatprep.subr.mxu0 %v1687
    %1733 = vmatpush1.msra.mxu0 %v1686
    %1734 = vmatprep.subr.mxu0 %v1690
    %1735 = vmatpush1.msra.mxu0 %v1689
    %1736 = vmatprep.subr.mxu0 %v1693
    %1737 = vmatpush1.msra.mxu0 %v1692
    %1738 = vmatprep.subr.mxu0 %v1696
    %1739 = vmatpush1.msra.mxu0 %v1695
    %1740 = vmatprep.subr.mxu0 %v1699
    %1741 = vmatpush1.msra.mxu0 %v1698
    %1742 = vmatprep.subr.mxu0 %v1702
    %1743 = vmatpush1.msra.mxu0 %v1701
    %1744 = vmatprep.subr.mxu0 %v1705
    %1745 = vmatpush1.msra.mxu0 %v1704
    %1746 = vmatprep.subr.mxu0 %v1708
    %1747 = vmatpush1.msra.mxu0 %v1707
    %1748 = vmatprep.subr.mxu0 %v1711
    %1749 = vmatpush1.msra.mxu0 %v1710
    %1750 = vmatprep.subr.mxu0 %v1714
    %1751 = vmatpush1.msra.mxu0 %v1713
    %1752 = vmatprep.subr.mxu0 %v1717
    %1753 = vmatpush1.msra.mxu0 %v1716
    %1754 = vmatprep.subr.mxu0 %v1720
    %1755 = vmatpush1.msra.mxu0 %v1719
    %1756 = vmatprep.subr.mxu0 %v1723
    %1757 = vmatpush1.msra.mxu0 %v1722
    %1758 = vmatprep.subr.mxu0 %v1726
    %1759 = vmatpush1.msra.mxu0 %v1725
    %1760 = vmatprep.subr.mxu0 0.0
    %1761 = vmatpush1.msra.mxu0 0.0
    %1762 = vmatprep.subr.mxu0 0.0
    %1763 = vmatpush1.msra.mxu0 0.0
    %1764 = vmatprep.subr.mxu0 0.0
    %1765 = vmatpush1.msra.mxu0 0.0
    %1766 = vmatprep.subr.mxu0 0.0
    %1767 = vmatpush1.msra.mxu0 0.0
    %1768 = vmatprep.subr.mxu0 0.0
    %1769 = vmatpush1.msra.mxu0 0.0
    %1770 = vmatprep.subr.mxu0 0.0
    %1771 = vmatpush1.msra.mxu0 0.0
    %1772 = vmatprep.subr.mxu0 0.0
    %1773 = vmatpush1.msra.mxu0 0.0
    %1774 = vmatprep.subr.mxu0 0.0
    %1775 = vmatpush1.msra.mxu0 0.0
    %1776 = vmatprep.subr.mxu0 0.0
    %1777 = vmatpush1.msra.mxu0 0.0
    %1778 = vmatprep.subr.mxu0 0.0
    %1779 = vmatpush1.msra.mxu0 0.0
    %1780 = vmatprep.subr.mxu0 0.0
    %1781 = vmatpush1.msra.mxu0 0.0
    %1782 = vmatprep.subr.mxu0 0.0
    %1783 = vmatpush1.msra.mxu0 0.0
    %1784 = vmatprep.subr.mxu0 0.0
    %1785 = vmatpush1.msra.mxu0 0.0
    %1786 = vmatprep.subr.mxu0 0.0
    %1787 = vmatpush1.msra.mxu0 0.0
    %1788 = vmatprep.subr.mxu0 0.0
    %1789 = vmatpush1.msra.mxu0 0.0
    %1790 = vmatprep.subr.mxu0 0.0
    %1791 = vmatpush1.msra.mxu0 0.0
    %1792 = vmatprep.mubr.f32.mxu0 0.0
    %1793 = vmatmul.mubr.f32.gmra.mrb[0].mxu0 %v1678
    %v1794 = vpop.f32.mrb[0].mxu0
    %v1795 = vadd.f32 0.0, %v1794
    %v1796 = vpop.f32.mrb[0].mxu0
    %v1797 = vadd.f32 0.0, %v1796
    %1798 = vdwg.mxu0
    %1799 = vmatprep.subr.mxu0 0.0
    %1800 = vmatpush1.msra.mxu0 %v1682
    %1801 = vmatprep.subr.mxu0 0.0
    %1802 = vmatpush1.msra.mxu0 %v1685
    %1803 = vmatprep.subr.mxu0 0.0
    %1804 = vmatpush1.msra.mxu0 %v1688
    %1805 = vmatprep.subr.mxu0 0.0
    %1806 = vmatpush1.msra.mxu0 %v1691
    %1807 = vmatprep.subr.mxu0 0.0
    %1808 = vmatpush1.msra.mxu0 %v1694
    %1809 = vmatprep.subr.mxu0 0.0
    %1810 = vmatpush1.msra.mxu0 %v1697
    %1811 = vmatprep.subr.mxu0 0.0
    %1812 = vmatpush1.msra.mxu0 %v1700
    %1813 = vmatprep.subr.mxu0 0.0
    %1814 = vmatpush1.msra.mxu0 %v1703
    %1815 = vmatprep.subr.mxu0 0.0
    %1816 = vmatpush1.msra.mxu0 %v1706
    %1817 = vmatprep.subr.mxu0 0.0
    %1818 = vmatpush1.msra.mxu0 %v1709
    %1819 = vmatprep.subr.mxu0 0.0
    %1820 = vmatpush1.msra.mxu0 %v1712
    %1821 = vmatprep.subr.mxu0 0.0
    %1822 = vmatpush1.msra.mxu0 %v1715
    %1823 = vmatprep.subr.mxu0 0.0
    %1824 = vmatpush1.msra.mxu0 %v1718
    %1825 = vmatprep.subr.mxu0 0.0
    %1826 = vmatpush1.msra.mxu0 %v1721
    %1827 = vmatprep.subr.mxu0 0.0
    %1828 = vmatpush1.msra.mxu0 %v1724
    %1829 = vmatprep.subr.mxu0 0.0
    %1830 = vmatpush1.msra.mxu0 %v1727
    %1831 = vmatprep.subr.mxu0 0.0
    %1832 = vmatpush1.msra.mxu0 0.0
    %1833 = vmatprep.subr.mxu0 0.0
    %1834 = vmatpush1.msra.mxu0 0.0
    %1835 = vmatprep.subr.mxu0 0.0
    %1836 = vmatpush1.msra.mxu0 0.0
    %1837 = vmatprep.subr.mxu0 0.0
    %1838 = vmatpush1.msra.mxu0 0.0
    %1839 = vmatprep.subr.mxu0 0.0
    %1840 = vmatpush1.msra.mxu0 0.0
    %1841 = vmatprep.subr.mxu0 0.0
    %1842 = vmatpush1.msra.mxu0 0.0
    %1843 = vmatprep.subr.mxu0 0.0
    %1844 = vmatpush1.msra.mxu0 0.0
    %1845 = vmatprep.subr.mxu0 0.0
    %1846 = vmatpush1.msra.mxu0 0.0
    %1847 = vmatprep.subr.mxu0 0.0
    %1848 = vmatpush1.msra.mxu0 0.0
    %1849 = vmatprep.subr.mxu0 0.0
    %1850 = vmatpush1.msra.mxu0 0.0
    %1851 = vmatprep.subr.mxu0 0.0
    %1852 = vmatpush1.msra.mxu0 0.0
    %1853 = vmatprep.subr.mxu0 0.0
    %1854 = vmatpush1.msra.mxu0 0.0
    %1855 = vmatprep.subr.mxu0 0.0
    %1856 = vmatpush1.msra.mxu0 0.0
    %1857 = vmatprep.subr.mxu0 0.0
    %1858 = vmatpush1.msra.mxu0 0.0
    %1859 = vmatprep.subr.mxu0 0.0
    %1860 = vmatpush1.msra.mxu0 0.0
    %1861 = vmatprep.subr.mxu0 0.0
    %1862 = vmatpush1.msra.mxu0 0.0
    %1863 = vmatprep.mubr.f32.mxu0 0.0
    %1864 = vmatmul.mubr.f32.gmra.mrb[0].mxu0 %v1678
    %v1865 = vpop.f32.mrb[0].mxu0
    %v1866 = vadd.f32 0.0, %v1865
    %v1867 = vpop.f32.mrb[0].mxu0
    %1868 = vdwg.mxu0
    %v1869 = vadd.f32 %v285, %v1795
    %v1870 = vxor.u32 %v1869, 2147483648
    %v1871 = vmul.f32 %v1870, 1.442695
    %v1872 = vpow.pop %v1871
    %v1873 = vadd.f32 %v1872, 1.0
    %v1874 = vrcp.pop %v1873
    %v1875 = vmul.f32 1.0, %v1874
    %v1876 = vadd.f32 %v287, %v1797
    %v1877 = vxor.u32 %v1876, 2147483648
    %v1878 = vmul.f32 %v1877, 1.442695
    %v1879 = vpow.pop %v1878
    %v1880 = vadd.f32 %v1879, 1.0
    %v1881 = vrcp.pop %v1880
    %v1882 = vmul.f32 1.0, %v1881
    %v1883 = vadd.f32 %v1866, %v405
    %v1884 = vmul.f32 %v1875, %v1883
    %v1885 = vadd.f32 %v392, %v1884
    %v1886 = vtanh.pop %v1885
    %v1887 = vsub.f32 1.0, %v1882
    %v1888 = vmul.f32 %v1887, %v1886
    %v1889 = vmul.f32 %v1882, %v1678
    %v1890 = vadd.f32 %v1888, %v1889
    %1891 = vst [vmem:[#allocation3 + $0x30] sm:$0xff] %v1890
    %v1892 = vld [vmem:[#allocation6] sm:$0xff]
    %v1893 = vld [vmem:[#allocation6 + $0x8] sm:$0xff]
    %v1894 = vld [vmem:[#allocation6 + $0x10] sm:$0xff]
    %v1895 = vld [vmem:[#allocation6 + $0x18] sm:$0xff]
    %v1896 = vld [vmem:[#allocation6 + $0x20] sm:$0xff]
    %v1897 = vld [vmem:[#allocation6 + $0x28] sm:$0xff]
    %v1898 = vld [vmem:[#allocation6 + $0x30] sm:$0xff]
    %v1899 = vld [vmem:[#allocation6 + $0x38] sm:$0xff]
    %v1900 = vld [vmem:[#allocation6 + $0x40] sm:$0xff]
    %v1901 = vld [vmem:[#allocation6 + $0x48] sm:$0xff]
    %v1902 = vld [vmem:[#allocation6 + $0x50] sm:$0xff]
    %v1903 = vld [vmem:[#allocation6 + $0x58] sm:$0xff]
    %v1904 = vld [vmem:[#allocation6 + $0x60] sm:$0xff]
    %v1905 = vld [vmem:[#allocation6 + $0x68] sm:$0xff]
    %v1906 = vld [vmem:[#allocation6 + $0x70] sm:$0xff]
    %v1907 = vld [vmem:[#allocation6 + $0x78] sm:$0xff]
    %v1908 = vld [vmem:[#allocation6 + $0x80] sm:$0xff]
    %v1909 = vld [vmem:[#allocation6 + $0x88] sm:$0xff]
    %v1910 = vld [vmem:[#allocation6 + $0x90] sm:$0xff]
    %v1911 = vld [vmem:[#allocation6 + $0x98] sm:$0xff]
    %v1912 = vld [vmem:[#allocation6 + $0xa0] sm:$0xff]
    %v1913 = vld [vmem:[#allocation6 + $0xa8] sm:$0xff]
    %v1914 = vld [vmem:[#allocation6 + $0xb0] sm:$0xff]
    %v1915 = vld [vmem:[#allocation6 + $0xb8] sm:$0xff]
    %v1916 = vld [vmem:[#allocation6 + $0xc0] sm:$0xff]
    %v1917 = vld [vmem:[#allocation6 + $0xc8] sm:$0xff]
    %v1918 = vld [vmem:[#allocation6 + $0xd0] sm:$0xff]
    %v1919 = vld [vmem:[#allocation6 + $0xd8] sm:$0xff]
    %v1920 = vld [vmem:[#allocation6 + $0xe0] sm:$0xff]
    %v1921 = vld [vmem:[#allocation6 + $0xe8] sm:$0xff]
    %v1922 = vld [vmem:[#allocation6 + $0xf0] sm:$0xff]
    %v1923 = vld [vmem:[#allocation6 + $0xf8] sm:$0xff]
    %v1924 = vld [vmem:[#allocation6 + $0x100] sm:$0xff]
    %v1925 = vld [vmem:[#allocation6 + $0x108] sm:$0xff]
    %v1926 = vld [vmem:[#allocation6 + $0x110] sm:$0xff]
    %v1927 = vld [vmem:[#allocation6 + $0x118] sm:$0xff]
    %v1928 = vld [vmem:[#allocation6 + $0x120] sm:$0xff]
    %v1929 = vld [vmem:[#allocation6 + $0x128] sm:$0xff]
    %v1930 = vld [vmem:[#allocation6 + $0x130] sm:$0xff]
    %v1931 = vld [vmem:[#allocation6 + $0x138] sm:$0xff]
    %v1932 = vld [vmem:[#allocation6 + $0x140] sm:$0xff]
    %v1933 = vld [vmem:[#allocation6 + $0x148] sm:$0xff]
    %v1934 = vld [vmem:[#allocation6 + $0x150] sm:$0xff]
    %v1935 = vld [vmem:[#allocation6 + $0x158] sm:$0xff]
    %v1936 = vld [vmem:[#allocation6 + $0x160] sm:$0xff]
    %v1937 = vld [vmem:[#allocation6 + $0x168] sm:$0xff]
    %v1938 = vld [vmem:[#allocation6 + $0x170] sm:$0xff]
    %v1939 = vld [vmem:[#allocation6 + $0x178] sm:$0xff]
    %1940 = vmatprep.subr.mxu0 %v1893
    %1941 = vmatpush1.msra.mxu0 %v1892
    %1942 = vmatprep.subr.mxu0 %v1896
    %1943 = vmatpush1.msra.mxu0 %v1895
    %1944 = vmatprep.subr.mxu0 %v1899
    %1945 = vmatpush1.msra.mxu0 %v1898
    %1946 = vmatprep.subr.mxu0 %v1902
    %1947 = vmatpush1.msra.mxu0 %v1901
    %1948 = vmatprep.subr.mxu0 %v1905
    %1949 = vmatpush1.msra.mxu0 %v1904
    %1950 = vmatprep.subr.mxu0 %v1908
    %1951 = vmatpush1.msra.mxu0 %v1907
    %1952 = vmatprep.subr.mxu0 %v1911
    %1953 = vmatpush1.msra.mxu0 %v1910
    %1954 = vmatprep.subr.mxu0 %v1914
    %1955 = vmatpush1.msra.mxu0 %v1913
    %1956 = vmatprep.subr.mxu0 %v1917
    %1957 = vmatpush1.msra.mxu0 %v1916
    %1958 = vmatprep.subr.mxu0 %v1920
    %1959 = vmatpush1.msra.mxu0 %v1919
    %1960 = vmatprep.subr.mxu0 %v1923
    %1961 = vmatpush1.msra.mxu0 %v1922
    %1962 = vmatprep.subr.mxu0 %v1926
    %1963 = vmatpush1.msra.mxu0 %v1925
    %1964 = vmatprep.subr.mxu0 %v1929
    %1965 = vmatpush1.msra.mxu0 %v1928
    %1966 = vmatprep.subr.mxu0 %v1932
    %1967 = vmatpush1.msra.mxu0 %v1931
    %1968 = vmatprep.subr.mxu0 %v1935
    %1969 = vmatpush1.msra.mxu0 %v1934
    %1970 = vmatprep.subr.mxu0 %v1938
    %1971 = vmatpush1.msra.mxu0 %v1937
    %1972 = vmatprep.subr.mxu0 0.0
    %1973 = vmatpush1.msra.mxu0 0.0
    %1974 = vmatprep.subr.mxu0 0.0
    %1975 = vmatpush1.msra.mxu0 0.0
    %1976 = vmatprep.subr.mxu0 0.0
    %1977 = vmatpush1.msra.mxu0 0.0
    %1978 = vmatprep.subr.mxu0 0.0
    %1979 = vmatpush1.msra.mxu0 0.0
    %1980 = vmatprep.subr.mxu0 0.0
    %1981 = vmatpush1.msra.mxu0 0.0
    %1982 = vmatprep.subr.mxu0 0.0
    %1983 = vmatpush1.msra.mxu0 0.0
    %1984 = vmatprep.subr.mxu0 0.0
    %1985 = vmatpush1.msra.mxu0 0.0
    %1986 = vmatprep.subr.mxu0 0.0
    %1987 = vmatpush1.msra.mxu0 0.0
    %1988 = vmatprep.subr.mxu0 0.0
    %1989 = vmatpush1.msra.mxu0 0.0
    %1990 = vmatprep.subr.mxu0 0.0
    %1991 = vmatpush1.msra.mxu0 0.0
    %1992 = vmatprep.subr.mxu0 0.0
    %1993 = vmatpush1.msra.mxu0 0.0
    %1994 = vmatprep.subr.mxu0 0.0
    %1995 = vmatpush1.msra.mxu0 0.0
    %1996 = vmatprep.subr.mxu0 0.0
    %1997 = vmatpush1.msra.mxu0 0.0
    %1998 = vmatprep.subr.mxu0 0.0
    %1999 = vmatpush1.msra.mxu0 0.0
    %2000 = vmatprep.subr.mxu0 0.0
    %2001 = vmatpush1.msra.mxu0 0.0
    %2002 = vmatprep.subr.mxu0 0.0
    %2003 = vmatpush1.msra.mxu0 0.0
    %2004 = vmatprep.mubr.f32.mxu0 0.0
    %2005 = vmatmul.mubr.f32.gmra.mrb[0].mxu0 %v1890
    %v2006 = vpop.f32.mrb[0].mxu0
    %v2007 = vadd.f32 0.0, %v2006
    %v2008 = vpop.f32.mrb[0].mxu0
    %v2009 = vadd.f32 0.0, %v2008
    %2010 = vdwg.mxu0
    %2011 = vmatprep.subr.mxu0 0.0
    %2012 = vmatpush1.msra.mxu0 %v1894
    %2013 = vmatprep.subr.mxu0 0.0
    %2014 = vmatpush1.msra.mxu0 %v1897
    %2015 = vmatprep.subr.mxu0 0.0
    %2016 = vmatpush1.msra.mxu0 %v1900
    %2017 = vmatprep.subr.mxu0 0.0
    %2018 = vmatpush1.msra.mxu0 %v1903
    %2019 = vmatprep.subr.mxu0 0.0
    %2020 = vmatpush1.msra.mxu0 %v1906
    %2021 = vmatprep.subr.mxu0 0.0
    %2022 = vmatpush1.msra.mxu0 %v1909
    %2023 = vmatprep.subr.mxu0 0.0
    %2024 = vmatpush1.msra.mxu0 %v1912
    %2025 = vmatprep.subr.mxu0 0.0
    %2026 = vmatpush1.msra.mxu0 %v1915
    %2027 = vmatprep.subr.mxu0 0.0
    %2028 = vmatpush1.msra.mxu0 %v1918
    %2029 = vmatprep.subr.mxu0 0.0
    %2030 = vmatpush1.msra.mxu0 %v1921
    %2031 = vmatprep.subr.mxu0 0.0
    %2032 = vmatpush1.msra.mxu0 %v1924
    %2033 = vmatprep.subr.mxu0 0.0
    %2034 = vmatpush1.msra.mxu0 %v1927
    %2035 = vmatprep.subr.mxu0 0.0
    %2036 = vmatpush1.msra.mxu0 %v1930
    %2037 = vmatprep.subr.mxu0 0.0
    %2038 = vmatpush1.msra.mxu0 %v1933
    %2039 = vmatprep.subr.mxu0 0.0
    %2040 = vmatpush1.msra.mxu0 %v1936
    %2041 = vmatprep.subr.mxu0 0.0
    %2042 = vmatpush1.msra.mxu0 %v1939
    %2043 = vmatprep.subr.mxu0 0.0
    %2044 = vmatpush1.msra.mxu0 0.0
    %2045 = vmatprep.subr.mxu0 0.0
    %2046 = vmatpush1.msra.mxu0 0.0
    %2047 = vmatprep.subr.mxu0 0.0
    %2048 = vmatpush1.msra.mxu0 0.0
    %2049 = vmatprep.subr.mxu0 0.0
    %2050 = vmatpush1.msra.mxu0 0.0
    %2051 = vmatprep.subr.mxu0 0.0
    %2052 = vmatpush1.msra.mxu0 0.0
    %2053 = vmatprep.subr.mxu0 0.0
    %2054 = vmatpush1.msra.mxu0 0.0
    %2055 = vmatprep.subr.mxu0 0.0
    %2056 = vmatpush1.msra.mxu0 0.0
    %2057 = vmatprep.subr.mxu0 0.0
    %2058 = vmatpush1.msra.mxu0 0.0
    %2059 = vmatprep.subr.mxu0 0.0
    %2060 = vmatpush1.msra.mxu0 0.0
    %2061 = vmatprep.subr.mxu0 0.0
    %2062 = vmatpush1.msra.mxu0 0.0
    %2063 = vmatprep.subr.mxu0 0.0
    %2064 = vmatpush1.msra.mxu0 0.0
    %2065 = vmatprep.subr.mxu0 0.0
    %2066 = vmatpush1.msra.mxu0 0.0
    %2067 = vmatprep.subr.mxu0 0.0
    %2068 = vmatpush1.msra.mxu0 0.0
    %2069 = vmatprep.subr.mxu0 0.0
    %2070 = vmatpush1.msra.mxu0 0.0
    %2071 = vmatprep.subr.mxu0 0.0
    %2072 = vmatpush1.msra.mxu0 0.0
    %2073 = vmatprep.subr.mxu0 0.0
    %2074 = vmatpush1.msra.mxu0 0.0
    %2075 = vmatprep.mubr.f32.mxu0 0.0
    %2076 = vmatmul.mubr.f32.gmra.mrb[0].mxu0 %v1890
    %v2077 = vpop.f32.mrb[0].mxu0
    %v2078 = vadd.f32 0.0, %v2077
    %v2079 = vpop.f32.mrb[0].mxu0
    %2080 = vdwg.mxu0
    %v2081 = vadd.f32 %v291, %v2007
    %v2082 = vxor.u32 %v2081, 2147483648
    %v2083 = vmul.f32 %v2082, 1.442695
    %v2084 = vpow.pop %v2083
    %v2085 = vadd.f32 %v2084, 1.0
    %v2086 = vrcp.pop %v2085
    %v2087 = vmul.f32 1.0, %v2086
    %v2088 = vadd.f32 %v293, %v2009
    %v2089 = vxor.u32 %v2088, 2147483648
    %v2090 = vmul.f32 %v2089, 1.442695
    %v2091 = vpow.pop %v2090
    %v2092 = vadd.f32 %v2091, 1.0
    %v2093 = vrcp.pop %v2092
    %v2094 = vmul.f32 1.0, %v2093
    %v2095 = vadd.f32 %v2078, %v405
    %v2096 = vmul.f32 %v2087, %v2095
    %v2097 = vadd.f32 %v397, %v2096
    %v2098 = vtanh.pop %v2097
    %v2099 = vsub.f32 1.0, %v2094
    %v2100 = vmul.f32 %v2099, %v2098
    %v2101 = vmul.f32 %v2094, %v1890
    %v2102 = vadd.f32 %v2100, %v2101
    %2103 = vst [vmem:[#allocation3 + $0x38] sm:$0xff] %v2102
    %2104 = vst [vmem:[#allocation2] sm:$0xff] %v2102
    %2105 = vst [vmem:[%s9] sm:$0xff] %v2102
    %v2106 = vld [vmem:[#allocation3] sm:$0xff]
    %v2107 = vld [vmem:[#allocation3 + $0x8] sm:$0xff]
    %v2108 = vld [vmem:[#allocation3 + $0x10] sm:$0xff]
    %v2109 = vld [vmem:[#allocation3 + $0x18] sm:$0xff]
    %v2110 = vld [vmem:[#allocation3 + $0x20] sm:$0xff]
    %v2111 = vld [vmem:[#allocation3 + $0x28] sm:$0xff]
    %v2112 = vld [vmem:[#allocation3 + $0x30] sm:$0xff]
    %v2113 = vld [vmem:[#allocation3 + $0x38] sm:$0xff]
    %v2114 = vld [vmem:[%s6] sm:$0xff]
    %v2115 = vld [vmem:[%s6 + $0x8] sm:$0xff]
    %v2116 = vld [vmem:[%s6 + $0x10] sm:$0xff]
    %v2117 = vld [vmem:[%s6 + $0x18] sm:$0xff]
    %v2118 = vld [vmem:[%s6 + $0x20] sm:$0xff]
    %v2119 = vld [vmem:[%s6 + $0x28] sm:$0xff]
    %v2120 = vld [vmem:[%s6 + $0x30] sm:$0xff]
    %v2121 = vld [vmem:[%s6 + $0x38] sm:$0xff]
    %v2122 = vld [vmem:[%s6 + $0x40] sm:$0xff]
    %v2123 = vld [vmem:[%s6 + $0x48] sm:$0xff]
    %v2124 = vld [vmem:[%s6 + $0x50] sm:$0xff]
    %v2125 = vld [vmem:[%s6 + $0x58] sm:$0xff]
    %v2126 = vld [vmem:[%s6 + $0x60] sm:$0xff]
    %v2127 = vld [vmem:[%s6 + $0x68] sm:$0xff]
    %v2128 = vld [vmem:[%s6 + $0x70] sm:$0xff]
    %v2129 = vld [vmem:[%s6 + $0x78] sm:$0xff]
    %v2130 = vld [vmem:[%s7] sm:$0x1]
    %v2132 = vlaneseq
    %v2133 = vshrl.u32 %v2132, 7
    %v2134 = vsub.s32 0, %v2133
    %v2135 = vrot.slane %v2130, %v2134
    %2137 = vmatprep.subr.mxu0 0.0
    %2138 = vmatpush1.msra.mxu0 %v2114
    %2139 = vmatprep.subr.mxu0 0.0
    %2140 = vmatpush1.msra.mxu0 %v2115
    %2141 = vmatprep.subr.mxu0 0.0
    %2142 = vmatpush1.msra.mxu0 %v2116
    %2143 = vmatprep.subr.mxu0 0.0
    %2144 = vmatpush1.msra.mxu0 %v2117
    %2145 = vmatprep.subr.mxu0 0.0
    %2146 = vmatpush1.msra.mxu0 %v2118
    %2147 = vmatprep.subr.mxu0 0.0
    %2148 = vmatpush1.msra.mxu0 %v2119
    %2149 = vmatprep.subr.mxu0 0.0
    %2150 = vmatpush1.msra.mxu0 %v2120
    %2151 = vmatprep.subr.mxu0 0.0
    %2152 = vmatpush1.msra.mxu0 %v2121
    %2153 = vmatprep.subr.mxu0 0.0
    %2154 = vmatpush1.msra.mxu0 %v2122
    %2155 = vmatprep.subr.mxu0 0.0
    %2156 = vmatpush1.msra.mxu0 %v2123
    %2157 = vmatprep.subr.mxu0 0.0
    %2158 = vmatpush1.msra.mxu0 %v2124
    %2159 = vmatprep.subr.mxu0 0.0
    %2160 = vmatpush1.msra.mxu0 %v2125
    %2161 = vmatprep.subr.mxu0 0.0
    %2162 = vmatpush1.msra.mxu0 %v2126
    %2163 = vmatprep.subr.mxu0 0.0
    %2164 = vmatpush1.msra.mxu0 %v2127
    %2165 = vmatprep.subr.mxu0 0.0
    %2166 = vmatpush1.msra.mxu0 %v2128
    %2167 = vmatprep.subr.mxu0 0.0
    %2168 = vmatpush1.msra.mxu0 %v2129
    %2169 = vmatprep.subr.mxu0 0.0
    %2170 = vmatpush1.msra.mxu0 0.0
    %2171 = vmatprep.subr.mxu0 0.0
    %2172 = vmatpush1.msra.mxu0 0.0
    %2173 = vmatprep.subr.mxu0 0.0
    %2174 = vmatpush1.msra.mxu0 0.0
    %2175 = vmatprep.subr.mxu0 0.0
    %2176 = vmatpush1.msra.mxu0 0.0
    %2177 = vmatprep.subr.mxu0 0.0
    %2178 = vmatpush1.msra.mxu0 0.0
    %2179 = vmatprep.subr.mxu0 0.0
    %2180 = vmatpush1.msra.mxu0 0.0
    %2181 = vmatprep.subr.mxu0 0.0
    %2182 = vmatpush1.msra.mxu0 0.0
    %2183 = vmatprep.subr.mxu0 0.0
    %2184 = vmatpush1.msra.mxu0 0.0
    %2185 = vmatprep.subr.mxu0 0.0
    %2186 = vmatpush1.msra.mxu0 0.0
    %2187 = vmatprep.subr.mxu0 0.0
    %2188 = vmatpush1.msra.mxu0 0.0
    %2189 = vmatprep.subr.mxu0 0.0
    %2190 = vmatpush1.msra.mxu0 0.0
    %2191 = vmatprep.subr.mxu0 0.0
    %2192 = vmatpush1.msra.mxu0 0.0
    %2193 = vmatprep.subr.mxu0 0.0
    %2194 = vmatpush1.msra.mxu0 0.0
    %2195 = vmatprep.subr.mxu0 0.0
    %2196 = vmatpush1.msra.mxu0 0.0
    %2197 = vmatprep.subr.mxu0 0.0
    %2198 = vmatpush1.msra.mxu0 0.0
    %2199 = vmatprep.subr.mxu0 0.0
    %2200 = vmatpush1.msra.mxu0 0.0
    %2201 = vmatprep.mubr.f32.mxu0 0.0
    %2202 = vmatmul.mubr.f32.gmra.mrb[0].mxu0 %v2106
    %v2203 = vpop.f32.mrb[0].mxu0
    %v2204 = vadd.f32 %v2135, %v2203
    %v2205 = vpop.f32.mrb[0].mxu0
    %2206 = vmatprep.mubr.f32.mxu0 0.0
    %2207 = vmatmul.mubr.f32.gmra.mrb[0].mxu0 %v2107
    %v2208 = vpop.f32.mrb[0].mxu0
    %v2209 = vadd.f32 %v2135, %v2208
    %v2210 = vpop.f32.mrb[0].mxu0
    %2211 = vmatprep.mubr.f32.mxu0 0.0
    %2212 = vmatmul.mubr.f32.gmra.mrb[0].mxu0 %v2108
    %v2213 = vpop.f32.mrb[0].mxu0
    %v2214 = vadd.f32 %v2135, %v2213
    %v2215 = vpop.f32.mrb[0].mxu0
    %2216 = vmatprep.mubr.f32.mxu0 0.0
    %2217 = vmatmul.mubr.f32.gmra.mrb[0].mxu0 %v2109
    %v2218 = vpop.f32.mrb[0].mxu0
    %v2219 = vadd.f32 %v2135, %v2218
    %v2220 = vpop.f32.mrb[0].mxu0
    %2221 = vmatprep.mubr.f32.mxu0 0.0
    %2222 = vmatmul.mubr.f32.gmra.mrb[0].mxu0 %v2110
    %v2223 = vpop.f32.mrb[0].mxu0
    %v2224 = vadd.f32 %v2135, %v2223
    %v2225 = vpop.f32.mrb[0].mxu0
    %2226 = vmatprep.mubr.f32.mxu0 0.0
    %2227 = vmatmul.mubr.f32.gmra.mrb[0].mxu0 %v2111
    %v2228 = vpop.f32.mrb[0].mxu0
    %v2229 = vadd.f32 %v2135, %v2228
    %v2230 = vpop.f32.mrb[0].mxu0
    %2231 = vmatprep.mubr.f32.mxu0 0.0
    %2232 = vmatmul.mubr.f32.gmra.mrb[0].mxu0 %v2112
    %v2233 = vpop.f32.mrb[0].mxu0
    %v2234 = vadd.f32 %v2135, %v2233
    %v2235 = vpop.f32.mrb[0].mxu0
    %2236 = vmatprep.mubr.f32.mxu0 0.0
    %2237 = vmatmul.mubr.f32.gmra.mrb[0].mxu0 %v2113
    %v2238 = vpop.f32.mrb[0].mxu0
    %v2239 = vadd.f32 %v2135, %v2238
    %v2240 = vpop.f32.mrb[0].mxu0
    %2241 = vdwg.mxu0
    %2242 = vst [vmem:[%s92] sm:$0xff] %v2204
    %2243 = vst [vmem:[%s92 + $0x8] sm:$0xff] %v2209
    %2244 = vst [vmem:[%s92 + $0x10] sm:$0xff] %v2214
    %2245 = vst [vmem:[%s92 + $0x18] sm:$0xff] %v2219
    %2246 = vst [vmem:[%s92 + $0x20] sm:$0xff] %v2224
    %2247 = vst [vmem:[%s92 + $0x28] sm:$0xff] %v2229
    %2248 = vst [vmem:[%s92 + $0x30] sm:$0xff] %v2234
    %2249 = vst [vmem:[%s92 + $0x38] sm:$0xff] %v2239
    %s2250 = sadd.s32 0, 0
    %s2251 = smul.u32 8, %s2250
    %p2252 = scmp.lt.s32.totalorder %s2251, 7
    %s2253 = scalar_select %p2252, %s2251, 7
    %s2254 = smul.addr %s2253, 8
    %s2255 = scalar_lea.vmem %s8, %s2254
    // Predicated region
    $region46: #{decoder_rnn_forward.1} parent=1 // pred_check
      _
    $region47: #{decoder_rnn_forward.1} parent=1 // pred_check_branch
      %2257 = sbr.rel (0) target = $region49
    $region48: #{decoder_rnn_forward.1} parent=1 // pred_region
      %s2258 = sadd.s32 0, 0
      %s2259 = smul.u32 8, %s2258
    $region49: #{decoder_rnn_forward.1} parent=1 // pred_fallthru
      _
    // Predicated region
    $region50: #{decoder_rnn_forward.1} parent=1 // pred_check
      _
    $region51: #{decoder_rnn_forward.1} parent=1 // pred_check_branch
      %2261 = sbr.rel (0) target = $region53
    $region52: #{decoder_rnn_forward.1} parent=1 // pred_region
      _
    $region53: #{decoder_rnn_forward.1} parent=1 // pred_fallthru
      _
    // Predicated region
    $region54: #{decoder_rnn_forward.1} parent=1 // pred_check
      _
    $region55: #{decoder_rnn_forward.1} parent=1 // pred_check_branch
      %2263 = sbr.rel (0) target = $region57
    $region56: #{decoder_rnn_forward.1} parent=1 // pred_region
      %s2264 = sadd.s32 0, 0
      %s2265 = smul.u32 8, %s2264
      %p2266 = scmp.lt.s32.totalorder %s2265, 7
      %s2267 = scalar_select %p2266, %s2265, 7
      %s2268 = smul.addr %s2267, 8
      %s2269 = scalar_lea.vmem %s8, %s2268
    $region57: #{decoder_rnn_forward.1} parent=1 // pred_fallthru
      _
    // Predicated region
    $region58: #{decoder_rnn_forward.1} parent=1 // pred_check
      _
    $region59: #{decoder_rnn_forward.1} parent=1 // pred_check_branch
      %2271 = sbr.rel (0) target = $region61
    $region60: #{decoder_rnn_forward.1} parent=1 // pred_region
      _
    $region61: #{decoder_rnn_forward.1} parent=1 // pred_fallthru
      _
    %2272 = vsyncpa [#allocation5], 1
    %2273 = vsyncpa [#allocation7], 1

</llo_original>
